<compile_context>
chip_gen: v6e
topology: v6e:2x2x1
jax: 0.10.0
libtpu: 0.0.40
codegen_flags: <defaults>
</compile_context>

<pallas_src>
import numpy as np
import jax
import jax.numpy as jnp
from jax.experimental import pallas as pl
from jax.experimental.pallas import tpu as pltpu


def _rup8(x):
    return ((x + 7) // 8) * 8


# -----------------------------------------------------------------------------
# Pallas kernel factory (static shapes captured by closure)
# -----------------------------------------------------------------------------
def _make_kernel(tn, L1, L1p, L2, L2p, L3, L3p, M3, K23):
    f32 = jnp.float32
    bf16 = jnp.bfloat16

    def bn_relu(x, s_ref, b_ref):
        # eval-mode BatchNorm folded to per-channel scale/shift, then ReLU (f32)
        return jnp.maximum(x * s_ref[...][None] + b_ref[...][None], 0.0)

    def store_pool_layout(buf, act, conv_pad):
        # Store activation into scratch laid out for the fused
        # MaxPool(k=2,s=2,p=1) + next-conv zero-pad + window extraction:
        #   buf[:, off + i, :] = act[:, i, :],  everything else = 0,
        # with off = 2*conv_pad + 1 (the extra 1 row is the pool's left pad).
        n, L, c = act.shape
        rows = buf.shape[1]
        off = 2 * conv_pad + 1
        buf[:, :off, :] = jnp.zeros((n, off, c), f32)
        buf[:, off:off + L, :] = act
        if off + L < rows:
            buf[:, off + L:, :] = jnp.zeros((n, rows - off - L, c), f32)

    def pooled_window(buf, k, lout):
        # tap k of the next conv evaluated on the pooled sequence:
        #   win_k[:, l, :] = pooled_padded[l + k]
        #                  = max(buf[:, 2(l+k), :], buf[:, 2(l+k)+1, :])
        lo = buf[:, pl.ds(2 * k, lout, 2), :]
        hi = buf[:, pl.ds(2 * k + 1, lout, 2), :]
        return jnp.maximum(lo, hi)

    def mm(cols2d, w_ref):
        # single MXU matmul per conv block: bf16 operands, f32 accumulation
        return jnp.dot(cols2d.astype(bf16), w_ref[...],
                       preferred_element_type=f32)

    def kernel(x1_ref, w1_ref, s1_ref, b1_ref,
               w2_ref, s2_ref, b2_ref,
               w3_ref, s3_ref, b3_ref,
               h_ref, s1buf, s2buf, s3buf):
        c1 = w1_ref.shape[1]
        c2 = w2_ref.shape[1]
        c3 = w3_ref.shape[1]

        # ---- block 1: Conv1d(1, C1, K, pad=K//2) + BN + ReLU -----------------
        # x1_ref is the pre-built im2col of the raw input: (tn*L1p, K).
        a1 = mm(x1_ref[...], w1_ref).reshape(tn, L1p, c1)[:, :L1, :]
        store_pool_layout(s1buf, bn_relu(a1, s1_ref, b1_ref), conv_pad=4)

        # ---- block 2: MaxPool -> Conv1d(C1, C2, 8, pad=4) + BN + ReLU --------
        cols2 = jnp.concatenate(
            [pooled_window(s1buf, k, L2p) for k in range(K23)], axis=-1)
        a2 = mm(cols2.reshape(tn * L2p, K23 * c1), w2_ref)
        a2 = a2.reshape(tn, L2p, c2)[:, :L2, :]
        store_pool_layout(s2buf, bn_relu(a2, s2_ref, b2_ref), conv_pad=4)

        # ---- block 3: MaxPool -> Conv1d(C2, C3, 8, pad=4) + BN + ReLU --------
        cols3 = jnp.concatenate(
            [pooled_window(s2buf, k, L3p) for k in range(K23)], axis=-1)
        a3 = mm(cols3.reshape(tn * L3p, K23 * c2), w3_ref)
        a3 = a3.reshape(tn, L3p, c3)[:, :L3, :]
        store_pool_layout(s3buf, bn_relu(a3, s3_ref, b3_ref), conv_pad=0)

        # ---- final MaxPool + mean over sequence length -----------------------
        p3 = pooled_window(s3buf, 0, M3)                    # (tn, M3, C3)
        h_ref[...] = jnp.sum(p3, axis=1) * (1.0 / M3)

    return kernel


# -----------------------------------------------------------------------------
# Parameter setup / BN folding
# -----------------------------------------------------------------------------
def bn_scale_shift(gamma, beta, mean, var, eps=1e-5):
    scale = gamma * jax.lax.rsqrt(var + eps)
    shift = beta - mean * scale
    return scale, shift


def init_params(key, kernel_size=8, final_dim=64):
    C1, C2, C3 = 32, 64, final_dim
    ks = jax.random.split(key, 15)

    def conv_w(k, co, ci, kk):
        bound = 1.0 / np.sqrt(ci * kk)
        return jax.random.uniform(k, (co, ci, kk), jnp.float32, -bound, bound)

    def bn(k0, k1, k2, k3, c):
        gamma = 1.0 + 0.1 * jax.random.normal(k0, (c,), jnp.float32)
        beta = 0.1 * jax.random.normal(k1, (c,), jnp.float32)
        mean = 0.1 * jax.random.normal(k2, (c,), jnp.float32)
        var = 1.0 + 0.2 * jax.random.uniform(k3, (c,), jnp.float32)
        return (gamma, beta, mean, var)

    return {
        'w1': conv_w(ks[0], C1, 1, kernel_size),   # PyTorch layout (Cout, Cin, K)
        'bn1': bn(ks[1], ks[2], ks[3], ks[4], C1),
        'w2': conv_w(ks[5], C2, C1, 8),
        'bn2': bn(ks[6], ks[7], ks[8], ks[9], C2),
        'w3': conv_w(ks[10], C3, C2, 8),
        'bn3': bn(ks[11], ks[12], ks[13], ks[14], C3),
    }


# -----------------------------------------------------------------------------
# Wrapper: layout plumbing + pallas_call
# -----------------------------------------------------------------------------
def simmtm_forward(x_in_t, params, kernel_size=8, stride=1, final_dim=64):
    """SimMTM.forward(x_in_t, pretrain=False).  x_in_t: (bsz, ch_num, L)."""
    # TODO(synk): only stride=1 for conv_block1 is implemented in-kernel.
    assert stride == 1
    bsz, ch, L0 = x_in_t.shape
    N = bsz * ch
    C1, C2, C3 = 32, 64, final_dim
    K1, K23 = kernel_size, 8
    P1 = kernel_size // 2

    L1 = L0 + 2 * P1 - K1 + 1
    M1 = L1 // 2 + 1
    L2 = M1 + 2 * 4 - K23 + 1
    M2 = L2 // 2 + 1
    L3 = M2 + 2 * 4 - K23 + 1
    M3 = L3 // 2 + 1

    # L_out padded to a multiple of 8 so in-kernel (tn, L, C) <-> (tn*L, C)
    # reshapes around the matmuls stay sublane-tile aligned.
    L1p, L2p, L3p = _rup8(L1), _rup8(L2), _rup8(L3)

    # fused pool/pad/window scratch row counts (rest of the rows is zero fringe)
    R1 = max(2 * K23 + 2 * L2p - 2, 2 * 4 + 1 + L1)
    R2 = max(2 * K23 + 2 * L3p - 2, 2 * 4 + 1 + L2)
    R3 = max(2 * M3, 1 + L3)

    tn = N if N <= 64 else 64
    grid = (pl.cdiv(N, tn),)

    # ---- block-1 im2col of the raw input, built lane-dense in the wrapper ---
    xk = x_in_t.reshape(N, L0).astype(jnp.float32)
    xpad = jnp.pad(xk, ((0, 0), (P1, P1)))                  # (N, L0 + 2*P1)
    win = jnp.arange(L1)[:, None] + jnp.arange(K1)[None, :]
    x1col = xpad[:, win]                                    # (N, L1, K1)
    x1col = jnp.pad(x1col, ((0, 0), (0, L1p - L1), (0, 0)))
    x1col = x1col.reshape(N * L1p, K1)

    # ---- conv weights -> (K*Cin, Cout), bf16 MXU operands --------------------
    w1 = jnp.transpose(params['w1'], (2, 1, 0)).reshape(K1, C1).astype(jnp.bfloat16)
    w2 = jnp.transpose(params['w2'], (2, 1, 0)).reshape(K23 * C1, C2).astype(jnp.bfloat16)
    w3 = jnp.transpose(params['w3'], (2, 1, 0)).reshape(K23 * C2, C3).astype(jnp.bfloat16)

    s1, b1 = bn_scale_shift(*params['bn1'])
    s2, b2 = bn_scale_shift(*params['bn2'])
    s3, b3 = bn_scale_shift(*params['bn3'])
    s1, b1, s2, b2, s3, b3 = (a.reshape(1, -1) for a in (s1, b1, s2, b2, s3, b3))

    kernel = _make_kernel(tn, L1, L1p, L2, L2p, L3, L3p, M3, K23)

    def const_spec(shape):
        zeros = (0,) * len(shape)
        return pl.BlockSpec(shape, lambda i: zeros)

    flops = 2 * N * (L1 * K1 * 1 * C1 + L2 * K23 * C1 * C2 + L3 * K23 * C2 * C3)
    bytes_accessed = int(x1col.size * 4
                         + (w1.size + w2.size + w3.size) * 2
                         + 2 * (C1 + C2 + C3) * 4
                         + N * C3 * 4)

    h = pl.pallas_call(
        kernel,
        out_shape=jax.ShapeDtypeStruct((N, C3), jnp.float32),
        grid_spec=pltpu.PrefetchScalarGridSpec(
            num_scalar_prefetch=0,
            grid=grid,
            in_specs=[
                pl.BlockSpec((tn * L1p, K1), lambda i: (i, 0)),   # im2col input
                const_spec((K1, C1)), const_spec((1, C1)), const_spec((1, C1)),
                const_spec((K23 * C1, C2)), const_spec((1, C2)), const_spec((1, C2)),
                const_spec((K23 * C2, C3)), const_spec((1, C3)), const_spec((1, C3)),
            ],
            out_specs=pl.BlockSpec((tn, C3), lambda i: (i, 0)),
            scratch_shapes=[
                pltpu.VMEM((tn, R1, C1), jnp.float32),
                pltpu.VMEM((tn, R2, C2), jnp.float32),
                pltpu.VMEM((tn, R3, C3), jnp.float32),
            ],
        ),
        compiler_params=pltpu.CompilerParams(
            dimension_semantics=("parallel",),
            vmem_limit_bytes=32 * 1024 * 1024,
        ),
        cost_estimate=pl.CostEstimate(flops=flops, transcendentals=0,
                                      bytes_accessed=bytes_accessed),
    )(x1col, w1, s1, b1, w2, s2, b2, w3, s3, b3)

    # TODO(synk): final_dim=64 < 128 lanes -> masked output stores; could pack
    # two samples per output row for a lane-dense out_spec at larger batch.
    return h.reshape(bsz, ch, C3)               # h.reshape(bsz, ch_num, -1)


# -----------------------------------------------------------------------------
# Pure-JAX reference (for correctness check)
# -----------------------------------------------------------------------------
def ref_forward(x_in_t, params, final_dim=64):
    bsz, ch, L0 = x_in_t.shape
    N = bsz * ch
    xi = x_in_t.reshape(N, 1, L0).astype(jnp.float32)           # NCW

    def conv(xx, w):
        p = w.shape[-1] // 2
        return jax.lax.conv_general_dilated(
            xx, w, window_strides=(1,), padding=[(p, p)],
            dimension_numbers=('NCH', 'OIH', 'NCH'))

    def bnrelu(xx, bn):
        g, b, m, v = bn
        s = g * jax.lax.rsqrt(v + 1e-5)
        return jnp.maximum(xx * s[None, :, None] + (b - m * s)[None, :, None], 0.0)

    def mpool(xx):
        return jax.lax.reduce_window(xx, -jnp.inf, jax.lax.max,
                                     (1, 1, 2), (1, 1, 2),
                                     [(0, 0), (0, 0), (1, 1)])

    x1 = mpool(bnrelu(conv(xi, params['w1']), params['bn1']))
    x2 = mpool(bnrelu(conv(x1, params['w2']), params['bn2']))
    x3 = mpool(bnrelu(conv(x2, params['w3']), params['bn3']))
    h = jnp.mean(x3, axis=-1)
    return h.reshape(bsz, ch, final_dim)


# -----------------------------------------------------------------------------
if __name__ == "__main__":
    # args: kernel_size=8, stride=1, final_dim=64; input (bsz=2, ch_num=4, seq=32)
    key = jax.random.PRNGKey(0)
    k_par, k_x = jax.random.split(key)
    final_dim, kernel_size = 64, 8

    params = init_params(k_par, kernel_size=kernel_size, final_dim=final_dim)
    x_in_t = jax.random.normal(k_x, (2, 4, 32), jnp.float32)

    h = simmtm_forward(x_in_t, params, kernel_size=kernel_size,
                       stride=1, final_dim=final_dim)
    h = jax.block_until_ready(h)

    h_ref = jax.block_until_ready(ref_forward(x_in_t, params, final_dim=final_dim))
    assert h.shape == (2, 4, final_dim), h.shape
    # Kernel uses bf16 MXU operands with f32 accumulation (per perf review);
    # reference is full f32 -> compare at a bf16-appropriate tolerance.
    np.testing.assert_allclose(np.asarray(h), np.asarray(h_ref),
                               rtol=2e-2, atol=2e-2)
    print("KERNEL_OK")
</pallas_src>

<mosaic_0001>
module attributes {stable_mosaic.version = 11 : i64} {
  func.func @kernel(%arg0: i32, %arg1: memref<320x8xf32, #tpu.memory_space<vmem>>, %arg2: memref<8x32xbf16, #tpu.memory_space<vmem>>, %arg3: memref<1x32xf32, #tpu.memory_space<vmem>>, %arg4: memref<1x32xf32, #tpu.memory_space<vmem>>, %arg5: memref<256x64xbf16, #tpu.memory_space<vmem>>, %arg6: memref<1x64xf32, #tpu.memory_space<vmem>>, %arg7: memref<1x64xf32, #tpu.memory_space<vmem>>, %arg8: memref<512x64xbf16, #tpu.memory_space<vmem>>, %arg9: memref<1x64xf32, #tpu.memory_space<vmem>>, %arg10: memref<1x64xf32, #tpu.memory_space<vmem>>, %arg11: memref<8x64xf32, #tpu.memory_space<vmem>>, %arg12: memref<8x62x32xf32, #tpu.memory_space<vmem>>, %arg13: memref<8x46x64xf32, #tpu.memory_space<vmem>>, %arg14: memref<8x12x64xf32, #tpu.memory_space<vmem>>) attributes {dimension_semantics = [#tpu.dimension_semantics<parallel>], iteration_bounds = array<i64: 1>, scalar_prefetch = 0 : i64, scratch_operands = 3 : i64, tpu.core_type = #tpu.core_type<tc>, window_params = [{transform_indices = @transform_0, window_bounds = array<i64: 320, 8>}, {pipeline_mode = #tpu.pipeline_mode<synchronous>, transform_indices = @transform_1, window_bounds = array<i64: 8, 32>}, {pipeline_mode = #tpu.pipeline_mode<synchronous>, transform_indices = @transform_2, window_bounds = array<i64: 1, 32>}, {pipeline_mode = #tpu.pipeline_mode<synchronous>, transform_indices = @transform_3, window_bounds = array<i64: 1, 32>}, {pipeline_mode = #tpu.pipeline_mode<synchronous>, transform_indices = @transform_4, window_bounds = array<i64: 256, 64>}, {pipeline_mode = #tpu.pipeline_mode<synchronous>, transform_indices = @transform_5, window_bounds = array<i64: 1, 64>}, {pipeline_mode = #tpu.pipeline_mode<synchronous>, transform_indices = @transform_6, window_bounds = array<i64: 1, 64>}, {pipeline_mode = #tpu.pipeline_mode<synchronous>, transform_indices = @transform_7, window_bounds = array<i64: 512, 64>}, {pipeline_mode = #tpu.pipeline_mode<synchronous>, transform_indices = @transform_8, window_bounds = array<i64: 1, 64>}, {pipeline_mode = #tpu.pipeline_mode<synchronous>, transform_indices = @transform_9, window_bounds = array<i64: 1, 64>}, {transform_indices = @transform_10, window_bounds = array<i64: 8, 64>}]} {
    %c0 = arith.constant 0 : index
    %c0_0 = arith.constant 0 : index
    %0 = vector.load %arg1[%c0, %c0_0] : memref<320x8xf32, #tpu.memory_space<vmem>>, vector<320x8xf32>
    %1 = arith.truncf %0 : vector<320x8xf32> to vector<320x8xbf16>
    %c0_1 = arith.constant 0 : index
    %c0_2 = arith.constant 0 : index
    %2 = vector.load %arg2[%c0_1, %c0_2] : memref<8x32xbf16, #tpu.memory_space<vmem>>, vector<8x32xbf16>
    %cst = arith.constant dense<0.000000e+00> : vector<320x32xf32>
    %3 = tpu.matmul %1, %2, %cst {dimension_numbers = #tpu.dot_dimension_numbers<[1], [0], [0], [1], [0, 0, 1, 1], [], []>} : vector<320x8xbf16>, vector<8x32xbf16>, vector<320x32xf32> -> vector<320x32xf32>
    %4 = vector.shape_cast %3 : vector<320x32xf32> to vector<8x40x32xf32>
    %5 = vector.extract_strided_slice %4 {offsets = [0, 0, 0], sizes = [8, 33, 32], strides = [1, 1, 1]} : vector<8x40x32xf32> to vector<8x33x32xf32>
    %c0_3 = arith.constant 0 : index
    %c0_4 = arith.constant 0 : index
    %6 = vector.load %arg3[%c0_3, %c0_4] : memref<1x32xf32, #tpu.memory_space<vmem>>, vector<1x32xf32>
    %7 = vector.shape_cast %6 : vector<1x32xf32> to vector<1x1x32xf32>
    %8 = vector.broadcast %7 : vector<1x1x32xf32> to vector<8x33x32xf32>
    %9 = arith.mulf %5, %8 : vector<8x33x32xf32>
    %c0_5 = arith.constant 0 : index
    %c0_6 = arith.constant 0 : index
    %10 = vector.load %arg4[%c0_5, %c0_6] : memref<1x32xf32, #tpu.memory_space<vmem>>, vector<1x32xf32>
    %11 = vector.shape_cast %10 : vector<1x32xf32> to vector<1x1x32xf32>
    %12 = vector.broadcast %11 : vector<1x1x32xf32> to vector<8x33x32xf32>
    %13 = arith.addf %9, %12 : vector<8x33x32xf32>
    %cst_7 = arith.constant 0.000000e+00 : f32
    %14 = vector.broadcast %cst_7 : f32 to vector<8x33x32xf32>
    %15 = arith.maximumf %13, %14 : vector<8x33x32xf32>
    %cst_8 = arith.constant 0.000000e+00 : f32
    %16 = vector.broadcast %cst_8 : f32 to vector<8x9x32xf32>
    %c0_9 = arith.constant 0 : index
    %c0_10 = arith.constant 0 : index
    %c0_11 = arith.constant 0 : index
    %17 = vector.load %arg12[%c0_9, %c0_10, %c0_11] : memref<8x62x32xf32, #tpu.memory_space<vmem>>, vector<8x9x32xf32>
    tpu.vector_store %arg12[%c0_9, %c0_10, %c0_11], %16 {strides = array<i32>} : memref<8x62x32xf32, #tpu.memory_space<vmem>>, vector<8x9x32xf32>,
    %c0_12 = arith.constant 0 : index
    %c9 = arith.constant 9 : index
    %c0_13 = arith.constant 0 : index
    %18 = vector.load %arg12[%c0_12, %c9, %c0_13] : memref<8x62x32xf32, #tpu.memory_space<vmem>>, vector<8x33x32xf32>
    tpu.vector_store %arg12[%c0_12, %c9, %c0_13], %15 {strides = array<i32>} : memref<8x62x32xf32, #tpu.memory_space<vmem>>, vector<8x33x32xf32>,
    %cst_14 = arith.constant 0.000000e+00 : f32
    %19 = vector.broadcast %cst_14 : f32 to vector<8x20x32xf32>
    %c0_15 = arith.constant 0 : index
    %c42 = arith.constant 42 : index
    %c0_16 = arith.constant 0 : index
    %20 = vector.load %arg12[%c0_15, %c42, %c0_16] : memref<8x62x32xf32, #tpu.memory_space<vmem>>, vector<8x20x32xf32>
    tpu.vector_store %arg12[%c0_15, %c42, %c0_16], %19 {strides = array<i32>} : memref<8x62x32xf32, #tpu.memory_space<vmem>>, vector<8x20x32xf32>,
    %c0_17 = arith.constant 0 : index
    %c0_18 = arith.constant 0 : index
    %c0_19 = arith.constant 0 : index
    %21 = tpu.strided_load %arg12[%c0_17, %c0_18, %c0_19] {strides = array<i32: 1, 2, 1>} : memref<8x62x32xf32, #tpu.memory_space<vmem>>, vector<8x24x32xf32>
    %c0_20 = arith.constant 0 : index
    %c1 = arith.constant 1 : index
    %c0_21 = arith.constant 0 : index
    %22 = tpu.strided_load %arg12[%c0_20, %c1, %c0_21] {strides = array<i32: 1, 2, 1>} : memref<8x62x32xf32, #tpu.memory_space<vmem>>, vector<8x24x32xf32>
    %23 = arith.maximumf %21, %22 : vector<8x24x32xf32>
    %c0_22 = arith.constant 0 : index
    %c2 = arith.constant 2 : index
    %c0_23 = arith.constant 0 : index
    %24 = tpu.strided_load %arg12[%c0_22, %c2, %c0_23] {strides = array<i32: 1, 2, 1>} : memref<8x62x32xf32, #tpu.memory_space<vmem>>, vector<8x24x32xf32>
    %c0_24 = arith.constant 0 : index
    %c3 = arith.constant 3 : index
    %c0_25 = arith.constant 0 : index
    %25 = tpu.strided_load %arg12[%c0_24, %c3, %c0_25] {strides = array<i32: 1, 2, 1>} : memref<8x62x32xf32, #tpu.memory_space<vmem>>, vector<8x24x32xf32>
    %26 = arith.maximumf %24, %25 : vector<8x24x32xf32>
    %c0_26 = arith.constant 0 : index
    %c4 = arith.constant 4 : index
    %c0_27 = arith.constant 0 : index
    %27 = tpu.strided_load %arg12[%c0_26, %c4, %c0_27] {strides = array<i32: 1, 2, 1>} : memref<8x62x32xf32, #tpu.memory_space<vmem>>, vector<8x24x32xf32>
    %c0_28 = arith.constant 0 : index
    %c5 = arith.constant 5 : index
    %c0_29 = arith.constant 0 : index
    %28 = tpu.strided_load %arg12[%c0_28, %c5, %c0_29] {strides = array<i32: 1, 2, 1>} : memref<8x62x32xf32, #tpu.memory_space<vmem>>, vector<8x24x32xf32>
    %29 = arith.maximumf %27, %28 : vector<8x24x32xf32>
    %c0_30 = arith.constant 0 : index
    %c6 = arith.constant 6 : index
    %c0_31 = arith.constant 0 : index
    %30 = tpu.strided_load %arg12[%c0_30, %c6, %c0_31] {strides = array<i32: 1, 2, 1>} : memref<8x62x32xf32, #tpu.memory_space<vmem>>, vector<8x24x32xf32>
    %c0_32 = arith.constant 0 : index
    %c7 = arith.constant 7 : index
    %c0_33 = arith.constant 0 : index
    %31 = tpu.strided_load %arg12[%c0_32, %c7, %c0_33] {strides = array<i32: 1, 2, 1>} : memref<8x62x32xf32, #tpu.memory_space<vmem>>, vector<8x24x32xf32>
    %32 = arith.maximumf %30, %31 : vector<8x24x32xf32>
    %c0_34 = arith.constant 0 : index
    %c8 = arith.constant 8 : index
    %c0_35 = arith.constant 0 : index
    %33 = tpu.strided_load %arg12[%c0_34, %c8, %c0_35] {strides = array<i32: 1, 2, 1>} : memref<8x62x32xf32, #tpu.memory_space<vmem>>, vector<8x24x32xf32>
    %c0_36 = arith.constant 0 : index
    %c9_37 = arith.constant 9 : index
    %c0_38 = arith.constant 0 : index
    %34 = tpu.strided_load %arg12[%c0_36, %c9_37, %c0_38] {strides = array<i32: 1, 2, 1>} : memref<8x62x32xf32, #tpu.memory_space<vmem>>, vector<8x24x32xf32>
    %35 = arith.maximumf %33, %34 : vector<8x24x32xf32>
    %c0_39 = arith.constant 0 : index
    %c10 = arith.constant 10 : index
    %c0_40 = arith.constant 0 : index
    %36 = tpu.strided_load %arg12[%c0_39, %c10, %c0_40] {strides = array<i32: 1, 2, 1>} : memref<8x62x32xf32, #tpu.memory_space<vmem>>, vector<8x24x32xf32>
    %c0_41 = arith.constant 0 : index
    %c11 = arith.constant 11 : index
    %c0_42 = arith.constant 0 : index
    %37 = tpu.strided_load %arg12[%c0_41, %c11, %c0_42] {strides = array<i32: 1, 2, 1>} : memref<8x62x32xf32, #tpu.memory_space<vmem>>, vector<8x24x32xf32>
    %38 = arith.maximumf %36, %37 : vector<8x24x32xf32>
    %c0_43 = arith.constant 0 : index
    %c12 = arith.constant 12 : index
    %c0_44 = arith.constant 0 : index
    %39 = tpu.strided_load %arg12[%c0_43, %c12, %c0_44] {strides = array<i32: 1, 2, 1>} : memref<8x62x32xf32, #tpu.memory_space<vmem>>, vector<8x24x32xf32>
    %c0_45 = arith.constant 0 : index
    %c13 = arith.constant 13 : index
    %c0_46 = arith.constant 0 : index
    %40 = tpu.strided_load %arg12[%c0_45, %c13, %c0_46] {strides = array<i32: 1, 2, 1>} : memref<8x62x32xf32, #tpu.memory_space<vmem>>, vector<8x24x32xf32>
    %41 = arith.maximumf %39, %40 : vector<8x24x32xf32>
    %c0_47 = arith.constant 0 : index
    %c14 = arith.constant 14 : index
    %c0_48 = arith.constant 0 : index
    %42 = tpu.strided_load %arg12[%c0_47, %c14, %c0_48] {strides = array<i32: 1, 2, 1>} : memref<8x62x32xf32, #tpu.memory_space<vmem>>, vector<8x24x32xf32>
    %c0_49 = arith.constant 0 : index
    %c15 = arith.constant 15 : index
    %c0_50 = arith.constant 0 : index
    %43 = tpu.strided_load %arg12[%c0_49, %c15, %c0_50] {strides = array<i32: 1, 2, 1>} : memref<8x62x32xf32, #tpu.memory_space<vmem>>, vector<8x24x32xf32>
    %44 = arith.maximumf %42, %43 : vector<8x24x32xf32>
    %45 = tpu.concatenate %23, %26, %29, %32, %35, %38, %41, %44 in 2 : vector<8x24x32xf32>, vector<8x24x32xf32>, vector<8x24x32xf32>, vector<8x24x32xf32>, vector<8x24x32xf32>, vector<8x24x32xf32>, vector<8x24x32xf32>, vector<8x24x32xf32> -> vector<8x24x256xf32>
    %46 = vector.shape_cast %45 : vector<8x24x256xf32> to vector<192x256xf32>
    %47 = arith.truncf %46 : vector<192x256xf32> to vector<192x256xbf16>
    %c0_51 = arith.constant 0 : index
    %c0_52 = arith.constant 0 : index
    %48 = vector.load %arg5[%c0_51, %c0_52] : memref<256x64xbf16, #tpu.memory_space<vmem>>, vector<256x64xbf16>
    %cst_53 = arith.constant dense<0.000000e+00> : vector<192x64xf32>
    %49 = tpu.matmul %47, %48, %cst_53 {dimension_numbers = #tpu.dot_dimension_numbers<[1], [0], [0], [1], [0, 0, 1, 1], [], []>} : vector<192x256xbf16>, vector<256x64xbf16>, vector<192x64xf32> -> vector<192x64xf32>
    %50 = vector.shape_cast %49 : vector<192x64xf32> to vector<8x24x64xf32>
    %51 = vector.extract_strided_slice %50 {offsets = [0, 0, 0], sizes = [8, 18, 64], strides = [1, 1, 1]} : vector<8x24x64xf32> to vector<8x18x64xf32>
    %c0_54 = arith.constant 0 : index
    %c0_55 = arith.constant 0 : index
    %52 = vector.load %arg6[%c0_54, %c0_55] : memref<1x64xf32, #tpu.memory_space<vmem>>, vector<1x64xf32>
    %53 = vector.shape_cast %52 : vector<1x64xf32> to vector<1x1x64xf32>
    %54 = vector.broadcast %53 : vector<1x1x64xf32> to vector<8x18x64xf32>
    %55 = arith.mulf %51, %54 : vector<8x18x64xf32>
    %c0_56 = arith.constant 0 : index
    %c0_57 = arith.constant 0 : index
    %56 = vector.load %arg7[%c0_56, %c0_57] : memref<1x64xf32, #tpu.memory_space<vmem>>, vector<1x64xf32>
    %57 = vector.shape_cast %56 : vector<1x64xf32> to vector<1x1x64xf32>
    %58 = vector.broadcast %57 : vector<1x1x64xf32> to vector<8x18x64xf32>
    %59 = arith.addf %55, %58 : vector<8x18x64xf32>
    %cst_58 = arith.constant 0.000000e+00 : f32
    %60 = vector.broadcast %cst_58 : f32 to vector<8x18x64xf32>
    %61 = arith.maximumf %59, %60 : vector<8x18x64xf32>
    %cst_59 = arith.constant 0.000000e+00 : f32
    %62 = vector.broadcast %cst_59 : f32 to vector<8x9x64xf32>
    %c0_60 = arith.constant 0 : index
    %c0_61 = arith.constant 0 : index
    %c0_62 = arith.constant 0 : index
    %63 = vector.load %arg13[%c0_60, %c0_61, %c0_62] : memref<8x46x64xf32, #tpu.memory_space<vmem>>, vector<8x9x64xf32>
    tpu.vector_store %arg13[%c0_60, %c0_61, %c0_62], %62 {strides = array<i32>} : memref<8x46x64xf32, #tpu.memory_space<vmem>>, vector<8x9x64xf32>,
    %c0_63 = arith.constant 0 : index
    %c9_64 = arith.constant 9 : index
    %c0_65 = arith.constant 0 : index
    %64 = vector.load %arg13[%c0_63, %c9_64, %c0_65] : memref<8x46x64xf32, #tpu.memory_space<vmem>>, vector<8x18x64xf32>
    tpu.vector_store %arg13[%c0_63, %c9_64, %c0_65], %61 {strides = array<i32>} : memref<8x46x64xf32, #tpu.memory_space<vmem>>, vector<8x18x64xf32>,
    %cst_66 = arith.constant 0.000000e+00 : f32
    %65 = vector.broadcast %cst_66 : f32 to vector<8x19x64xf32>
    %c0_67 = arith.constant 0 : index
    %c27 = arith.constant 27 : index
    %c0_68 = arith.constant 0 : index
    %66 = vector.load %arg13[%c0_67, %c27, %c0_68] : memref<8x46x64xf32, #tpu.memory_space<vmem>>, vector<8x19x64xf32>
    tpu.vector_store %arg13[%c0_67, %c27, %c0_68], %65 {strides = array<i32>} : memref<8x46x64xf32, #tpu.memory_space<vmem>>, vector<8x19x64xf32>,
    %c0_69 = arith.constant 0 : index
    %c0_70 = arith.constant 0 : index
    %c0_71 = arith.constant 0 : index
    %67 = tpu.strided_load %arg13[%c0_69, %c0_70, %c0_71] {strides = array<i32: 1, 2, 1>} : memref<8x46x64xf32, #tpu.memory_space<vmem>>, vector<8x16x64xf32>
    %c0_72 = arith.constant 0 : index
    %c1_73 = arith.constant 1 : index
    %c0_74 = arith.constant 0 : index
    %68 = tpu.strided_load %arg13[%c0_72, %c1_73, %c0_74] {strides = array<i32: 1, 2, 1>} : memref<8x46x64xf32, #tpu.memory_space<vmem>>, vector<8x16x64xf32>
    %69 = arith.maximumf %67, %68 : vector<8x16x64xf32>
    %c0_75 = arith.constant 0 : index
    %c2_76 = arith.constant 2 : index
    %c0_77 = arith.constant 0 : index
    %70 = tpu.strided_load %arg13[%c0_75, %c2_76, %c0_77] {strides = array<i32: 1, 2, 1>} : memref<8x46x64xf32, #tpu.memory_space<vmem>>, vector<8x16x64xf32>
    %c0_78 = arith.constant 0 : index
    %c3_79 = arith.constant 3 : index
    %c0_80 = arith.constant 0 : index
    %71 = tpu.strided_load %arg13[%c0_78, %c3_79, %c0_80] {strides = array<i32: 1, 2, 1>} : memref<8x46x64xf32, #tpu.memory_space<vmem>>, vector<8x16x64xf32>
    %72 = arith.maximumf %70, %71 : vector<8x16x64xf32>
    %c0_81 = arith.constant 0 : index
    %c4_82 = arith.constant 4 : index
    %c0_83 = arith.constant 0 : index
    %73 = tpu.strided_load %arg13[%c0_81, %c4_82, %c0_83] {strides = array<i32: 1, 2, 1>} : memref<8x46x64xf32, #tpu.memory_space<vmem>>, vector<8x16x64xf32>
    %c0_84 = arith.constant 0 : index
    %c5_85 = arith.constant 5 : index
    %c0_86 = arith.constant 0 : index
    %74 = tpu.strided_load %arg13[%c0_84, %c5_85, %c0_86] {strides = array<i32: 1, 2, 1>} : memref<8x46x64xf32, #tpu.memory_space<vmem>>, vector<8x16x64xf32>
    %75 = arith.maximumf %73, %74 : vector<8x16x64xf32>
    %c0_87 = arith.constant 0 : index
    %c6_88 = arith.constant 6 : index
    %c0_89 = arith.constant 0 : index
    %76 = tpu.strided_load %arg13[%c0_87, %c6_88, %c0_89] {strides = array<i32: 1, 2, 1>} : memref<8x46x64xf32, #tpu.memory_space<vmem>>, vector<8x16x64xf32>
    %c0_90 = arith.constant 0 : index
    %c7_91 = arith.constant 7 : index
    %c0_92 = arith.constant 0 : index
    %77 = tpu.strided_load %arg13[%c0_90, %c7_91, %c0_92] {strides = array<i32: 1, 2, 1>} : memref<8x46x64xf32, #tpu.memory_space<vmem>>, vector<8x16x64xf32>
    %78 = arith.maximumf %76, %77 : vector<8x16x64xf32>
    %c0_93 = arith.constant 0 : index
    %c8_94 = arith.constant 8 : index
    %c0_95 = arith.constant 0 : index
    %79 = tpu.strided_load %arg13[%c0_93, %c8_94, %c0_95] {strides = array<i32: 1, 2, 1>} : memref<8x46x64xf32, #tpu.memory_space<vmem>>, vector<8x16x64xf32>
    %c0_96 = arith.constant 0 : index
    %c9_97 = arith.constant 9 : index
    %c0_98 = arith.constant 0 : index
    %80 = tpu.strided_load %arg13[%c0_96, %c9_97, %c0_98] {strides = array<i32: 1, 2, 1>} : memref<8x46x64xf32, #tpu.memory_space<vmem>>, vector<8x16x64xf32>
    %81 = arith.maximumf %79, %80 : vector<8x16x64xf32>
    %c0_99 = arith.constant 0 : index
    %c10_100 = arith.constant 10 : index
    %c0_101 = arith.constant 0 : index
    %82 = tpu.strided_load %arg13[%c0_99, %c10_100, %c0_101] {strides = array<i32: 1, 2, 1>} : memref<8x46x64xf32, #tpu.memory_space<vmem>>, vector<8x16x64xf32>
    %c0_102 = arith.constant 0 : index
    %c11_103 = arith.constant 11 : index
    %c0_104 = arith.constant 0 : index
    %83 = tpu.strided_load %arg13[%c0_102, %c11_103, %c0_104] {strides = array<i32: 1, 2, 1>} : memref<8x46x64xf32, #tpu.memory_space<vmem>>, vector<8x16x64xf32>
    %84 = arith.maximumf %82, %83 : vector<8x16x64xf32>
    %c0_105 = arith.constant 0 : index
    %c12_106 = arith.constant 12 : index
    %c0_107 = arith.constant 0 : index
    %85 = tpu.strided_load %arg13[%c0_105, %c12_106, %c0_107] {strides = array<i32: 1, 2, 1>} : memref<8x46x64xf32, #tpu.memory_space<vmem>>, vector<8x16x64xf32>
    %c0_108 = arith.constant 0 : index
    %c13_109 = arith.constant 13 : index
    %c0_110 = arith.constant 0 : index
    %86 = tpu.strided_load %arg13[%c0_108, %c13_109, %c0_110] {strides = array<i32: 1, 2, 1>} : memref<8x46x64xf32, #tpu.memory_space<vmem>>, vector<8x16x64xf32>
    %87 = arith.maximumf %85, %86 : vector<8x16x64xf32>
    %c0_111 = arith.constant 0 : index
    %c14_112 = arith.constant 14 : index
    %c0_113 = arith.constant 0 : index
    %88 = tpu.strided_load %arg13[%c0_111, %c14_112, %c0_113] {strides = array<i32: 1, 2, 1>} : memref<8x46x64xf32, #tpu.memory_space<vmem>>, vector<8x16x64xf32>
    %c0_114 = arith.constant 0 : index
    %c15_115 = arith.constant 15 : index
    %c0_116 = arith.constant 0 : index
    %89 = tpu.strided_load %arg13[%c0_114, %c15_115, %c0_116] {strides = array<i32: 1, 2, 1>} : memref<8x46x64xf32, #tpu.memory_space<vmem>>, vector<8x16x64xf32>
    %90 = arith.maximumf %88, %89 : vector<8x16x64xf32>
    %91 = tpu.concatenate %69, %72, %75, %78, %81, %84, %87, %90 in 2 : vector<8x16x64xf32>, vector<8x16x64xf32>, vector<8x16x64xf32>, vector<8x16x64xf32>, vector<8x16x64xf32>, vector<8x16x64xf32>, vector<8x16x64xf32>, vector<8x16x64xf32> -> vector<8x16x512xf32>
    %92 = vector.shape_cast %91 : vector<8x16x512xf32> to vector<128x512xf32>
    %93 = arith.truncf %92 : vector<128x512xf32> to vector<128x512xbf16>
    %c0_117 = arith.constant 0 : index
    %c0_118 = arith.constant 0 : index
    %94 = vector.load %arg8[%c0_117, %c0_118] : memref<512x64xbf16, #tpu.memory_space<vmem>>, vector<512x64xbf16>
    %cst_119 = arith.constant dense<0.000000e+00> : vector<128x64xf32>
    %95 = tpu.matmul %93, %94, %cst_119 {dimension_numbers = #tpu.dot_dimension_numbers<[1], [0], [0], [1], [0, 0, 1, 1], [], []>} : vector<128x512xbf16>, vector<512x64xbf16>, vector<128x64xf32> -> vector<128x64xf32>
    %96 = vector.shape_cast %95 : vector<128x64xf32> to vector<8x16x64xf32>
    %97 = vector.extract_strided_slice %96 {offsets = [0, 0, 0], sizes = [8, 11, 64], strides = [1, 1, 1]} : vector<8x16x64xf32> to vector<8x11x64xf32>
    %c0_120 = arith.constant 0 : index
    %c0_121 = arith.constant 0 : index
    %98 = vector.load %arg9[%c0_120, %c0_121] : memref<1x64xf32, #tpu.memory_space<vmem>>, vector<1x64xf32>
    %99 = vector.shape_cast %98 : vector<1x64xf32> to vector<1x1x64xf32>
    %100 = vector.broadcast %99 : vector<1x1x64xf32> to vector<8x11x64xf32>
    %101 = arith.mulf %97, %100 : vector<8x11x64xf32>
    %c0_122 = arith.constant 0 : index
    %c0_123 = arith.constant 0 : index
    %102 = vector.load %arg10[%c0_122, %c0_123] : memref<1x64xf32, #tpu.memory_space<vmem>>, vector<1x64xf32>
    %103 = vector.shape_cast %102 : vector<1x64xf32> to vector<1x1x64xf32>
    %104 = vector.broadcast %103 : vector<1x1x64xf32> to vector<8x11x64xf32>
    %105 = arith.addf %101, %104 : vector<8x11x64xf32>
    %cst_124 = arith.constant 0.000000e+00 : f32
    %106 = vector.broadcast %cst_124 : f32 to vector<8x11x64xf32>
    %107 = arith.maximumf %105, %106 : vector<8x11x64xf32>
    %cst_125 = arith.constant 0.000000e+00 : f32
    %108 = vector.broadcast %cst_125 : f32 to vector<8x1x64xf32>
    %c0_126 = arith.constant 0 : index
    %c0_127 = arith.constant 0 : index
    %c0_128 = arith.constant 0 : index
    %109 = vector.load %arg14[%c0_126, %c0_127, %c0_128] : memref<8x12x64xf32, #tpu.memory_space<vmem>>, vector<8x1x64xf32>
    tpu.vector_store %arg14[%c0_126, %c0_127, %c0_128], %108 {strides = array<i32>} : memref<8x12x64xf32, #tpu.memory_space<vmem>>, vector<8x1x64xf32>,
    %c0_129 = arith.constant 0 : index
    %c1_130 = arith.constant 1 : index
    %c0_131 = arith.constant 0 : index
    %110 = vector.load %arg14[%c0_129, %c1_130, %c0_131] : memref<8x12x64xf32, #tpu.memory_space<vmem>>, vector<8x11x64xf32>
    tpu.vector_store %arg14[%c0_129, %c1_130, %c0_131], %107 {strides = array<i32>} : memref<8x12x64xf32, #tpu.memory_space<vmem>>, vector<8x11x64xf32>,
    %c0_132 = arith.constant 0 : index
    %c0_133 = arith.constant 0 : index
    %c0_134 = arith.constant 0 : index
    %111 = tpu.strided_load %arg14[%c0_132, %c0_133, %c0_134] {strides = array<i32: 1, 2, 1>} : memref<8x12x64xf32, #tpu.memory_space<vmem>>, vector<8x6x64xf32>
    %c0_135 = arith.constant 0 : index
    %c1_136 = arith.constant 1 : index
    %c0_137 = arith.constant 0 : index
    %112 = tpu.strided_load %arg14[%c0_135, %c1_136, %c0_137] {strides = array<i32: 1, 2, 1>} : memref<8x12x64xf32, #tpu.memory_space<vmem>>, vector<8x6x64xf32>
    %113 = arith.maximumf %111, %112 : vector<8x6x64xf32>
    %cst_138 = arith.constant dense<0.000000e+00> : vector<8x64xf32>
    %114 = vector.multi_reduction <add>, %113, %cst_138 [1] : vector<8x6x64xf32> to vector<8x64xf32>
    %cst_139 = arith.constant 0.166666672 : f32
    %115 = vector.broadcast %cst_139 : f32 to vector<8x64xf32>
    %116 = arith.mulf %114, %115 : vector<8x64xf32>
    %c0_140 = arith.constant 0 : index
    %c0_141 = arith.constant 0 : index
    %117 = vector.load %arg11[%c0_140, %c0_141] : memref<8x64xf32, #tpu.memory_space<vmem>>, vector<8x64xf32>
    tpu.vector_store %arg11[%c0_140, %c0_141], %116 {strides = array<i32>} : memref<8x64xf32, #tpu.memory_space<vmem>>, vector<8x64xf32>,
    return
  }
  func.func @transform_0(%arg0: i32) -> (i32, i32) {
    %c0_i32 = arith.constant 0 : i32
    %c0_i32_0 = arith.constant 0 : i32
    return %arg0, %c0_i32 : i32, i32
  }
  func.func @transform_1(%arg0: i32) -> (i32, i32) {
    %c0_i32 = arith.constant 0 : i32
    %c0_i32_0 = arith.constant 0 : i32
    %c0_i32_1 = arith.constant 0 : i32
    return %c0_i32, %c0_i32_0 : i32, i32
  }
  func.func @transform_2(%arg0: i32) -> (i32, i32) {
    %c0_i32 = arith.constant 0 : i32
    %c0_i32_0 = arith.constant 0 : i32
    %c0_i32_1 = arith.constant 0 : i32
    return %c0_i32, %c0_i32_0 : i32, i32
  }
  func.func @transform_3(%arg0: i32) -> (i32, i32) {
    %c0_i32 = arith.constant 0 : i32
    %c0_i32_0 = arith.constant 0 : i32
    %c0_i32_1 = arith.constant 0 : i32
    return %c0_i32, %c0_i32_0 : i32, i32
  }
  func.func @transform_4(%arg0: i32) -> (i32, i32) {
    %c0_i32 = arith.constant 0 : i32
    %c0_i32_0 = arith.constant 0 : i32
    %c0_i32_1 = arith.constant 0 : i32
    return %c0_i32, %c0_i32_0 : i32, i32
  }
  func.func @transform_5(%arg0: i32) -> (i32, i32) {
    %c0_i32 = arith.constant 0 : i32
    %c0_i32_0 = arith.constant 0 : i32
    %c0_i32_1 = arith.constant 0 : i32
    return %c0_i32, %c0_i32_0 : i32, i32
  }
  func.func @transform_6(%arg0: i32) -> (i32, i32) {
    %c0_i32 = arith.constant 0 : i32
    %c0_i32_0 = arith.constant 0 : i32
    %c0_i32_1 = arith.constant 0 : i32
    return %c0_i32, %c0_i32_0 : i32, i32
  }
  func.func @transform_7(%arg0: i32) -> (i32, i32) {
    %c0_i32 = arith.constant 0 : i32
    %c0_i32_0 = arith.constant 0 : i32
    %c0_i32_1 = arith.constant 0 : i32
    return %c0_i32, %c0_i32_0 : i32, i32
  }
  func.func @transform_8(%arg0: i32) -> (i32, i32) {
    %c0_i32 = arith.constant 0 : i32
    %c0_i32_0 = arith.constant 0 : i32
    %c0_i32_1 = arith.constant 0 : i32
    return %c0_i32, %c0_i32_0 : i32, i32
  }
  func.func @transform_9(%arg0: i32) -> (i32, i32) {
    %c0_i32 = arith.constant 0 : i32
    %c0_i32_0 = arith.constant 0 : i32
    %c0_i32_1 = arith.constant 0 : i32
    return %c0_i32, %c0_i32_0 : i32, i32
  }
  func.func @transform_10(%arg0: i32) -> (i32, i32) {
    %c0_i32 = arith.constant 0 : i32
    %c0_i32_0 = arith.constant 0 : i32
    return %arg0, %c0_i32 : i32, i32
  }
}

</mosaic_0001>

<llo_original>
// kernel: tpu_custom_call.1
$region0: #{tpu_custom_call.1}
  #allocation0 [shape = 'u32[]', space=smem, size = 0x4, offset = 0x4, fixed_abs, tag = 'smem constant byte address 0x4 - core index']
  #allocation1 [shape = 'u32[144,128]{1,0:T(1,128)}', space=vmem, size = 0x12000, scoped, tag = 'internal scratch']
  #allocation2 [shape = 'f32[8,62,32]{2,1,0:T(8,128)}', space=vmem, size = 0x40000, scoped, tag = 'scratch operand']
  #allocation3 [shape = 'f32[8,46,64]{2,1,0:T(8,128)}', space=vmem, size = 0x30000, scoped, tag = 'scratch operand']
  #allocation4 [shape = 'f32[8,12,64]{2,1,0:T(8,128)}', space=vmem, size = 0x10000, scoped, tag = 'scratch operand']
  %s0 = inlined_call_operand.vmem [shape: f32[320,8], index: 0, kind: input, shape index: {}]
  %s1 = inlined_call_operand.vmem [shape: bf16[8,32], index: 1, kind: input, shape index: {}]
  %s2 = inlined_call_operand.vmem [shape: f32[1,32], index: 2, kind: input, shape index: {}]
  %s3 = inlined_call_operand.vmem [shape: f32[1,32], index: 3, kind: input, shape index: {}]
  %s4 = inlined_call_operand.vmem [shape: bf16[256,64], index: 4, kind: input, shape index: {}]
  %s5 = inlined_call_operand.vmem [shape: f32[1,64], index: 5, kind: input, shape index: {}]
  %s6 = inlined_call_operand.vmem [shape: f32[1,64], index: 6, kind: input, shape index: {}]
  %s7 = inlined_call_operand.vmem [shape: bf16[512,64], index: 7, kind: input, shape index: {}]
  %s8 = inlined_call_operand.vmem [shape: f32[1,64], index: 8, kind: input, shape index: {}]
  %s9 = inlined_call_operand.vmem [shape: f32[1,64], index: 9, kind: input, shape index: {}]
  %s10 = inlined_call_operand.hbm [shape: f32[8,64], index: 10, kind: output, shape index: {}]
  %s11 = sld [smem:[#allocation0]]
  $region50: #{tpu_custom_call.1} parent=0
    _
  %s13 = ssub.s32 1, %s11
  %s14 = scalar_select 0, %s13, %s11
  $region1: #{tpu_custom_call.1} parent=0
    #allocation5 [shape = 'u8[4096]{0}', space=vmem, size = 0x1000, scoped, tag = 'output window, operand 0, single buffered']
    #allocation6 [shape = 's32[1]{0}', space=sflag, size = 0x4, scoped, tag = 'scoped memory for tpu_custom_call.1']
    %15 = vsyncpa [#allocation6], 0
    // Predicated region
    $region2: #{tpu_custom_call.1} parent=1 // pred_check
      _
    $region3: #{tpu_custom_call.1} parent=1 // pred_check_branch
      %17 = sbr.rel (0) target = $region5
    $region4: #{tpu_custom_call.1} parent=1 // pred_region
      _
    $region5: #{tpu_custom_call.1} parent=1 // pred_fallthru
      _
    // Predicated region
    $region6: #{tpu_custom_call.1} parent=1 // pred_check
      _
    $region7: #{tpu_custom_call.1} parent=1 // pred_check_branch
      %19 = sbr.rel (0) target = $region9
    $region8: #{tpu_custom_call.1} parent=1 // pred_region
      _
    $region9: #{tpu_custom_call.1} parent=1 // pred_fallthru
      _
    // Predicated region
    $region10: #{tpu_custom_call.1} parent=1 // pred_check
      _
    $region11: #{tpu_custom_call.1} parent=1 // pred_check_branch
      %21 = sbr.rel (0) target = $region13
    $region12: #{tpu_custom_call.1} parent=1 // pred_region
      _
    $region13: #{tpu_custom_call.1} parent=1 // pred_fallthru
      _
    // Predicated region
    $region14: #{tpu_custom_call.1} parent=1 // pred_check
      _
    $region15: #{tpu_custom_call.1} parent=1 // pred_check_branch
      %23 = sbr.rel (0) target = $region17
    $region16: #{tpu_custom_call.1} parent=1 // pred_region
      _
    $region17: #{tpu_custom_call.1} parent=1 // pred_fallthru
      _
    // Predicated region
    $region18: #{tpu_custom_call.1} parent=1 // pred_check
      _
    $region19: #{tpu_custom_call.1} parent=1 // pred_check_branch
      %25 = sbr.rel (0) target = $region21
    $region20: #{tpu_custom_call.1} parent=1 // pred_region
      _
    $region21: #{tpu_custom_call.1} parent=1 // pred_fallthru
      _
    // Predicated region
    $region22: #{tpu_custom_call.1} parent=1 // pred_check
      _
    $region23: #{tpu_custom_call.1} parent=1 // pred_check_branch
      %27 = sbr.rel (0) target = $region25
    $region24: #{tpu_custom_call.1} parent=1 // pred_region
      _
    $region25: #{tpu_custom_call.1} parent=1 // pred_fallthru
      _
    // Predicated region
    $region26: #{tpu_custom_call.1} parent=1 // pred_check
      _
    $region27: #{tpu_custom_call.1} parent=1 // pred_check_branch
      %29 = sbr.rel (0) target = $region29
    $region28: #{tpu_custom_call.1} parent=1 // pred_region
      _
    $region29: #{tpu_custom_call.1} parent=1 // pred_fallthru
      _
    // Predicated region
    $region30: #{tpu_custom_call.1} parent=1 // pred_check
      _
    $region31: #{tpu_custom_call.1} parent=1 // pred_check_branch
      %31 = sbr.rel (0) target = $region33
    $region32: #{tpu_custom_call.1} parent=1 // pred_region
      _
    $region33: #{tpu_custom_call.1} parent=1 // pred_fallthru
      _
    // Predicated region
    $region34: #{tpu_custom_call.1} parent=1 // pred_check
      _
    $region35: #{tpu_custom_call.1} parent=1 // pred_check_branch
      %33 = sbr.rel (0) target = $region37
    $region36: #{tpu_custom_call.1} parent=1 // pred_region
      _
    $region37: #{tpu_custom_call.1} parent=1 // pred_fallthru
      _
    // Predicated region
    $region38: #{tpu_custom_call.1} parent=1 // pred_check
      _
    $region39: #{tpu_custom_call.1} parent=1 // pred_check_branch
      %35 = sbr.rel (0) target = $region41
    $region40: #{tpu_custom_call.1} parent=1 // pred_region
      _
    $region41: #{tpu_custom_call.1} parent=1 // pred_fallthru
      _
    %v37 = vld [vmem:[%s0] sm:$0xff]
    %v38 = vld [vmem:[%s0 + $0x8] sm:$0xff]
    %v39 = vld [vmem:[%s0 + $0x10] sm:$0xff]
    %v40 = vld [vmem:[%s0 + $0x18] sm:$0xff]
    %v41 = vld [vmem:[%s0 + $0x20] sm:$0xff]
    %v42 = vld [vmem:[%s0 + $0x28] sm:$0xff]
    %v43 = vld [vmem:[%s0 + $0x30] sm:$0xff]
    %v44 = vld [vmem:[%s0 + $0x38] sm:$0xff]
    %v45 = vld [vmem:[%s0 + $0x40] sm:$0xff]
    %v46 = vld [vmem:[%s0 + $0x48] sm:$0xff]
    %v47 = vld [vmem:[%s0 + $0x50] sm:$0xff]
    %v48 = vld [vmem:[%s0 + $0x58] sm:$0xff]
    %v49 = vld [vmem:[%s0 + $0x60] sm:$0xff]
    %v50 = vld [vmem:[%s0 + $0x68] sm:$0xff]
    %v51 = vld [vmem:[%s0 + $0x70] sm:$0xff]
    %v52 = vld [vmem:[%s0 + $0x78] sm:$0xff]
    %v53 = vld [vmem:[%s0 + $0x80] sm:$0xff]
    %v54 = vld [vmem:[%s0 + $0x88] sm:$0xff]
    %v55 = vld [vmem:[%s0 + $0x90] sm:$0xff]
    %v56 = vld [vmem:[%s0 + $0x98] sm:$0xff]
    %v57 = vld [vmem:[%s0 + $0xa0] sm:$0xff]
    %v58 = vld [vmem:[%s0 + $0xa8] sm:$0xff]
    %v59 = vld [vmem:[%s0 + $0xb0] sm:$0xff]
    %v60 = vld [vmem:[%s0 + $0xb8] sm:$0xff]
    %v61 = vld [vmem:[%s0 + $0xc0] sm:$0xff]
    %v62 = vld [vmem:[%s0 + $0xc8] sm:$0xff]
    %v63 = vld [vmem:[%s0 + $0xd0] sm:$0xff]
    %v64 = vld [vmem:[%s0 + $0xd8] sm:$0xff]
    %v65 = vld [vmem:[%s0 + $0xe0] sm:$0xff]
    %v66 = vld [vmem:[%s0 + $0xe8] sm:$0xff]
    %v67 = vld [vmem:[%s0 + $0xf0] sm:$0xff]
    %v68 = vld [vmem:[%s0 + $0xf8] sm:$0xff]
    %v69 = vld [vmem:[%s0 + $0x100] sm:$0xff]
    %v70 = vld [vmem:[%s0 + $0x108] sm:$0xff]
    %v71 = vld [vmem:[%s0 + $0x110] sm:$0xff]
    %v72 = vld [vmem:[%s0 + $0x118] sm:$0xff]
    %v73 = vld [vmem:[%s0 + $0x120] sm:$0xff]
    %v74 = vld [vmem:[%s0 + $0x128] sm:$0xff]
    %v75 = vld [vmem:[%s0 + $0x130] sm:$0xff]
    %v76 = vld [vmem:[%s0 + $0x138] sm:$0xff]
    %v77 = vpack.c.bf16 %v38, %v37
    %v78 = vpack.c.bf16 %v40, %v39
    %v79 = vpack.c.bf16 %v42, %v41
    %v80 = vpack.c.bf16 %v44, %v43
    %v81 = vpack.c.bf16 %v46, %v45
    %v82 = vpack.c.bf16 %v48, %v47
    %v83 = vpack.c.bf16 %v50, %v49
    %v84 = vpack.c.bf16 %v52, %v51
    %v85 = vpack.c.bf16 %v54, %v53
    %v86 = vpack.c.bf16 %v56, %v55
    %v87 = vpack.c.bf16 %v58, %v57
    %v88 = vpack.c.bf16 %v60, %v59
    %v89 = vpack.c.bf16 %v62, %v61
    %v90 = vpack.c.bf16 %v64, %v63
    %v91 = vpack.c.bf16 %v66, %v65
    %v92 = vpack.c.bf16 %v68, %v67
    %v93 = vpack.c.bf16 %v70, %v69
    %v94 = vpack.c.bf16 %v72, %v71
    %v95 = vpack.c.bf16 %v74, %v73
    %v96 = vpack.c.bf16 %v76, %v75
    %v97 = vld [vmem:[%s1] sm:$0xf]
    %vm98 = vcmask 64512
    %v100 = vsel %vm98, %v77, 0
    %v103 = vsel %vm98, %v78, 0
    %v106 = vsel %vm98, %v79, 0
    %v109 = vsel %vm98, %v80, 0
    %v112 = vsel %vm98, %v81, 0
    %v115 = vsel %vm98, %v82, 0
    %v118 = vsel %vm98, %v83, 0
    %v121 = vsel %vm98, %v84, 0
    %v124 = vsel %vm98, %v85, 0
    %v127 = vsel %vm98, %v86, 0
    %v130 = vsel %vm98, %v87, 0
    %v133 = vsel %vm98, %v88, 0
    %v136 = vsel %vm98, %v89, 0
    %v139 = vsel %vm98, %v90, 0
    %v142 = vsel %vm98, %v91, 0
    %v145 = vsel %vm98, %v92, 0
    %v148 = vsel %vm98, %v93, 0
    %v151 = vsel %vm98, %v94, 0
    %v154 = vsel %vm98, %v95, 0
    %v157 = vsel %vm98, %v96, 0
    %vm159 = vcmask 1043456
    %v161 = vsel %vm159, %v97, 0
    %163 = vmatprep.subr.bf16.mxu0 0
    %164 = vmatpush1.bf16.msra.mxu0 0
    %165 = vmatprep.subr.bf16.mxu0 0
    %166 = vmatpush1.bf16.msra.mxu0 0
    %167 = vmatprep.subr.bf16.mxu0 0
    %168 = vmatpush1.bf16.msra.mxu0 0
    %169 = vmatprep.subr.bf16.mxu0 0
    %170 = vmatpush1.bf16.msra.mxu0 0
    %171 = vmatprep.subr.bf16.mxu0 0
    %172 = vmatpush1.bf16.msra.mxu0 0
    %173 = vmatprep.subr.bf16.mxu0 0
    %174 = vmatpush1.bf16.msra.mxu0 0
    %175 = vmatprep.subr.bf16.mxu0 0
    %176 = vmatpush1.bf16.msra.mxu0 0
    %177 = vmatprep.subr.bf16.mxu0 0
    %178 = vmatpush1.bf16.msra.mxu0 %v161
    %179 = vmatprep.subr.bf16.mxu0 0
    %180 = vmatpush2.bf16.msra.mxu0 0
    %181 = vmatprep.subr.bf16.mxu0 0
    %182 = vmatpush2.bf16.msra.mxu0 0
    %183 = vmatprep.subr.bf16.mxu0 0
    %184 = vmatpush2.bf16.msra.mxu0 0
    %185 = vmatprep.subr.bf16.mxu0 0
    %186 = vmatpush2.bf16.msra.mxu0 0
    %187 = vmatprep.subr.bf16.mxu0 0
    %188 = vmatpush2.bf16.msra.mxu0 0
    %189 = vmatprep.subr.bf16.mxu0 0
    %190 = vmatpush2.bf16.msra.mxu0 0
    %191 = vmatprep.subr.bf16.mxu0 0
    %192 = vmatpush2.bf16.msra.mxu0 0
    %193 = vmatprep.subr.bf16.mxu0 0
    %194 = vmatpush2.bf16.msra.mxu0 0
    %195 = vmatprep.mubr.bf16.mxu0 0
    %196 = vmatmul.mubr.bf16.gmra.mxu0 %v100
    %v197 = vpop.f32.mrf.mxu0
    %v198 = vadd.f32 0.0, %v197
    %v199 = vpop.f32.mrf.mxu0
    %v200 = vpop.f32.mrf.mxu0
    %v201 = vadd.f32 0.0, %v200
    %v202 = vpop.f32.mrf.mxu0
    %203 = vmatprep.mubr.bf16.mxu0 0
    %204 = vmatmul.mubr.bf16.gmra.mxu0 %v103
    %v205 = vpop.f32.mrf.mxu0
    %v206 = vadd.f32 0.0, %v205
    %v207 = vpop.f32.mrf.mxu0
    %v208 = vpop.f32.mrf.mxu0
    %v209 = vadd.f32 0.0, %v208
    %v210 = vpop.f32.mrf.mxu0
    %211 = vmatprep.mubr.bf16.mxu0 0
    %212 = vmatmul.mubr.bf16.gmra.mxu0 %v106
    %v213 = vpop.f32.mrf.mxu0
    %v214 = vadd.f32 0.0, %v213
    %v215 = vpop.f32.mrf.mxu0
    %v216 = vpop.f32.mrf.mxu0
    %v217 = vadd.f32 0.0, %v216
    %v218 = vpop.f32.mrf.mxu0
    %219 = vmatprep.mubr.bf16.mxu0 0
    %220 = vmatmul.mubr.bf16.gmra.mxu0 %v109
    %v221 = vpop.f32.mrf.mxu0
    %v222 = vadd.f32 0.0, %v221
    %v223 = vpop.f32.mrf.mxu0
    %v224 = vpop.f32.mrf.mxu0
    %v225 = vadd.f32 0.0, %v224
    %v226 = vpop.f32.mrf.mxu0
    %227 = vmatprep.mubr.bf16.mxu0 0
    %228 = vmatmul.mubr.bf16.gmra.mxu0 %v112
    %v229 = vpop.f32.mrf.mxu0
    %v230 = vadd.f32 0.0, %v229
    %v231 = vpop.f32.mrf.mxu0
    %v232 = vpop.f32.mrf.mxu0
    %v233 = vadd.f32 0.0, %v232
    %v234 = vpop.f32.mrf.mxu0
    %235 = vmatprep.mubr.bf16.mxu0 0
    %236 = vmatmul.mubr.bf16.gmra.mxu0 %v115
    %v237 = vpop.f32.mrf.mxu0
    %v238 = vadd.f32 0.0, %v237
    %v239 = vpop.f32.mrf.mxu0
    %v240 = vpop.f32.mrf.mxu0
    %v241 = vadd.f32 0.0, %v240
    %v242 = vpop.f32.mrf.mxu0
    %243 = vmatprep.mubr.bf16.mxu0 0
    %244 = vmatmul.mubr.bf16.gmra.mxu0 %v118
    %v245 = vpop.f32.mrf.mxu0
    %v246 = vadd.f32 0.0, %v245
    %v247 = vpop.f32.mrf.mxu0
    %v248 = vpop.f32.mrf.mxu0
    %v249 = vadd.f32 0.0, %v248
    %v250 = vpop.f32.mrf.mxu0
    %251 = vmatprep.mubr.bf16.mxu0 0
    %252 = vmatmul.mubr.bf16.gmra.mxu0 %v121
    %v253 = vpop.f32.mrf.mxu0
    %v254 = vadd.f32 0.0, %v253
    %v255 = vpop.f32.mrf.mxu0
    %v256 = vpop.f32.mrf.mxu0
    %v257 = vadd.f32 0.0, %v256
    %v258 = vpop.f32.mrf.mxu0
    %259 = vmatprep.mubr.bf16.mxu0 0
    %260 = vmatmul.mubr.bf16.gmra.mxu0 %v124
    %v261 = vpop.f32.mrf.mxu0
    %v262 = vadd.f32 0.0, %v261
    %v263 = vpop.f32.mrf.mxu0
    %v264 = vpop.f32.mrf.mxu0
    %v265 = vadd.f32 0.0, %v264
    %v266 = vpop.f32.mrf.mxu0
    %267 = vmatprep.mubr.bf16.mxu0 0
    %268 = vmatmul.mubr.bf16.gmra.mxu0 %v127
    %v269 = vpop.f32.mrf.mxu0
    %v270 = vadd.f32 0.0, %v269
    %v271 = vpop.f32.mrf.mxu0
    %v272 = vpop.f32.mrf.mxu0
    %v273 = vadd.f32 0.0, %v272
    %v274 = vpop.f32.mrf.mxu0
    %275 = vmatprep.mubr.bf16.mxu0 0
    %276 = vmatmul.mubr.bf16.gmra.mxu0 %v130
    %v277 = vpop.f32.mrf.mxu0
    %v278 = vadd.f32 0.0, %v277
    %v279 = vpop.f32.mrf.mxu0
    %v280 = vpop.f32.mrf.mxu0
    %v281 = vadd.f32 0.0, %v280
    %v282 = vpop.f32.mrf.mxu0
    %283 = vmatprep.mubr.bf16.mxu0 0
    %284 = vmatmul.mubr.bf16.gmra.mxu0 %v133
    %v285 = vpop.f32.mrf.mxu0
    %v286 = vadd.f32 0.0, %v285
    %v287 = vpop.f32.mrf.mxu0
    %v288 = vpop.f32.mrf.mxu0
    %v289 = vadd.f32 0.0, %v288
    %v290 = vpop.f32.mrf.mxu0
    %291 = vmatprep.mubr.bf16.mxu0 0
    %292 = vmatmul.mubr.bf16.gmra.mxu0 %v136
    %v293 = vpop.f32.mrf.mxu0
    %v294 = vadd.f32 0.0, %v293
    %v295 = vpop.f32.mrf.mxu0
    %v296 = vpop.f32.mrf.mxu0
    %v297 = vadd.f32 0.0, %v296
    %v298 = vpop.f32.mrf.mxu0
    %299 = vmatprep.mubr.bf16.mxu0 0
    %300 = vmatmul.mubr.bf16.gmra.mxu0 %v139
    %v301 = vpop.f32.mrf.mxu0
    %v302 = vadd.f32 0.0, %v301
    %v303 = vpop.f32.mrf.mxu0
    %v304 = vpop.f32.mrf.mxu0
    %v305 = vadd.f32 0.0, %v304
    %v306 = vpop.f32.mrf.mxu0
    %307 = vmatprep.mubr.bf16.mxu0 0
    %308 = vmatmul.mubr.bf16.gmra.mxu0 %v142
    %v309 = vpop.f32.mrf.mxu0
    %v310 = vadd.f32 0.0, %v309
    %v311 = vpop.f32.mrf.mxu0
    %v312 = vpop.f32.mrf.mxu0
    %v313 = vadd.f32 0.0, %v312
    %v314 = vpop.f32.mrf.mxu0
    %315 = vmatprep.mubr.bf16.mxu0 0
    %316 = vmatmul.mubr.bf16.gmra.mxu0 %v145
    %v317 = vpop.f32.mrf.mxu0
    %v318 = vadd.f32 0.0, %v317
    %v319 = vpop.f32.mrf.mxu0
    %v320 = vpop.f32.mrf.mxu0
    %v321 = vadd.f32 0.0, %v320
    %v322 = vpop.f32.mrf.mxu0
    %323 = vmatprep.mubr.bf16.mxu0 0
    %324 = vmatmul.mubr.bf16.gmra.mxu0 %v148
    %v325 = vpop.f32.mrf.mxu0
    %v326 = vadd.f32 0.0, %v325
    %v327 = vpop.f32.mrf.mxu0
    %v328 = vpop.f32.mrf.mxu0
    %v329 = vadd.f32 0.0, %v328
    %v330 = vpop.f32.mrf.mxu0
    %331 = vmatprep.mubr.bf16.mxu0 0
    %332 = vmatmul.mubr.bf16.gmra.mxu0 %v151
    %v333 = vpop.f32.mrf.mxu0
    %v334 = vadd.f32 0.0, %v333
    %v335 = vpop.f32.mrf.mxu0
    %v336 = vpop.f32.mrf.mxu0
    %v337 = vadd.f32 0.0, %v336
    %v338 = vpop.f32.mrf.mxu0
    %339 = vmatprep.mubr.bf16.mxu0 0
    %340 = vmatmul.mubr.bf16.gmra.mxu0 %v154
    %v341 = vpop.f32.mrf.mxu0
    %v342 = vadd.f32 0.0, %v341
    %v343 = vpop.f32.mrf.mxu0
    %v344 = vpop.f32.mrf.mxu0
    %v345 = vadd.f32 0.0, %v344
    %v346 = vpop.f32.mrf.mxu0
    %347 = vmatprep.mubr.bf16.mxu0 0
    %348 = vmatmul.mubr.bf16.gmra.mxu0 %v157
    %v349 = vpop.f32.mrf.mxu0
    %v350 = vadd.f32 0.0, %v349
    %v351 = vpop.f32.mrf.mxu0
    %v352 = vpop.f32.mrf.mxu0
    %v353 = vadd.f32 0.0, %v352
    %v354 = vpop.f32.mrf.mxu0
    %355 = vdwg.mxu0
    %v356 = vld [vmem:[%s2] sm:$0x1]
    %v358 = vlaneseq
    %v359 = vshrl.u32 %v358, 7
    %v360 = vsub.s32 0, %v359
    %v361 = vrot.slane %v356, %v360
    %v363 = vmul.f32 %v198, %v361
    %v364 = vmul.f32 %v201, %v361
    %v365 = vmul.f32 %v206, %v361
    %v366 = vmul.f32 %v209, %v361
    %v367 = vmul.f32 %v214, %v361
    %v368 = vmul.f32 %v217, %v361
    %v369 = vmul.f32 %v222, %v361
    %v370 = vmul.f32 %v225, %v361
    %v371 = vmul.f32 %v230, %v361
    %v372 = vmul.f32 %v233, %v361
    %v373 = vmul.f32 %v238, %v361
    %v374 = vmul.f32 %v241, %v361
    %v375 = vmul.f32 %v246, %v361
    %v376 = vmul.f32 %v249, %v361
    %v377 = vmul.f32 %v254, %v361
    %v378 = vmul.f32 %v257, %v361
    %v379 = vmul.f32 %v262, %v361
    %v380 = vmul.f32 %v265, %v361
    %v381 = vmul.f32 %v270, %v361
    %v382 = vmul.f32 %v273, %v361
    %v383 = vmul.f32 %v278, %v361
    %v384 = vmul.f32 %v281, %v361
    %v385 = vmul.f32 %v286, %v361
    %v386 = vmul.f32 %v289, %v361
    %v387 = vmul.f32 %v294, %v361
    %v388 = vmul.f32 %v297, %v361
    %v389 = vmul.f32 %v302, %v361
    %v390 = vmul.f32 %v305, %v361
    %v391 = vmul.f32 %v310, %v361
    %v392 = vmul.f32 %v313, %v361
    %v393 = vmul.f32 %v318, %v361
    %v394 = vmul.f32 %v321, %v361
    %v395 = vmul.f32 %v326, %v361
    %v396 = vmul.f32 %v329, %v361
    %v397 = vmul.f32 %v334, %v361
    %v398 = vmul.f32 %v337, %v361
    %v399 = vmul.f32 %v342, %v361
    %v400 = vmul.f32 %v345, %v361
    %v401 = vmul.f32 %v350, %v361
    %v402 = vmul.f32 %v353, %v361
    %v403 = vld [vmem:[%s3] sm:$0x1]
    %v405 = vlaneseq
    %v406 = vshrl.u32 %v405, 7
    %v407 = vsub.s32 0, %v406
    %v408 = vrot.slane %v403, %v407
    %v410 = vadd.f32 %v363, %v408
    %v411 = vadd.f32 %v364, %v408
    %v412 = vadd.f32 %v365, %v408
    %v413 = vadd.f32 %v366, %v408
    %v414 = vadd.f32 %v367, %v408
    %v415 = vadd.f32 %v368, %v408
    %v416 = vadd.f32 %v369, %v408
    %v417 = vadd.f32 %v370, %v408
    %v418 = vadd.f32 %v371, %v408
    %v419 = vadd.f32 %v372, %v408
    %v420 = vadd.f32 %v373, %v408
    %v421 = vadd.f32 %v374, %v408
    %v422 = vadd.f32 %v375, %v408
    %v423 = vadd.f32 %v376, %v408
    %v424 = vadd.f32 %v377, %v408
    %v425 = vadd.f32 %v378, %v408
    %v426 = vadd.f32 %v379, %v408
    %v427 = vadd.f32 %v380, %v408
    %v428 = vadd.f32 %v381, %v408
    %v429 = vadd.f32 %v382, %v408
    %v430 = vadd.f32 %v383, %v408
    %v431 = vadd.f32 %v384, %v408
    %v432 = vadd.f32 %v385, %v408
    %v433 = vadd.f32 %v386, %v408
    %v434 = vadd.f32 %v387, %v408
    %v435 = vadd.f32 %v388, %v408
    %v436 = vadd.f32 %v389, %v408
    %v437 = vadd.f32 %v390, %v408
    %v438 = vadd.f32 %v391, %v408
    %v439 = vadd.f32 %v392, %v408
    %v440 = vadd.f32 %v393, %v408
    %v441 = vadd.f32 %v394, %v408
    %v442 = vadd.f32 %v395, %v408
    %v443 = vadd.f32 %v396, %v408
    %v444 = vadd.f32 %v397, %v408
    %v445 = vadd.f32 %v398, %v408
    %v446 = vadd.f32 %v399, %v408
    %v447 = vadd.f32 %v400, %v408
    %v448 = vadd.f32 %v401, %v408
    %v449 = vadd.f32 %v402, %v408
    %v450 = vmax.f32 %v410, 0.0
    %v451 = vmax.f32 %v411, 0.0
    %v452 = vmax.f32 %v412, 0.0
    %v453 = vmax.f32 %v413, 0.0
    %v454 = vmax.f32 %v414, 0.0
    %v455 = vmax.f32 %v415, 0.0
    %v456 = vmax.f32 %v416, 0.0
    %v457 = vmax.f32 %v417, 0.0
    %v458 = vmax.f32 %v418, 0.0
    %v459 = vmax.f32 %v419, 0.0
    %v460 = vmax.f32 %v420, 0.0
    %v461 = vmax.f32 %v421, 0.0
    %v462 = vmax.f32 %v422, 0.0
    %v463 = vmax.f32 %v423, 0.0
    %v464 = vmax.f32 %v424, 0.0
    %v465 = vmax.f32 %v425, 0.0
    %v466 = vmax.f32 %v426, 0.0
    %v467 = vmax.f32 %v427, 0.0
    %v468 = vmax.f32 %v428, 0.0
    %v469 = vmax.f32 %v429, 0.0
    %v470 = vmax.f32 %v430, 0.0
    %v471 = vmax.f32 %v431, 0.0
    %v472 = vmax.f32 %v432, 0.0
    %v473 = vmax.f32 %v433, 0.0
    %v474 = vmax.f32 %v434, 0.0
    %v475 = vmax.f32 %v435, 0.0
    %v476 = vmax.f32 %v436, 0.0
    %v477 = vmax.f32 %v437, 0.0
    %v478 = vmax.f32 %v438, 0.0
    %v479 = vmax.f32 %v439, 0.0
    %v480 = vmax.f32 %v440, 0.0
    %v481 = vmax.f32 %v441, 0.0
    %v482 = vmax.f32 %v442, 0.0
    %v483 = vmax.f32 %v443, 0.0
    %v484 = vmax.f32 %v444, 0.0
    %v485 = vmax.f32 %v445, 0.0
    %v486 = vmax.f32 %v446, 0.0
    %v487 = vmax.f32 %v447, 0.0
    %v488 = vmax.f32 %v448, 0.0
    %v489 = vmax.f32 %v449, 0.0
    %vm490 = vcmask 261120
    %491 = vst.msk [vmem:[#allocation2] sm:$0xff] %vm490, 0.0
    %vm492 = vcmask 253952
    %493 = vst.msk [vmem:[#allocation2 + $0x8] sm:$0x1] %vm492, 0.0
    %494 = vst.msk [vmem:[#allocation2 + $0x40] sm:$0xff] %vm490, 0.0
    %495 = vst.msk [vmem:[#allocation2 + $0x48] sm:$0x1] %vm492, 0.0
    %496 = vst.msk [vmem:[#allocation2 + $0x80] sm:$0xff] %vm490, 0.0
    %497 = vst.msk [vmem:[#allocation2 + $0x88] sm:$0x1] %vm492, 0.0
    %498 = vst.msk [vmem:[#allocation2 + $0xc0] sm:$0xff] %vm490, 0.0
    %499 = vst.msk [vmem:[#allocation2 + $0xc8] sm:$0x1] %vm492, 0.0
    %500 = vst.msk [vmem:[#allocation2 + $0x100] sm:$0xff] %vm490, 0.0
    %501 = vst.msk [vmem:[#allocation2 + $0x108] sm:$0x1] %vm492, 0.0
    %502 = vst.msk [vmem:[#allocation2 + $0x140] sm:$0xff] %vm490, 0.0
    %503 = vst.msk [vmem:[#allocation2 + $0x148] sm:$0x1] %vm492, 0.0
    %504 = vst.msk [vmem:[#allocation2 + $0x180] sm:$0xff] %vm490, 0.0
    %505 = vst.msk [vmem:[#allocation2 + $0x188] sm:$0x1] %vm492, 0.0
    %506 = vst.msk [vmem:[#allocation2 + $0x1c0] sm:$0xff] %vm490, 0.0
    %507 = vst.msk [vmem:[#allocation2 + $0x1c8] sm:$0x1] %vm492, 0.0
    %508 = vst.msk [vmem:[#allocation2 + $0x9] sm:$0xff] %vm490, %v450
    %509 = vst.msk [vmem:[#allocation2 + $0x11] sm:$0xff] %vm490, %v451
    %510 = vst.msk [vmem:[#allocation2 + $0x19] sm:$0xff] %vm490, %v452
    %511 = vst.msk [vmem:[#allocation2 + $0x21] sm:$0xff] %vm490, %v453
    %512 = vst.msk [vmem:[#allocation2 + $0x29] sm:$0x1] %vm492, %v454
    %513 = vst.msk [vmem:[#allocation2 + $0x49] sm:$0xff] %vm490, %v455
    %514 = vst.msk [vmem:[#allocation2 + $0x51] sm:$0xff] %vm490, %v456
    %515 = vst.msk [vmem:[#allocation2 + $0x59] sm:$0xff] %vm490, %v457
    %516 = vst.msk [vmem:[#allocation2 + $0x61] sm:$0xff] %vm490, %v458
    %517 = vst.msk [vmem:[#allocation2 + $0x69] sm:$0x1] %vm492, %v459
    %518 = vst.msk [vmem:[#allocation2 + $0x89] sm:$0xff] %vm490, %v460
    %519 = vst.msk [vmem:[#allocation2 + $0x91] sm:$0xff] %vm490, %v461
    %520 = vst.msk [vmem:[#allocation2 + $0x99] sm:$0xff] %vm490, %v462
    %521 = vst.msk [vmem:[#allocation2 + $0xa1] sm:$0xff] %vm490, %v463
    %522 = vst.msk [vmem:[#allocation2 + $0xa9] sm:$0x1] %vm492, %v464
    %523 = vst.msk [vmem:[#allocation2 + $0xc9] sm:$0xff] %vm490, %v465
    %524 = vst.msk [vmem:[#allocation2 + $0xd1] sm:$0xff] %vm490, %v466
    %525 = vst.msk [vmem:[#allocation2 + $0xd9] sm:$0xff] %vm490, %v467
    %526 = vst.msk [vmem:[#allocation2 + $0xe1] sm:$0xff] %vm490, %v468
    %527 = vst.msk [vmem:[#allocation2 + $0xe9] sm:$0x1] %vm492, %v469
    %528 = vst.msk [vmem:[#allocation2 + $0x109] sm:$0xff] %vm490, %v470
    %529 = vst.msk [vmem:[#allocation2 + $0x111] sm:$0xff] %vm490, %v471
    %530 = vst.msk [vmem:[#allocation2 + $0x119] sm:$0xff] %vm490, %v472
    %531 = vst.msk [vmem:[#allocation2 + $0x121] sm:$0xff] %vm490, %v473
    %532 = vst.msk [vmem:[#allocation2 + $0x129] sm:$0x1] %vm492, %v474
    %533 = vst.msk [vmem:[#allocation2 + $0x149] sm:$0xff] %vm490, %v475
    %534 = vst.msk [vmem:[#allocation2 + $0x151] sm:$0xff] %vm490, %v476
    %535 = vst.msk [vmem:[#allocation2 + $0x159] sm:$0xff] %vm490, %v477
    %536 = vst.msk [vmem:[#allocation2 + $0x161] sm:$0xff] %vm490, %v478
    %537 = vst.msk [vmem:[#allocation2 + $0x169] sm:$0x1] %vm492, %v479
    %538 = vst.msk [vmem:[#allocation2 + $0x189] sm:$0xff] %vm490, %v480
    %539 = vst.msk [vmem:[#allocation2 + $0x191] sm:$0xff] %vm490, %v481
    %540 = vst.msk [vmem:[#allocation2 + $0x199] sm:$0xff] %vm490, %v482
    %541 = vst.msk [vmem:[#allocation2 + $0x1a1] sm:$0xff] %vm490, %v483
    %542 = vst.msk [vmem:[#allocation2 + $0x1a9] sm:$0x1] %vm492, %v484
    %543 = vst.msk [vmem:[#allocation2 + $0x1c9] sm:$0xff] %vm490, %v485
    %544 = vst.msk [vmem:[#allocation2 + $0x1d1] sm:$0xff] %vm490, %v486
    %545 = vst.msk [vmem:[#allocation2 + $0x1d9] sm:$0xff] %vm490, %v487
    %546 = vst.msk [vmem:[#allocation2 + $0x1e1] sm:$0xff] %vm490, %v488
    %547 = vst.msk [vmem:[#allocation2 + $0x1e9] sm:$0x1] %vm492, %v489
    %548 = vst.msk [vmem:[#allocation2 + $0x2a] sm:$0xff] %vm490, 0.0
    %549 = vst.msk [vmem:[#allocation2 + $0x32] sm:$0xff] %vm490, 0.0
    %vm550 = vcmask 257024
    %551 = vst.msk [vmem:[#allocation2 + $0x3a] sm:$0xf] %vm550, 0.0
    %552 = vst.msk [vmem:[#allocation2 + $0x6a] sm:$0xff] %vm490, 0.0
    %553 = vst.msk [vmem:[#allocation2 + $0x72] sm:$0xff] %vm490, 0.0
    %554 = vst.msk [vmem:[#allocation2 + $0x7a] sm:$0xf] %vm550, 0.0
    %555 = vst.msk [vmem:[#allocation2 + $0xaa] sm:$0xff] %vm490, 0.0
    %556 = vst.msk [vmem:[#allocation2 + $0xb2] sm:$0xff] %vm490, 0.0
    %557 = vst.msk [vmem:[#allocation2 + $0xba] sm:$0xf] %vm550, 0.0
    %558 = vst.msk [vmem:[#allocation2 + $0xea] sm:$0xff] %vm490, 0.0
    %559 = vst.msk [vmem:[#allocation2 + $0xf2] sm:$0xff] %vm490, 0.0
    %560 = vst.msk [vmem:[#allocation2 + $0xfa] sm:$0xf] %vm550, 0.0
    %561 = vst.msk [vmem:[#allocation2 + $0x12a] sm:$0xff] %vm490, 0.0
    %562 = vst.msk [vmem:[#allocation2 + $0x132] sm:$0xff] %vm490, 0.0
    %563 = vst.msk [vmem:[#allocation2 + $0x13a] sm:$0xf] %vm550, 0.0
    %564 = vst.msk [vmem:[#allocation2 + $0x16a] sm:$0xff] %vm490, 0.0
    %565 = vst.msk [vmem:[#allocation2 + $0x172] sm:$0xff] %vm490, 0.0
    %566 = vst.msk [vmem:[#allocation2 + $0x17a] sm:$0xf] %vm550, 0.0
    %567 = vst.msk [vmem:[#allocation2 + $0x1aa] sm:$0xff] %vm490, 0.0
    %568 = vst.msk [vmem:[#allocation2 + $0x1b2] sm:$0xff] %vm490, 0.0
    %569 = vst.msk [vmem:[#allocation2 + $0x1ba] sm:$0xf] %vm550, 0.0
    %570 = vst.msk [vmem:[#allocation2 + $0x1ea] sm:$0xff] %vm490, 0.0
    %571 = vst.msk [vmem:[#allocation2 + $0x1f2] sm:$0xff] %vm490, 0.0
    %572 = vst.msk [vmem:[#allocation2 + $0x1fa] sm:$0xf] %vm550, 0.0
    %v573 = vld [vmem:[#allocation2] ss:$2 sm:$0xff]
    %s574 = scalar_lea.vmem [#allocation2], 16
    %v575 = vld [vmem:[%s574] ss:$2 sm:$0xff]
    %s576 = scalar_lea.vmem [#allocation2], 32
    %v577 = vld [vmem:[%s576] ss:$2 sm:$0xff]
    %s578 = scalar_lea.vmem [#allocation2], 64
    %v579 = vld [vmem:[%s578] ss:$2 sm:$0xff]
    %s580 = scalar_lea.vmem [#allocation2], 80
    %v581 = vld [vmem:[%s580] ss:$2 sm:$0xff]
    %s582 = scalar_lea.vmem [#allocation2], 96
    %v583 = vld [vmem:[%s582] ss:$2 sm:$0xff]
    %s584 = scalar_lea.vmem [#allocation2], 128
    %v585 = vld [vmem:[%s584] ss:$2 sm:$0xff]
    %s586 = scalar_lea.vmem [#allocation2], 144
    %v587 = vld [vmem:[%s586] ss:$2 sm:$0xff]
    %s588 = scalar_lea.vmem [#allocation2], 160
    %v589 = vld [vmem:[%s588] ss:$2 sm:$0xff]
    %s590 = scalar_lea.vmem [#allocation2], 192
    %v591 = vld [vmem:[%s590] ss:$2 sm:$0xff]
    %s592 = scalar_lea.vmem [#allocation2], 208
    %v593 = vld [vmem:[%s592] ss:$2 sm:$0xff]
    %s594 = scalar_lea.vmem [#allocation2], 224
    %v595 = vld [vmem:[%s594] ss:$2 sm:$0xff]
    %s596 = scalar_lea.vmem [#allocation2], 256
    %v597 = vld [vmem:[%s596] ss:$2 sm:$0xff]
    %s598 = scalar_lea.vmem [#allocation2], 272
    %v599 = vld [vmem:[%s598] ss:$2 sm:$0xff]
    %s600 = scalar_lea.vmem [#allocation2], 288
    %v601 = vld [vmem:[%s600] ss:$2 sm:$0xff]
    %s602 = scalar_lea.vmem [#allocation2], 320
    %v603 = vld [vmem:[%s602] ss:$2 sm:$0xff]
    %s604 = scalar_lea.vmem [#allocation2], 336
    %v605 = vld [vmem:[%s604] ss:$2 sm:$0xff]
    %s606 = scalar_lea.vmem [#allocation2], 352
    %v607 = vld [vmem:[%s606] ss:$2 sm:$0xff]
    %s608 = scalar_lea.vmem [#allocation2], 384
    %v609 = vld [vmem:[%s608] ss:$2 sm:$0xff]
    %s610 = scalar_lea.vmem [#allocation2], 400
    %v611 = vld [vmem:[%s610] ss:$2 sm:$0xff]
    %s612 = scalar_lea.vmem [#allocation2], 416
    %v613 = vld [vmem:[%s612] ss:$2 sm:$0xff]
    %s614 = scalar_lea.vmem [#allocation2], 448
    %v615 = vld [vmem:[%s614] ss:$2 sm:$0xff]
    %s616 = scalar_lea.vmem [#allocation2], 464
    %v617 = vld [vmem:[%s616] ss:$2 sm:$0xff]
    %s618 = scalar_lea.vmem [#allocation2], 480
    %v619 = vld [vmem:[%s618] ss:$2 sm:$0xff]
    %s620 = scalar_lea.vmem [#allocation2], 1
    %v621 = vld [vmem:[%s620] ss:$2 sm:$0xff]
    %s622 = scalar_lea.vmem [#allocation2], 17
    %v623 = vld [vmem:[%s622] ss:$2 sm:$0xff]
    %s624 = scalar_lea.vmem [#allocation2], 33
    %v625 = vld [vmem:[%s624] ss:$2 sm:$0xff]
    %s626 = scalar_lea.vmem [#allocation2], 65
    %v627 = vld [vmem:[%s626] ss:$2 sm:$0xff]
    %s628 = scalar_lea.vmem [#allocation2], 81
    %v629 = vld [vmem:[%s628] ss:$2 sm:$0xff]
    %s630 = scalar_lea.vmem [#allocation2], 97
    %v631 = vld [vmem:[%s630] ss:$2 sm:$0xff]
    %s632 = scalar_lea.vmem [#allocation2], 129
    %v633 = vld [vmem:[%s632] ss:$2 sm:$0xff]
    %s634 = scalar_lea.vmem [#allocation2], 145
    %v635 = vld [vmem:[%s634] ss:$2 sm:$0xff]
    %s636 = scalar_lea.vmem [#allocation2], 161
    %v637 = vld [vmem:[%s636] ss:$2 sm:$0xff]
    %s638 = scalar_lea.vmem [#allocation2], 193
    %v639 = vld [vmem:[%s638] ss:$2 sm:$0xff]
    %s640 = scalar_lea.vmem [#allocation2], 209
    %v641 = vld [vmem:[%s640] ss:$2 sm:$0xff]
    %s642 = scalar_lea.vmem [#allocation2], 225
    %v643 = vld [vmem:[%s642] ss:$2 sm:$0xff]
    %s644 = scalar_lea.vmem [#allocation2], 257
    %v645 = vld [vmem:[%s644] ss:$2 sm:$0xff]
    %s646 = scalar_lea.vmem [#allocation2], 273
    %v647 = vld [vmem:[%s646] ss:$2 sm:$0xff]
    %s648 = scalar_lea.vmem [#allocation2], 289
    %v649 = vld [vmem:[%s648] ss:$2 sm:$0xff]
    %s650 = scalar_lea.vmem [#allocation2], 321
    %v651 = vld [vmem:[%s650] ss:$2 sm:$0xff]
    %s652 = scalar_lea.vmem [#allocation2], 337
    %v653 = vld [vmem:[%s652] ss:$2 sm:$0xff]
    %s654 = scalar_lea.vmem [#allocation2], 353
    %v655 = vld [vmem:[%s654] ss:$2 sm:$0xff]
    %s656 = scalar_lea.vmem [#allocation2], 385
    %v657 = vld [vmem:[%s656] ss:$2 sm:$0xff]
    %s658 = scalar_lea.vmem [#allocation2], 401
    %v659 = vld [vmem:[%s658] ss:$2 sm:$0xff]
    %s660 = scalar_lea.vmem [#allocation2], 417
    %v661 = vld [vmem:[%s660] ss:$2 sm:$0xff]
    %s662 = scalar_lea.vmem [#allocation2], 449
    %v663 = vld [vmem:[%s662] ss:$2 sm:$0xff]
    %s664 = scalar_lea.vmem [#allocation2], 465
    %v665 = vld [vmem:[%s664] ss:$2 sm:$0xff]
    %s666 = scalar_lea.vmem [#allocation2], 481
    %v667 = vld [vmem:[%s666] ss:$2 sm:$0xff]
    %v668 = vmax.f32 %v573, %v621
    %v669 = vmax.f32 %v575, %v623
    %v670 = vmax.f32 %v577, %v625
    %v671 = vmax.f32 %v579, %v627
    %v672 = vmax.f32 %v581, %v629
    %v673 = vmax.f32 %v583, %v631
    %v674 = vmax.f32 %v585, %v633
    %v675 = vmax.f32 %v587, %v635
    %v676 = vmax.f32 %v589, %v637
    %v677 = vmax.f32 %v591, %v639
    %v678 = vmax.f32 %v593, %v641
    %v679 = vmax.f32 %v595, %v643
    %v680 = vmax.f32 %v597, %v645
    %v681 = vmax.f32 %v599, %v647
    %v682 = vmax.f32 %v601, %v649
    %v683 = vmax.f32 %v603, %v651
    %v684 = vmax.f32 %v605, %v653
    %v685 = vmax.f32 %v607, %v655
    %v686 = vmax.f32 %v609, %v657
    %v687 = vmax.f32 %v611, %v659
    %v688 = vmax.f32 %v613, %v661
    %v689 = vmax.f32 %v615, %v663
    %v690 = vmax.f32 %v617, %v665
    %v691 = vmax.f32 %v619, %v667
    %s692 = scalar_lea.vmem [#allocation2], 2
    %v693 = vld [vmem:[%s692] ss:$2 sm:$0xff]
    %s694 = scalar_lea.vmem [#allocation2], 18
    %v695 = vld [vmem:[%s694] ss:$2 sm:$0xff]
    %s696 = scalar_lea.vmem [#allocation2], 34
    %v697 = vld [vmem:[%s696] ss:$2 sm:$0xff]
    %s698 = scalar_lea.vmem [#allocation2], 66
    %v699 = vld [vmem:[%s698] ss:$2 sm:$0xff]
    %s700 = scalar_lea.vmem [#allocation2], 82
    %v701 = vld [vmem:[%s700] ss:$2 sm:$0xff]
    %s702 = scalar_lea.vmem [#allocation2], 98
    %v703 = vld [vmem:[%s702] ss:$2 sm:$0xff]
    %s704 = scalar_lea.vmem [#allocation2], 130
    %v705 = vld [vmem:[%s704] ss:$2 sm:$0xff]
    %s706 = scalar_lea.vmem [#allocation2], 146
    %v707 = vld [vmem:[%s706] ss:$2 sm:$0xff]
    %s708 = scalar_lea.vmem [#allocation2], 162
    %v709 = vld [vmem:[%s708] ss:$2 sm:$0xff]
    %s710 = scalar_lea.vmem [#allocation2], 194
    %v711 = vld [vmem:[%s710] ss:$2 sm:$0xff]
    %s712 = scalar_lea.vmem [#allocation2], 210
    %v713 = vld [vmem:[%s712] ss:$2 sm:$0xff]
    %s714 = scalar_lea.vmem [#allocation2], 226
    %v715 = vld [vmem:[%s714] ss:$2 sm:$0xff]
    %s716 = scalar_lea.vmem [#allocation2], 258
    %v717 = vld [vmem:[%s716] ss:$2 sm:$0xff]
    %s718 = scalar_lea.vmem [#allocation2], 274
    %v719 = vld [vmem:[%s718] ss:$2 sm:$0xff]
    %s720 = scalar_lea.vmem [#allocation2], 290
    %v721 = vld [vmem:[%s720] ss:$2 sm:$0xff]
    %s722 = scalar_lea.vmem [#allocation2], 322
    %v723 = vld [vmem:[%s722] ss:$2 sm:$0xff]
    %s724 = scalar_lea.vmem [#allocation2], 338
    %v725 = vld [vmem:[%s724] ss:$2 sm:$0xff]
    %s726 = scalar_lea.vmem [#allocation2], 354
    %v727 = vld [vmem:[%s726] ss:$2 sm:$0xff]
    %s728 = scalar_lea.vmem [#allocation2], 386
    %v729 = vld [vmem:[%s728] ss:$2 sm:$0xff]
    %s730 = scalar_lea.vmem [#allocation2], 402
    %v731 = vld [vmem:[%s730] ss:$2 sm:$0xff]
    %s732 = scalar_lea.vmem [#allocation2], 418
    %v733 = vld [vmem:[%s732] ss:$2 sm:$0xff]
    %s734 = scalar_lea.vmem [#allocation2], 450
    %v735 = vld [vmem:[%s734] ss:$2 sm:$0xff]
    %s736 = scalar_lea.vmem [#allocation2], 466
    %v737 = vld [vmem:[%s736] ss:$2 sm:$0xff]
    %s738 = scalar_lea.vmem [#allocation2], 482
    %v739 = vld [vmem:[%s738] ss:$2 sm:$0xff]
    %s740 = scalar_lea.vmem [#allocation2], 3
    %v741 = vld [vmem:[%s740] ss:$2 sm:$0xff]
    %s742 = scalar_lea.vmem [#allocation2], 19
    %v743 = vld [vmem:[%s742] ss:$2 sm:$0xff]
    %s744 = scalar_lea.vmem [#allocation2], 35
    %v745 = vld [vmem:[%s744] ss:$2 sm:$0xff]
    %s746 = scalar_lea.vmem [#allocation2], 67
    %v747 = vld [vmem:[%s746] ss:$2 sm:$0xff]
    %s748 = scalar_lea.vmem [#allocation2], 83
    %v749 = vld [vmem:[%s748] ss:$2 sm:$0xff]
    %s750 = scalar_lea.vmem [#allocation2], 99
    %v751 = vld [vmem:[%s750] ss:$2 sm:$0xff]
    %s752 = scalar_lea.vmem [#allocation2], 131
    %v753 = vld [vmem:[%s752] ss:$2 sm:$0xff]
    %s754 = scalar_lea.vmem [#allocation2], 147
    %v755 = vld [vmem:[%s754] ss:$2 sm:$0xff]
    %s756 = scalar_lea.vmem [#allocation2], 163
    %v757 = vld [vmem:[%s756] ss:$2 sm:$0xff]
    %s758 = scalar_lea.vmem [#allocation2], 195
    %v759 = vld [vmem:[%s758] ss:$2 sm:$0xff]
    %s760 = scalar_lea.vmem [#allocation2], 211
    %v761 = vld [vmem:[%s760] ss:$2 sm:$0xff]
    %s762 = scalar_lea.vmem [#allocation2], 227
    %v763 = vld [vmem:[%s762] ss:$2 sm:$0xff]
    %s764 = scalar_lea.vmem [#allocation2], 259
    %v765 = vld [vmem:[%s764] ss:$2 sm:$0xff]
    %s766 = scalar_lea.vmem [#allocation2], 275
    %v767 = vld [vmem:[%s766] ss:$2 sm:$0xff]
    %s768 = scalar_lea.vmem [#allocation2], 291
    %v769 = vld [vmem:[%s768] ss:$2 sm:$0xff]
    %s770 = scalar_lea.vmem [#allocation2], 323
    %v771 = vld [vmem:[%s770] ss:$2 sm:$0xff]
    %s772 = scalar_lea.vmem [#allocation2], 339
    %v773 = vld [vmem:[%s772] ss:$2 sm:$0xff]
    %s774 = scalar_lea.vmem [#allocation2], 355
    %v775 = vld [vmem:[%s774] ss:$2 sm:$0xff]
    %s776 = scalar_lea.vmem [#allocation2], 387
    %v777 = vld [vmem:[%s776] ss:$2 sm:$0xff]
    %s778 = scalar_lea.vmem [#allocation2], 403
    %v779 = vld [vmem:[%s778] ss:$2 sm:$0xff]
    %s780 = scalar_lea.vmem [#allocation2], 419
    %v781 = vld [vmem:[%s780] ss:$2 sm:$0xff]
    %s782 = scalar_lea.vmem [#allocation2], 451
    %v783 = vld [vmem:[%s782] ss:$2 sm:$0xff]
    %s784 = scalar_lea.vmem [#allocation2], 467
    %v785 = vld [vmem:[%s784] ss:$2 sm:$0xff]
    %s786 = scalar_lea.vmem [#allocation2], 483
    %v787 = vld [vmem:[%s786] ss:$2 sm:$0xff]
    %v788 = vmax.f32 %v693, %v741
    %v789 = vmax.f32 %v695, %v743
    %v790 = vmax.f32 %v697, %v745
    %v791 = vmax.f32 %v699, %v747
    %v792 = vmax.f32 %v701, %v749
    %v793 = vmax.f32 %v703, %v751
    %v794 = vmax.f32 %v705, %v753
    %v795 = vmax.f32 %v707, %v755
    %v796 = vmax.f32 %v709, %v757
    %v797 = vmax.f32 %v711, %v759
    %v798 = vmax.f32 %v713, %v761
    %v799 = vmax.f32 %v715, %v763
    %v800 = vmax.f32 %v717, %v765
    %v801 = vmax.f32 %v719, %v767
    %v802 = vmax.f32 %v721, %v769
    %v803 = vmax.f32 %v723, %v771
    %v804 = vmax.f32 %v725, %v773
    %v805 = vmax.f32 %v727, %v775
    %v806 = vmax.f32 %v729, %v777
    %v807 = vmax.f32 %v731, %v779
    %v808 = vmax.f32 %v733, %v781
    %v809 = vmax.f32 %v735, %v783
    %v810 = vmax.f32 %v737, %v785
    %v811 = vmax.f32 %v739, %v787
    %s812 = scalar_lea.vmem [#allocation2], 4
    %v813 = vld [vmem:[%s812] ss:$2 sm:$0xff]
    %s814 = scalar_lea.vmem [#allocation2], 20
    %v815 = vld [vmem:[%s814] ss:$2 sm:$0xff]
    %s816 = scalar_lea.vmem [#allocation2], 36
    %v817 = vld [vmem:[%s816] ss:$2 sm:$0xff]
    %s818 = scalar_lea.vmem [#allocation2], 68
    %v819 = vld [vmem:[%s818] ss:$2 sm:$0xff]
    %s820 = scalar_lea.vmem [#allocation2], 84
    %v821 = vld [vmem:[%s820] ss:$2 sm:$0xff]
    %s822 = scalar_lea.vmem [#allocation2], 100
    %v823 = vld [vmem:[%s822] ss:$2 sm:$0xff]
    %s824 = scalar_lea.vmem [#allocation2], 132
    %v825 = vld [vmem:[%s824] ss:$2 sm:$0xff]
    %s826 = scalar_lea.vmem [#allocation2], 148
    %v827 = vld [vmem:[%s826] ss:$2 sm:$0xff]
    %s828 = scalar_lea.vmem [#allocation2], 164
    %v829 = vld [vmem:[%s828] ss:$2 sm:$0xff]
    %s830 = scalar_lea.vmem [#allocation2], 196
    %v831 = vld [vmem:[%s830] ss:$2 sm:$0xff]
    %s832 = scalar_lea.vmem [#allocation2], 212
    %v833 = vld [vmem:[%s832] ss:$2 sm:$0xff]
    %s834 = scalar_lea.vmem [#allocation2], 228
    %v835 = vld [vmem:[%s834] ss:$2 sm:$0xff]
    %s836 = scalar_lea.vmem [#allocation2], 260
    %v837 = vld [vmem:[%s836] ss:$2 sm:$0xff]
    %s838 = scalar_lea.vmem [#allocation2], 276
    %v839 = vld [vmem:[%s838] ss:$2 sm:$0xff]
    %s840 = scalar_lea.vmem [#allocation2], 292
    %v841 = vld [vmem:[%s840] ss:$2 sm:$0xff]
    %s842 = scalar_lea.vmem [#allocation2], 324
    %v843 = vld [vmem:[%s842] ss:$2 sm:$0xff]
    %s844 = scalar_lea.vmem [#allocation2], 340
    %v845 = vld [vmem:[%s844] ss:$2 sm:$0xff]
    %s846 = scalar_lea.vmem [#allocation2], 356
    %v847 = vld [vmem:[%s846] ss:$2 sm:$0xff]
    %s848 = scalar_lea.vmem [#allocation2], 388
    %v849 = vld [vmem:[%s848] ss:$2 sm:$0xff]
    %s850 = scalar_lea.vmem [#allocation2], 404
    %v851 = vld [vmem:[%s850] ss:$2 sm:$0xff]
    %s852 = scalar_lea.vmem [#allocation2], 420
    %v853 = vld [vmem:[%s852] ss:$2 sm:$0xff]
    %s854 = scalar_lea.vmem [#allocation2], 452
    %v855 = vld [vmem:[%s854] ss:$2 sm:$0xff]
    %s856 = scalar_lea.vmem [#allocation2], 468
    %v857 = vld [vmem:[%s856] ss:$2 sm:$0xff]
    %s858 = scalar_lea.vmem [#allocation2], 484
    %v859 = vld [vmem:[%s858] ss:$2 sm:$0xff]
    %s860 = scalar_lea.vmem [#allocation2], 5
    %v861 = vld [vmem:[%s860] ss:$2 sm:$0xff]
    %s862 = scalar_lea.vmem [#allocation2], 21
    %v863 = vld [vmem:[%s862] ss:$2 sm:$0xff]
    %s864 = scalar_lea.vmem [#allocation2], 37
    %v865 = vld [vmem:[%s864] ss:$2 sm:$0xff]
    %s866 = scalar_lea.vmem [#allocation2], 69
    %v867 = vld [vmem:[%s866] ss:$2 sm:$0xff]
    %s868 = scalar_lea.vmem [#allocation2], 85
    %v869 = vld [vmem:[%s868] ss:$2 sm:$0xff]
    %s870 = scalar_lea.vmem [#allocation2], 101
    %v871 = vld [vmem:[%s870] ss:$2 sm:$0xff]
    %s872 = scalar_lea.vmem [#allocation2], 133
    %v873 = vld [vmem:[%s872] ss:$2 sm:$0xff]
    %s874 = scalar_lea.vmem [#allocation2], 149
    %v875 = vld [vmem:[%s874] ss:$2 sm:$0xff]
    %s876 = scalar_lea.vmem [#allocation2], 165
    %v877 = vld [vmem:[%s876] ss:$2 sm:$0xff]
    %s878 = scalar_lea.vmem [#allocation2], 197
    %v879 = vld [vmem:[%s878] ss:$2 sm:$0xff]
    %s880 = scalar_lea.vmem [#allocation2], 213
    %v881 = vld [vmem:[%s880] ss:$2 sm:$0xff]
    %s882 = scalar_lea.vmem [#allocation2], 229
    %v883 = vld [vmem:[%s882] ss:$2 sm:$0xff]
    %s884 = scalar_lea.vmem [#allocation2], 261
    %v885 = vld [vmem:[%s884] ss:$2 sm:$0xff]
    %s886 = scalar_lea.vmem [#allocation2], 277
    %v887 = vld [vmem:[%s886] ss:$2 sm:$0xff]
    %s888 = scalar_lea.vmem [#allocation2], 293
    %v889 = vld [vmem:[%s888] ss:$2 sm:$0xff]
    %s890 = scalar_lea.vmem [#allocation2], 325
    %v891 = vld [vmem:[%s890] ss:$2 sm:$0xff]
    %s892 = scalar_lea.vmem [#allocation2], 341
    %v893 = vld [vmem:[%s892] ss:$2 sm:$0xff]
    %s894 = scalar_lea.vmem [#allocation2], 357
    %v895 = vld [vmem:[%s894] ss:$2 sm:$0xff]
    %s896 = scalar_lea.vmem [#allocation2], 389
    %v897 = vld [vmem:[%s896] ss:$2 sm:$0xff]
    %s898 = scalar_lea.vmem [#allocation2], 405
    %v899 = vld [vmem:[%s898] ss:$2 sm:$0xff]
    %s900 = scalar_lea.vmem [#allocation2], 421
    %v901 = vld [vmem:[%s900] ss:$2 sm:$0xff]
    %s902 = scalar_lea.vmem [#allocation2], 453
    %v903 = vld [vmem:[%s902] ss:$2 sm:$0xff]
    %s904 = scalar_lea.vmem [#allocation2], 469
    %v905 = vld [vmem:[%s904] ss:$2 sm:$0xff]
    %s906 = scalar_lea.vmem [#allocation2], 485
    %v907 = vld [vmem:[%s906] ss:$2 sm:$0xff]
    %v908 = vmax.f32 %v813, %v861
    %v909 = vmax.f32 %v815, %v863
    %v910 = vmax.f32 %v817, %v865
    %v911 = vmax.f32 %v819, %v867
    %v912 = vmax.f32 %v821, %v869
    %v913 = vmax.f32 %v823, %v871
    %v914 = vmax.f32 %v825, %v873
    %v915 = vmax.f32 %v827, %v875
    %v916 = vmax.f32 %v829, %v877
    %v917 = vmax.f32 %v831, %v879
    %v918 = vmax.f32 %v833, %v881
    %v919 = vmax.f32 %v835, %v883
    %v920 = vmax.f32 %v837, %v885
    %v921 = vmax.f32 %v839, %v887
    %v922 = vmax.f32 %v841, %v889
    %v923 = vmax.f32 %v843, %v891
    %v924 = vmax.f32 %v845, %v893
    %v925 = vmax.f32 %v847, %v895
    %v926 = vmax.f32 %v849, %v897
    %v927 = vmax.f32 %v851, %v899
    %v928 = vmax.f32 %v853, %v901
    %v929 = vmax.f32 %v855, %v903
    %v930 = vmax.f32 %v857, %v905
    %v931 = vmax.f32 %v859, %v907
    %s932 = scalar_lea.vmem [#allocation2], 6
    %v933 = vld [vmem:[%s932] ss:$2 sm:$0xff]
    %s934 = scalar_lea.vmem [#allocation2], 22
    %v935 = vld [vmem:[%s934] ss:$2 sm:$0xff]
    %s936 = scalar_lea.vmem [#allocation2], 38
    %v937 = vld [vmem:[%s936] ss:$2 sm:$0xff]
    %s938 = scalar_lea.vmem [#allocation2], 70
    %v939 = vld [vmem:[%s938] ss:$2 sm:$0xff]
    %s940 = scalar_lea.vmem [#allocation2], 86
    %v941 = vld [vmem:[%s940] ss:$2 sm:$0xff]
    %s942 = scalar_lea.vmem [#allocation2], 102
    %v943 = vld [vmem:[%s942] ss:$2 sm:$0xff]
    %s944 = scalar_lea.vmem [#allocation2], 134
    %v945 = vld [vmem:[%s944] ss:$2 sm:$0xff]
    %s946 = scalar_lea.vmem [#allocation2], 150
    %v947 = vld [vmem:[%s946] ss:$2 sm:$0xff]
    %s948 = scalar_lea.vmem [#allocation2], 166
    %v949 = vld [vmem:[%s948] ss:$2 sm:$0xff]
    %s950 = scalar_lea.vmem [#allocation2], 198
    %v951 = vld [vmem:[%s950] ss:$2 sm:$0xff]
    %s952 = scalar_lea.vmem [#allocation2], 214
    %v953 = vld [vmem:[%s952] ss:$2 sm:$0xff]
    %s954 = scalar_lea.vmem [#allocation2], 230
    %v955 = vld [vmem:[%s954] ss:$2 sm:$0xff]
    %s956 = scalar_lea.vmem [#allocation2], 262
    %v957 = vld [vmem:[%s956] ss:$2 sm:$0xff]
    %s958 = scalar_lea.vmem [#allocation2], 278
    %v959 = vld [vmem:[%s958] ss:$2 sm:$0xff]
    %s960 = scalar_lea.vmem [#allocation2], 294
    %v961 = vld [vmem:[%s960] ss:$2 sm:$0xff]
    %s962 = scalar_lea.vmem [#allocation2], 326
    %v963 = vld [vmem:[%s962] ss:$2 sm:$0xff]
    %s964 = scalar_lea.vmem [#allocation2], 342
    %v965 = vld [vmem:[%s964] ss:$2 sm:$0xff]
    %s966 = scalar_lea.vmem [#allocation2], 358
    %v967 = vld [vmem:[%s966] ss:$2 sm:$0xff]
    %s968 = scalar_lea.vmem [#allocation2], 390
    %v969 = vld [vmem:[%s968] ss:$2 sm:$0xff]
    %s970 = scalar_lea.vmem [#allocation2], 406
    %v971 = vld [vmem:[%s970] ss:$2 sm:$0xff]
    %s972 = scalar_lea.vmem [#allocation2], 422
    %v973 = vld [vmem:[%s972] ss:$2 sm:$0xff]
    %s974 = scalar_lea.vmem [#allocation2], 454
    %v975 = vld [vmem:[%s974] ss:$2 sm:$0xff]
    %s976 = scalar_lea.vmem [#allocation2], 470
    %v977 = vld [vmem:[%s976] ss:$2 sm:$0xff]
    %s978 = scalar_lea.vmem [#allocation2], 486
    %v979 = vld [vmem:[%s978] ss:$2 sm:$0xff]
    %s980 = scalar_lea.vmem [#allocation2], 7
    %v981 = vld [vmem:[%s980] ss:$2 sm:$0xff]
    %s982 = scalar_lea.vmem [#allocation2], 23
    %v983 = vld [vmem:[%s982] ss:$2 sm:$0xff]
    %s984 = scalar_lea.vmem [#allocation2], 39
    %v985 = vld [vmem:[%s984] ss:$2 sm:$0xff]
    %s986 = scalar_lea.vmem [#allocation2], 71
    %v987 = vld [vmem:[%s986] ss:$2 sm:$0xff]
    %s988 = scalar_lea.vmem [#allocation2], 87
    %v989 = vld [vmem:[%s988] ss:$2 sm:$0xff]
    %s990 = scalar_lea.vmem [#allocation2], 103
    %v991 = vld [vmem:[%s990] ss:$2 sm:$0xff]
    %s992 = scalar_lea.vmem [#allocation2], 135
    %v993 = vld [vmem:[%s992] ss:$2 sm:$0xff]
    %s994 = scalar_lea.vmem [#allocation2], 151
    %v995 = vld [vmem:[%s994] ss:$2 sm:$0xff]
    %s996 = scalar_lea.vmem [#allocation2], 167
    %v997 = vld [vmem:[%s996] ss:$2 sm:$0xff]
    %s998 = scalar_lea.vmem [#allocation2], 199
    %v999 = vld [vmem:[%s998] ss:$2 sm:$0xff]
    %s1000 = scalar_lea.vmem [#allocation2], 215
    %v1001 = vld [vmem:[%s1000] ss:$2 sm:$0xff]
    %s1002 = scalar_lea.vmem [#allocation2], 231
    %v1003 = vld [vmem:[%s1002] ss:$2 sm:$0xff]
    %s1004 = scalar_lea.vmem [#allocation2], 263
    %v1005 = vld [vmem:[%s1004] ss:$2 sm:$0xff]
    %s1006 = scalar_lea.vmem [#allocation2], 279
    %v1007 = vld [vmem:[%s1006] ss:$2 sm:$0xff]
    %s1008 = scalar_lea.vmem [#allocation2], 295
    %v1009 = vld [vmem:[%s1008] ss:$2 sm:$0xff]
    %s1010 = scalar_lea.vmem [#allocation2], 327
    %v1011 = vld [vmem:[%s1010] ss:$2 sm:$0xff]
    %s1012 = scalar_lea.vmem [#allocation2], 343
    %v1013 = vld [vmem:[%s1012] ss:$2 sm:$0xff]
    %s1014 = scalar_lea.vmem [#allocation2], 359
    %v1015 = vld [vmem:[%s1014] ss:$2 sm:$0xff]
    %s1016 = scalar_lea.vmem [#allocation2], 391
    %v1017 = vld [vmem:[%s1016] ss:$2 sm:$0xff]
    %s1018 = scalar_lea.vmem [#allocation2], 407
    %v1019 = vld [vmem:[%s1018] ss:$2 sm:$0xff]
    %s1020 = scalar_lea.vmem [#allocation2], 423
    %v1021 = vld [vmem:[%s1020] ss:$2 sm:$0xff]
    %s1022 = scalar_lea.vmem [#allocation2], 455
    %v1023 = vld [vmem:[%s1022] ss:$2 sm:$0xff]
    %s1024 = scalar_lea.vmem [#allocation2], 471
    %v1025 = vld [vmem:[%s1024] ss:$2 sm:$0xff]
    %s1026 = scalar_lea.vmem [#allocation2], 487
    %v1027 = vld [vmem:[%s1026] ss:$2 sm:$0xff]
    %v1028 = vmax.f32 %v933, %v981
    %v1029 = vmax.f32 %v935, %v983
    %v1030 = vmax.f32 %v937, %v985
    %v1031 = vmax.f32 %v939, %v987
    %v1032 = vmax.f32 %v941, %v989
    %v1033 = vmax.f32 %v943, %v991
    %v1034 = vmax.f32 %v945, %v993
    %v1035 = vmax.f32 %v947, %v995
    %v1036 = vmax.f32 %v949, %v997
    %v1037 = vmax.f32 %v951, %v999
    %v1038 = vmax.f32 %v953, %v1001
    %v1039 = vmax.f32 %v955, %v1003
    %v1040 = vmax.f32 %v957, %v1005
    %v1041 = vmax.f32 %v959, %v1007
    %v1042 = vmax.f32 %v961, %v1009
    %v1043 = vmax.f32 %v963, %v1011
    %v1044 = vmax.f32 %v965, %v1013
    %v1045 = vmax.f32 %v967, %v1015
    %v1046 = vmax.f32 %v969, %v1017
    %v1047 = vmax.f32 %v971, %v1019
    %v1048 = vmax.f32 %v973, %v1021
    %v1049 = vmax.f32 %v975, %v1023
    %v1050 = vmax.f32 %v977, %v1025
    %v1051 = vmax.f32 %v979, %v1027
    %s1052 = scalar_lea.vmem [#allocation2], 8
    %v1053 = vld [vmem:[%s1052] ss:$2 sm:$0xff]
    %s1054 = scalar_lea.vmem [#allocation2], 24
    %v1055 = vld [vmem:[%s1054] ss:$2 sm:$0xff]
    %s1056 = scalar_lea.vmem [#allocation2], 40
    %v1057 = vld [vmem:[%s1056] ss:$2 sm:$0xff]
    %s1058 = scalar_lea.vmem [#allocation2], 72
    %v1059 = vld [vmem:[%s1058] ss:$2 sm:$0xff]
    %s1060 = scalar_lea.vmem [#allocation2], 88
    %v1061 = vld [vmem:[%s1060] ss:$2 sm:$0xff]
    %s1062 = scalar_lea.vmem [#allocation2], 104
    %v1063 = vld [vmem:[%s1062] ss:$2 sm:$0xff]
    %s1064 = scalar_lea.vmem [#allocation2], 136
    %v1065 = vld [vmem:[%s1064] ss:$2 sm:$0xff]
    %s1066 = scalar_lea.vmem [#allocation2], 152
    %v1067 = vld [vmem:[%s1066] ss:$2 sm:$0xff]
    %s1068 = scalar_lea.vmem [#allocation2], 168
    %v1069 = vld [vmem:[%s1068] ss:$2 sm:$0xff]
    %s1070 = scalar_lea.vmem [#allocation2], 200
    %v1071 = vld [vmem:[%s1070] ss:$2 sm:$0xff]
    %s1072 = scalar_lea.vmem [#allocation2], 216
    %v1073 = vld [vmem:[%s1072] ss:$2 sm:$0xff]
    %s1074 = scalar_lea.vmem [#allocation2], 232
    %v1075 = vld [vmem:[%s1074] ss:$2 sm:$0xff]
    %s1076 = scalar_lea.vmem [#allocation2], 264
    %v1077 = vld [vmem:[%s1076] ss:$2 sm:$0xff]
    %s1078 = scalar_lea.vmem [#allocation2], 280
    %v1079 = vld [vmem:[%s1078] ss:$2 sm:$0xff]
    %s1080 = scalar_lea.vmem [#allocation2], 296
    %v1081 = vld [vmem:[%s1080] ss:$2 sm:$0xff]
    %s1082 = scalar_lea.vmem [#allocation2], 328
    %v1083 = vld [vmem:[%s1082] ss:$2 sm:$0xff]
    %s1084 = scalar_lea.vmem [#allocation2], 344
    %v1085 = vld [vmem:[%s1084] ss:$2 sm:$0xff]
    %s1086 = scalar_lea.vmem [#allocation2], 360
    %v1087 = vld [vmem:[%s1086] ss:$2 sm:$0xff]
    %s1088 = scalar_lea.vmem [#allocation2], 392
    %v1089 = vld [vmem:[%s1088] ss:$2 sm:$0xff]
    %s1090 = scalar_lea.vmem [#allocation2], 408
    %v1091 = vld [vmem:[%s1090] ss:$2 sm:$0xff]
    %s1092 = scalar_lea.vmem [#allocation2], 424
    %v1093 = vld [vmem:[%s1092] ss:$2 sm:$0xff]
    %s1094 = scalar_lea.vmem [#allocation2], 456
    %v1095 = vld [vmem:[%s1094] ss:$2 sm:$0xff]
    %s1096 = scalar_lea.vmem [#allocation2], 472
    %v1097 = vld [vmem:[%s1096] ss:$2 sm:$0xff]
    %s1098 = scalar_lea.vmem [#allocation2], 488
    %v1099 = vld [vmem:[%s1098] ss:$2 sm:$0xff]
    %s1100 = scalar_lea.vmem [#allocation2], 9
    %v1101 = vld [vmem:[%s1100] ss:$2 sm:$0xff]
    %s1102 = scalar_lea.vmem [#allocation2], 25
    %v1103 = vld [vmem:[%s1102] ss:$2 sm:$0xff]
    %s1104 = scalar_lea.vmem [#allocation2], 41
    %v1105 = vld [vmem:[%s1104] ss:$2 sm:$0xff]
    %s1106 = scalar_lea.vmem [#allocation2], 73
    %v1107 = vld [vmem:[%s1106] ss:$2 sm:$0xff]
    %s1108 = scalar_lea.vmem [#allocation2], 89
    %v1109 = vld [vmem:[%s1108] ss:$2 sm:$0xff]
    %s1110 = scalar_lea.vmem [#allocation2], 105
    %v1111 = vld [vmem:[%s1110] ss:$2 sm:$0xff]
    %s1112 = scalar_lea.vmem [#allocation2], 137
    %v1113 = vld [vmem:[%s1112] ss:$2 sm:$0xff]
    %s1114 = scalar_lea.vmem [#allocation2], 153
    %v1115 = vld [vmem:[%s1114] ss:$2 sm:$0xff]
    %s1116 = scalar_lea.vmem [#allocation2], 169
    %v1117 = vld [vmem:[%s1116] ss:$2 sm:$0xff]
    %s1118 = scalar_lea.vmem [#allocation2], 201
    %v1119 = vld [vmem:[%s1118] ss:$2 sm:$0xff]
    %s1120 = scalar_lea.vmem [#allocation2], 217
    %v1121 = vld [vmem:[%s1120] ss:$2 sm:$0xff]
    %s1122 = scalar_lea.vmem [#allocation2], 233
    %v1123 = vld [vmem:[%s1122] ss:$2 sm:$0xff]
    %s1124 = scalar_lea.vmem [#allocation2], 265
    %v1125 = vld [vmem:[%s1124] ss:$2 sm:$0xff]
    %s1126 = scalar_lea.vmem [#allocation2], 281
    %v1127 = vld [vmem:[%s1126] ss:$2 sm:$0xff]
    %s1128 = scalar_lea.vmem [#allocation2], 297
    %v1129 = vld [vmem:[%s1128] ss:$2 sm:$0xff]
    %s1130 = scalar_lea.vmem [#allocation2], 329
    %v1131 = vld [vmem:[%s1130] ss:$2 sm:$0xff]
    %s1132 = scalar_lea.vmem [#allocation2], 345
    %v1133 = vld [vmem:[%s1132] ss:$2 sm:$0xff]
    %s1134 = scalar_lea.vmem [#allocation2], 361
    %v1135 = vld [vmem:[%s1134] ss:$2 sm:$0xff]
    %s1136 = scalar_lea.vmem [#allocation2], 393
    %v1137 = vld [vmem:[%s1136] ss:$2 sm:$0xff]
    %s1138 = scalar_lea.vmem [#allocation2], 409
    %v1139 = vld [vmem:[%s1138] ss:$2 sm:$0xff]
    %s1140 = scalar_lea.vmem [#allocation2], 425
    %v1141 = vld [vmem:[%s1140] ss:$2 sm:$0xff]
    %s1142 = scalar_lea.vmem [#allocation2], 457
    %v1143 = vld [vmem:[%s1142] ss:$2 sm:$0xff]
    %s1144 = scalar_lea.vmem [#allocation2], 473
    %v1145 = vld [vmem:[%s1144] ss:$2 sm:$0xff]
    %s1146 = scalar_lea.vmem [#allocation2], 489
    %v1147 = vld [vmem:[%s1146] ss:$2 sm:$0xff]
    %v1148 = vmax.f32 %v1053, %v1101
    %v1149 = vmax.f32 %v1055, %v1103
    %v1150 = vmax.f32 %v1057, %v1105
    %v1151 = vmax.f32 %v1059, %v1107
    %v1152 = vmax.f32 %v1061, %v1109
    %v1153 = vmax.f32 %v1063, %v1111
    %v1154 = vmax.f32 %v1065, %v1113
    %v1155 = vmax.f32 %v1067, %v1115
    %v1156 = vmax.f32 %v1069, %v1117
    %v1157 = vmax.f32 %v1071, %v1119
    %v1158 = vmax.f32 %v1073, %v1121
    %v1159 = vmax.f32 %v1075, %v1123
    %v1160 = vmax.f32 %v1077, %v1125
    %v1161 = vmax.f32 %v1079, %v1127
    %v1162 = vmax.f32 %v1081, %v1129
    %v1163 = vmax.f32 %v1083, %v1131
    %v1164 = vmax.f32 %v1085, %v1133
    %v1165 = vmax.f32 %v1087, %v1135
    %v1166 = vmax.f32 %v1089, %v1137
    %v1167 = vmax.f32 %v1091, %v1139
    %v1168 = vmax.f32 %v1093, %v1141
    %v1169 = vmax.f32 %v1095, %v1143
    %v1170 = vmax.f32 %v1097, %v1145
    %v1171 = vmax.f32 %v1099, %v1147
    %s1172 = scalar_lea.vmem [#allocation2], 10
    %v1173 = vld [vmem:[%s1172] ss:$2 sm:$0xff]
    %s1174 = scalar_lea.vmem [#allocation2], 26
    %v1175 = vld [vmem:[%s1174] ss:$2 sm:$0xff]
    %s1176 = scalar_lea.vmem [#allocation2], 42
    %v1177 = vld [vmem:[%s1176] ss:$2 sm:$0xff]
    %s1178 = scalar_lea.vmem [#allocation2], 74
    %v1179 = vld [vmem:[%s1178] ss:$2 sm:$0xff]
    %s1180 = scalar_lea.vmem [#allocation2], 90
    %v1181 = vld [vmem:[%s1180] ss:$2 sm:$0xff]
    %s1182 = scalar_lea.vmem [#allocation2], 106
    %v1183 = vld [vmem:[%s1182] ss:$2 sm:$0xff]
    %s1184 = scalar_lea.vmem [#allocation2], 138
    %v1185 = vld [vmem:[%s1184] ss:$2 sm:$0xff]
    %s1186 = scalar_lea.vmem [#allocation2], 154
    %v1187 = vld [vmem:[%s1186] ss:$2 sm:$0xff]
    %s1188 = scalar_lea.vmem [#allocation2], 170
    %v1189 = vld [vmem:[%s1188] ss:$2 sm:$0xff]
    %s1190 = scalar_lea.vmem [#allocation2], 202
    %v1191 = vld [vmem:[%s1190] ss:$2 sm:$0xff]
    %s1192 = scalar_lea.vmem [#allocation2], 218
    %v1193 = vld [vmem:[%s1192] ss:$2 sm:$0xff]
    %s1194 = scalar_lea.vmem [#allocation2], 234
    %v1195 = vld [vmem:[%s1194] ss:$2 sm:$0xff]
    %s1196 = scalar_lea.vmem [#allocation2], 266
    %v1197 = vld [vmem:[%s1196] ss:$2 sm:$0xff]
    %s1198 = scalar_lea.vmem [#allocation2], 282
    %v1199 = vld [vmem:[%s1198] ss:$2 sm:$0xff]
    %s1200 = scalar_lea.vmem [#allocation2], 298
    %v1201 = vld [vmem:[%s1200] ss:$2 sm:$0xff]
    %s1202 = scalar_lea.vmem [#allocation2], 330
    %v1203 = vld [vmem:[%s1202] ss:$2 sm:$0xff]
    %s1204 = scalar_lea.vmem [#allocation2], 346
    %v1205 = vld [vmem:[%s1204] ss:$2 sm:$0xff]
    %s1206 = scalar_lea.vmem [#allocation2], 362
    %v1207 = vld [vmem:[%s1206] ss:$2 sm:$0xff]
    %s1208 = scalar_lea.vmem [#allocation2], 394
    %v1209 = vld [vmem:[%s1208] ss:$2 sm:$0xff]
    %s1210 = scalar_lea.vmem [#allocation2], 410
    %v1211 = vld [vmem:[%s1210] ss:$2 sm:$0xff]
    %s1212 = scalar_lea.vmem [#allocation2], 426
    %v1213 = vld [vmem:[%s1212] ss:$2 sm:$0xff]
    %s1214 = scalar_lea.vmem [#allocation2], 458
    %v1215 = vld [vmem:[%s1214] ss:$2 sm:$0xff]
    %s1216 = scalar_lea.vmem [#allocation2], 474
    %v1217 = vld [vmem:[%s1216] ss:$2 sm:$0xff]
    %s1218 = scalar_lea.vmem [#allocation2], 490
    %v1219 = vld [vmem:[%s1218] ss:$2 sm:$0xff]
    %s1220 = scalar_lea.vmem [#allocation2], 11
    %v1221 = vld [vmem:[%s1220] ss:$2 sm:$0xff]
    %s1222 = scalar_lea.vmem [#allocation2], 27
    %v1223 = vld [vmem:[%s1222] ss:$2 sm:$0xff]
    %s1224 = scalar_lea.vmem [#allocation2], 43
    %v1225 = vld [vmem:[%s1224] ss:$2 sm:$0xff]
    %s1226 = scalar_lea.vmem [#allocation2], 75
    %v1227 = vld [vmem:[%s1226] ss:$2 sm:$0xff]
    %s1228 = scalar_lea.vmem [#allocation2], 91
    %v1229 = vld [vmem:[%s1228] ss:$2 sm:$0xff]
    %s1230 = scalar_lea.vmem [#allocation2], 107
    %v1231 = vld [vmem:[%s1230] ss:$2 sm:$0xff]
    %s1232 = scalar_lea.vmem [#allocation2], 139
    %v1233 = vld [vmem:[%s1232] ss:$2 sm:$0xff]
    %s1234 = scalar_lea.vmem [#allocation2], 155
    %v1235 = vld [vmem:[%s1234] ss:$2 sm:$0xff]
    %s1236 = scalar_lea.vmem [#allocation2], 171
    %v1237 = vld [vmem:[%s1236] ss:$2 sm:$0xff]
    %s1238 = scalar_lea.vmem [#allocation2], 203
    %v1239 = vld [vmem:[%s1238] ss:$2 sm:$0xff]
    %s1240 = scalar_lea.vmem [#allocation2], 219
    %v1241 = vld [vmem:[%s1240] ss:$2 sm:$0xff]
    %s1242 = scalar_lea.vmem [#allocation2], 235
    %v1243 = vld [vmem:[%s1242] ss:$2 sm:$0xff]
    %s1244 = scalar_lea.vmem [#allocation2], 267
    %v1245 = vld [vmem:[%s1244] ss:$2 sm:$0xff]
    %s1246 = scalar_lea.vmem [#allocation2], 283
    %v1247 = vld [vmem:[%s1246] ss:$2 sm:$0xff]
    %s1248 = scalar_lea.vmem [#allocation2], 299
    %v1249 = vld [vmem:[%s1248] ss:$2 sm:$0xff]
    %s1250 = scalar_lea.vmem [#allocation2], 331
    %v1251 = vld [vmem:[%s1250] ss:$2 sm:$0xff]
    %s1252 = scalar_lea.vmem [#allocation2], 347
    %v1253 = vld [vmem:[%s1252] ss:$2 sm:$0xff]
    %s1254 = scalar_lea.vmem [#allocation2], 363
    %v1255 = vld [vmem:[%s1254] ss:$2 sm:$0xff]
    %s1256 = scalar_lea.vmem [#allocation2], 395
    %v1257 = vld [vmem:[%s1256] ss:$2 sm:$0xff]
    %s1258 = scalar_lea.vmem [#allocation2], 411
    %v1259 = vld [vmem:[%s1258] ss:$2 sm:$0xff]
    %s1260 = scalar_lea.vmem [#allocation2], 427
    %v1261 = vld [vmem:[%s1260] ss:$2 sm:$0xff]
    %s1262 = scalar_lea.vmem [#allocation2], 459
    %v1263 = vld [vmem:[%s1262] ss:$2 sm:$0xff]
    %s1264 = scalar_lea.vmem [#allocation2], 475
    %v1265 = vld [vmem:[%s1264] ss:$2 sm:$0xff]
    %s1266 = scalar_lea.vmem [#allocation2], 491
    %v1267 = vld [vmem:[%s1266] ss:$2 sm:$0xff]
    %v1268 = vmax.f32 %v1173, %v1221
    %v1269 = vmax.f32 %v1175, %v1223
    %v1270 = vmax.f32 %v1177, %v1225
    %v1271 = vmax.f32 %v1179, %v1227
    %v1272 = vmax.f32 %v1181, %v1229
    %v1273 = vmax.f32 %v1183, %v1231
    %v1274 = vmax.f32 %v1185, %v1233
    %v1275 = vmax.f32 %v1187, %v1235
    %v1276 = vmax.f32 %v1189, %v1237
    %v1277 = vmax.f32 %v1191, %v1239
    %v1278 = vmax.f32 %v1193, %v1241
    %v1279 = vmax.f32 %v1195, %v1243
    %v1280 = vmax.f32 %v1197, %v1245
    %v1281 = vmax.f32 %v1199, %v1247
    %v1282 = vmax.f32 %v1201, %v1249
    %v1283 = vmax.f32 %v1203, %v1251
    %v1284 = vmax.f32 %v1205, %v1253
    %v1285 = vmax.f32 %v1207, %v1255
    %v1286 = vmax.f32 %v1209, %v1257
    %v1287 = vmax.f32 %v1211, %v1259
    %v1288 = vmax.f32 %v1213, %v1261
    %v1289 = vmax.f32 %v1215, %v1263
    %v1290 = vmax.f32 %v1217, %v1265
    %v1291 = vmax.f32 %v1219, %v1267
    %s1292 = scalar_lea.vmem [#allocation2], 12
    %v1293 = vld [vmem:[%s1292] ss:$2 sm:$0xff]
    %s1294 = scalar_lea.vmem [#allocation2], 28
    %v1295 = vld [vmem:[%s1294] ss:$2 sm:$0xff]
    %s1296 = scalar_lea.vmem [#allocation2], 44
    %v1297 = vld [vmem:[%s1296] ss:$2 sm:$0xff]
    %s1298 = scalar_lea.vmem [#allocation2], 76
    %v1299 = vld [vmem:[%s1298] ss:$2 sm:$0xff]
    %s1300 = scalar_lea.vmem [#allocation2], 92
    %v1301 = vld [vmem:[%s1300] ss:$2 sm:$0xff]
    %s1302 = scalar_lea.vmem [#allocation2], 108
    %v1303 = vld [vmem:[%s1302] ss:$2 sm:$0xff]
    %s1304 = scalar_lea.vmem [#allocation2], 140
    %v1305 = vld [vmem:[%s1304] ss:$2 sm:$0xff]
    %s1306 = scalar_lea.vmem [#allocation2], 156
    %v1307 = vld [vmem:[%s1306] ss:$2 sm:$0xff]
    %s1308 = scalar_lea.vmem [#allocation2], 172
    %v1309 = vld [vmem:[%s1308] ss:$2 sm:$0xff]
    %s1310 = scalar_lea.vmem [#allocation2], 204
    %v1311 = vld [vmem:[%s1310] ss:$2 sm:$0xff]
    %s1312 = scalar_lea.vmem [#allocation2], 220
    %v1313 = vld [vmem:[%s1312] ss:$2 sm:$0xff]
    %s1314 = scalar_lea.vmem [#allocation2], 236
    %v1315 = vld [vmem:[%s1314] ss:$2 sm:$0xff]
    %s1316 = scalar_lea.vmem [#allocation2], 268
    %v1317 = vld [vmem:[%s1316] ss:$2 sm:$0xff]
    %s1318 = scalar_lea.vmem [#allocation2], 284
    %v1319 = vld [vmem:[%s1318] ss:$2 sm:$0xff]
    %s1320 = scalar_lea.vmem [#allocation2], 300
    %v1321 = vld [vmem:[%s1320] ss:$2 sm:$0xff]
    %s1322 = scalar_lea.vmem [#allocation2], 332
    %v1323 = vld [vmem:[%s1322] ss:$2 sm:$0xff]
    %s1324 = scalar_lea.vmem [#allocation2], 348
    %v1325 = vld [vmem:[%s1324] ss:$2 sm:$0xff]
    %s1326 = scalar_lea.vmem [#allocation2], 364
    %v1327 = vld [vmem:[%s1326] ss:$2 sm:$0xff]
    %s1328 = scalar_lea.vmem [#allocation2], 396
    %v1329 = vld [vmem:[%s1328] ss:$2 sm:$0xff]
    %s1330 = scalar_lea.vmem [#allocation2], 412
    %v1331 = vld [vmem:[%s1330] ss:$2 sm:$0xff]
    %s1332 = scalar_lea.vmem [#allocation2], 428
    %v1333 = vld [vmem:[%s1332] ss:$2 sm:$0xff]
    %s1334 = scalar_lea.vmem [#allocation2], 460
    %v1335 = vld [vmem:[%s1334] ss:$2 sm:$0xff]
    %s1336 = scalar_lea.vmem [#allocation2], 476
    %v1337 = vld [vmem:[%s1336] ss:$2 sm:$0xff]
    %s1338 = scalar_lea.vmem [#allocation2], 492
    %v1339 = vld [vmem:[%s1338] ss:$2 sm:$0xff]
    %s1340 = scalar_lea.vmem [#allocation2], 13
    %v1341 = vld [vmem:[%s1340] ss:$2 sm:$0xff]
    %s1342 = scalar_lea.vmem [#allocation2], 29
    %v1343 = vld [vmem:[%s1342] ss:$2 sm:$0xff]
    %s1344 = scalar_lea.vmem [#allocation2], 45
    %v1345 = vld [vmem:[%s1344] ss:$2 sm:$0xff]
    %s1346 = scalar_lea.vmem [#allocation2], 77
    %v1347 = vld [vmem:[%s1346] ss:$2 sm:$0xff]
    %s1348 = scalar_lea.vmem [#allocation2], 93
    %v1349 = vld [vmem:[%s1348] ss:$2 sm:$0xff]
    %s1350 = scalar_lea.vmem [#allocation2], 109
    %v1351 = vld [vmem:[%s1350] ss:$2 sm:$0xff]
    %s1352 = scalar_lea.vmem [#allocation2], 141
    %v1353 = vld [vmem:[%s1352] ss:$2 sm:$0xff]
    %s1354 = scalar_lea.vmem [#allocation2], 157
    %v1355 = vld [vmem:[%s1354] ss:$2 sm:$0xff]
    %s1356 = scalar_lea.vmem [#allocation2], 173
    %v1357 = vld [vmem:[%s1356] ss:$2 sm:$0xff]
    %s1358 = scalar_lea.vmem [#allocation2], 205
    %v1359 = vld [vmem:[%s1358] ss:$2 sm:$0xff]
    %s1360 = scalar_lea.vmem [#allocation2], 221
    %v1361 = vld [vmem:[%s1360] ss:$2 sm:$0xff]
    %s1362 = scalar_lea.vmem [#allocation2], 237
    %v1363 = vld [vmem:[%s1362] ss:$2 sm:$0xff]
    %s1364 = scalar_lea.vmem [#allocation2], 269
    %v1365 = vld [vmem:[%s1364] ss:$2 sm:$0xff]
    %s1366 = scalar_lea.vmem [#allocation2], 285
    %v1367 = vld [vmem:[%s1366] ss:$2 sm:$0xff]
    %s1368 = scalar_lea.vmem [#allocation2], 301
    %v1369 = vld [vmem:[%s1368] ss:$2 sm:$0xff]
    %s1370 = scalar_lea.vmem [#allocation2], 333
    %v1371 = vld [vmem:[%s1370] ss:$2 sm:$0xff]
    %s1372 = scalar_lea.vmem [#allocation2], 349
    %v1373 = vld [vmem:[%s1372] ss:$2 sm:$0xff]
    %s1374 = scalar_lea.vmem [#allocation2], 365
    %v1375 = vld [vmem:[%s1374] ss:$2 sm:$0xff]
    %s1376 = scalar_lea.vmem [#allocation2], 397
    %v1377 = vld [vmem:[%s1376] ss:$2 sm:$0xff]
    %s1378 = scalar_lea.vmem [#allocation2], 413
    %v1379 = vld [vmem:[%s1378] ss:$2 sm:$0xff]
    %s1380 = scalar_lea.vmem [#allocation2], 429
    %v1381 = vld [vmem:[%s1380] ss:$2 sm:$0xff]
    %s1382 = scalar_lea.vmem [#allocation2], 461
    %v1383 = vld [vmem:[%s1382] ss:$2 sm:$0xff]
    %s1384 = scalar_lea.vmem [#allocation2], 477
    %v1385 = vld [vmem:[%s1384] ss:$2 sm:$0xff]
    %s1386 = scalar_lea.vmem [#allocation2], 493
    %v1387 = vld [vmem:[%s1386] ss:$2 sm:$0xff]
    %v1388 = vmax.f32 %v1293, %v1341
    %v1389 = vmax.f32 %v1295, %v1343
    %v1390 = vmax.f32 %v1297, %v1345
    %v1391 = vmax.f32 %v1299, %v1347
    %v1392 = vmax.f32 %v1301, %v1349
    %v1393 = vmax.f32 %v1303, %v1351
    %v1394 = vmax.f32 %v1305, %v1353
    %v1395 = vmax.f32 %v1307, %v1355
    %v1396 = vmax.f32 %v1309, %v1357
    %v1397 = vmax.f32 %v1311, %v1359
    %v1398 = vmax.f32 %v1313, %v1361
    %v1399 = vmax.f32 %v1315, %v1363
    %v1400 = vmax.f32 %v1317, %v1365
    %v1401 = vmax.f32 %v1319, %v1367
    %v1402 = vmax.f32 %v1321, %v1369
    %v1403 = vmax.f32 %v1323, %v1371
    %v1404 = vmax.f32 %v1325, %v1373
    %v1405 = vmax.f32 %v1327, %v1375
    %v1406 = vmax.f32 %v1329, %v1377
    %v1407 = vmax.f32 %v1331, %v1379
    %v1408 = vmax.f32 %v1333, %v1381
    %v1409 = vmax.f32 %v1335, %v1383
    %v1410 = vmax.f32 %v1337, %v1385
    %v1411 = vmax.f32 %v1339, %v1387
    %s1412 = scalar_lea.vmem [#allocation2], 14
    %v1413 = vld [vmem:[%s1412] ss:$2 sm:$0xff]
    %s1414 = scalar_lea.vmem [#allocation2], 30
    %v1415 = vld [vmem:[%s1414] ss:$2 sm:$0xff]
    %s1416 = scalar_lea.vmem [#allocation2], 46
    %v1417 = vld [vmem:[%s1416] ss:$2 sm:$0xff]
    %s1418 = scalar_lea.vmem [#allocation2], 78
    %v1419 = vld [vmem:[%s1418] ss:$2 sm:$0xff]
    %s1420 = scalar_lea.vmem [#allocation2], 94
    %v1421 = vld [vmem:[%s1420] ss:$2 sm:$0xff]
    %s1422 = scalar_lea.vmem [#allocation2], 110
    %v1423 = vld [vmem:[%s1422] ss:$2 sm:$0xff]
    %s1424 = scalar_lea.vmem [#allocation2], 142
    %v1425 = vld [vmem:[%s1424] ss:$2 sm:$0xff]
    %s1426 = scalar_lea.vmem [#allocation2], 158
    %v1427 = vld [vmem:[%s1426] ss:$2 sm:$0xff]
    %s1428 = scalar_lea.vmem [#allocation2], 174
    %v1429 = vld [vmem:[%s1428] ss:$2 sm:$0xff]
    %s1430 = scalar_lea.vmem [#allocation2], 206
    %v1431 = vld [vmem:[%s1430] ss:$2 sm:$0xff]
    %s1432 = scalar_lea.vmem [#allocation2], 222
    %v1433 = vld [vmem:[%s1432] ss:$2 sm:$0xff]
    %s1434 = scalar_lea.vmem [#allocation2], 238
    %v1435 = vld [vmem:[%s1434] ss:$2 sm:$0xff]
    %s1436 = scalar_lea.vmem [#allocation2], 270
    %v1437 = vld [vmem:[%s1436] ss:$2 sm:$0xff]
    %s1438 = scalar_lea.vmem [#allocation2], 286
    %v1439 = vld [vmem:[%s1438] ss:$2 sm:$0xff]
    %s1440 = scalar_lea.vmem [#allocation2], 302
    %v1441 = vld [vmem:[%s1440] ss:$2 sm:$0xff]
    %s1442 = scalar_lea.vmem [#allocation2], 334
    %v1443 = vld [vmem:[%s1442] ss:$2 sm:$0xff]
    %s1444 = scalar_lea.vmem [#allocation2], 350
    %v1445 = vld [vmem:[%s1444] ss:$2 sm:$0xff]
    %s1446 = scalar_lea.vmem [#allocation2], 366
    %v1447 = vld [vmem:[%s1446] ss:$2 sm:$0xff]
    %s1448 = scalar_lea.vmem [#allocation2], 398
    %v1449 = vld [vmem:[%s1448] ss:$2 sm:$0xff]
    %s1450 = scalar_lea.vmem [#allocation2], 414
    %v1451 = vld [vmem:[%s1450] ss:$2 sm:$0xff]
    %s1452 = scalar_lea.vmem [#allocation2], 430
    %v1453 = vld [vmem:[%s1452] ss:$2 sm:$0xff]
    %s1454 = scalar_lea.vmem [#allocation2], 462
    %v1455 = vld [vmem:[%s1454] ss:$2 sm:$0xff]
    %s1456 = scalar_lea.vmem [#allocation2], 478
    %v1457 = vld [vmem:[%s1456] ss:$2 sm:$0xff]
    %s1458 = scalar_lea.vmem [#allocation2], 494
    %v1459 = vld [vmem:[%s1458] ss:$2 sm:$0xff]
    %s1460 = scalar_lea.vmem [#allocation2], 15
    %v1461 = vld [vmem:[%s1460] ss:$2 sm:$0xff]
    %s1462 = scalar_lea.vmem [#allocation2], 31
    %v1463 = vld [vmem:[%s1462] ss:$2 sm:$0xff]
    %s1464 = scalar_lea.vmem [#allocation2], 47
    %v1465 = vld [vmem:[%s1464] ss:$2 sm:$0xff]
    %s1466 = scalar_lea.vmem [#allocation2], 79
    %v1467 = vld [vmem:[%s1466] ss:$2 sm:$0xff]
    %s1468 = scalar_lea.vmem [#allocation2], 95
    %v1469 = vld [vmem:[%s1468] ss:$2 sm:$0xff]
    %s1470 = scalar_lea.vmem [#allocation2], 111
    %v1471 = vld [vmem:[%s1470] ss:$2 sm:$0xff]
    %s1472 = scalar_lea.vmem [#allocation2], 143
    %v1473 = vld [vmem:[%s1472] ss:$2 sm:$0xff]
    %s1474 = scalar_lea.vmem [#allocation2], 159
    %v1475 = vld [vmem:[%s1474] ss:$2 sm:$0xff]
    %s1476 = scalar_lea.vmem [#allocation2], 175
    %v1477 = vld [vmem:[%s1476] ss:$2 sm:$0xff]
    %s1478 = scalar_lea.vmem [#allocation2], 207
    %v1479 = vld [vmem:[%s1478] ss:$2 sm:$0xff]
    %s1480 = scalar_lea.vmem [#allocation2], 223
    %v1481 = vld [vmem:[%s1480] ss:$2 sm:$0xff]
    %s1482 = scalar_lea.vmem [#allocation2], 239
    %v1483 = vld [vmem:[%s1482] ss:$2 sm:$0xff]
    %s1484 = scalar_lea.vmem [#allocation2], 271
    %v1485 = vld [vmem:[%s1484] ss:$2 sm:$0xff]
    %s1486 = scalar_lea.vmem [#allocation2], 287
    %v1487 = vld [vmem:[%s1486] ss:$2 sm:$0xff]
    %s1488 = scalar_lea.vmem [#allocation2], 303
    %v1489 = vld [vmem:[%s1488] ss:$2 sm:$0xff]
    %s1490 = scalar_lea.vmem [#allocation2], 335
    %v1491 = vld [vmem:[%s1490] ss:$2 sm:$0xff]
    %s1492 = scalar_lea.vmem [#allocation2], 351
    %v1493 = vld [vmem:[%s1492] ss:$2 sm:$0xff]
    %s1494 = scalar_lea.vmem [#allocation2], 367
    %v1495 = vld [vmem:[%s1494] ss:$2 sm:$0xff]
    %s1496 = scalar_lea.vmem [#allocation2], 399
    %v1497 = vld [vmem:[%s1496] ss:$2 sm:$0xff]
    %s1498 = scalar_lea.vmem [#allocation2], 415
    %v1499 = vld [vmem:[%s1498] ss:$2 sm:$0xff]
    %s1500 = scalar_lea.vmem [#allocation2], 431
    %v1501 = vld [vmem:[%s1500] ss:$2 sm:$0xff]
    %s1502 = scalar_lea.vmem [#allocation2], 463
    %v1503 = vld [vmem:[%s1502] ss:$2 sm:$0xff]
    %s1504 = scalar_lea.vmem [#allocation2], 479
    %v1505 = vld [vmem:[%s1504] ss:$2 sm:$0xff]
    %s1506 = scalar_lea.vmem [#allocation2], 495
    %v1507 = vld [vmem:[%s1506] ss:$2 sm:$0xff]
    %v1508 = vmax.f32 %v1413, %v1461
    %v1509 = vmax.f32 %v1415, %v1463
    %v1510 = vmax.f32 %v1417, %v1465
    %v1511 = vmax.f32 %v1419, %v1467
    %v1512 = vmax.f32 %v1421, %v1469
    %v1513 = vmax.f32 %v1423, %v1471
    %v1514 = vmax.f32 %v1425, %v1473
    %v1515 = vmax.f32 %v1427, %v1475
    %v1516 = vmax.f32 %v1429, %v1477
    %v1517 = vmax.f32 %v1431, %v1479
    %v1518 = vmax.f32 %v1433, %v1481
    %v1519 = vmax.f32 %v1435, %v1483
    %v1520 = vmax.f32 %v1437, %v1485
    %v1521 = vmax.f32 %v1439, %v1487
    %v1522 = vmax.f32 %v1441, %v1489
    %v1523 = vmax.f32 %v1443, %v1491
    %v1524 = vmax.f32 %v1445, %v1493
    %v1525 = vmax.f32 %v1447, %v1495
    %v1526 = vmax.f32 %v1449, %v1497
    %v1527 = vmax.f32 %v1451, %v1499
    %v1528 = vmax.f32 %v1453, %v1501
    %v1529 = vmax.f32 %v1455, %v1503
    %v1530 = vmax.f32 %v1457, %v1505
    %v1531 = vmax.f32 %v1459, %v1507
    %1556 = vrot.lane.b32.xlu0 %v788, 32
    %v1557 = vpop.permute.xlu0 %1556
    %1558 = vrot.lane.b32.xlu0 %v789, 32
    %v1559 = vpop.permute.xlu0 %1558
    %1560 = vrot.lane.b32.xlu0 %v790, 32
    %v1561 = vpop.permute.xlu0 %1560
    %1562 = vrot.lane.b32.xlu0 %v791, 32
    %v1563 = vpop.permute.xlu0 %1562
    %1564 = vrot.lane.b32.xlu0 %v792, 32
    %v1565 = vpop.permute.xlu0 %1564
    %1566 = vrot.lane.b32.xlu0 %v793, 32
    %v1567 = vpop.permute.xlu0 %1566
    %1568 = vrot.lane.b32.xlu0 %v794, 32
    %v1569 = vpop.permute.xlu0 %1568
    %1570 = vrot.lane.b32.xlu0 %v795, 32
    %v1571 = vpop.permute.xlu0 %1570
    %1572 = vrot.lane.b32.xlu0 %v796, 32
    %v1573 = vpop.permute.xlu0 %1572
    %1574 = vrot.lane.b32.xlu0 %v797, 32
    %v1575 = vpop.permute.xlu0 %1574
    %1576 = vrot.lane.b32.xlu0 %v798, 32
    %v1577 = vpop.permute.xlu0 %1576
    %1578 = vrot.lane.b32.xlu0 %v799, 32
    %v1579 = vpop.permute.xlu0 %1578
    %1580 = vrot.lane.b32.xlu0 %v800, 32
    %v1581 = vpop.permute.xlu0 %1580
    %1582 = vrot.lane.b32.xlu0 %v801, 32
    %v1583 = vpop.permute.xlu0 %1582
    %1584 = vrot.lane.b32.xlu0 %v802, 32
    %v1585 = vpop.permute.xlu0 %1584
    %1586 = vrot.lane.b32.xlu0 %v803, 32
    %v1587 = vpop.permute.xlu0 %1586
    %1588 = vrot.lane.b32.xlu0 %v804, 32
    %v1589 = vpop.permute.xlu0 %1588
    %1590 = vrot.lane.b32.xlu0 %v805, 32
    %v1591 = vpop.permute.xlu0 %1590
    %1592 = vrot.lane.b32.xlu0 %v806, 32
    %v1593 = vpop.permute.xlu0 %1592
    %1594 = vrot.lane.b32.xlu0 %v807, 32
    %v1595 = vpop.permute.xlu0 %1594
    %1596 = vrot.lane.b32.xlu0 %v808, 32
    %v1597 = vpop.permute.xlu0 %1596
    %1598 = vrot.lane.b32.xlu0 %v809, 32
    %v1599 = vpop.permute.xlu0 %1598
    %1600 = vrot.lane.b32.xlu0 %v810, 32
    %v1601 = vpop.permute.xlu0 %1600
    %1602 = vrot.lane.b32.xlu0 %v811, 32
    %v1603 = vpop.permute.xlu0 %1602
    %1652 = vrot.lane.b32.xlu0 %v908, 64
    %v1653 = vpop.permute.xlu0 %1652
    %1654 = vrot.lane.b32.xlu0 %v909, 64
    %v1655 = vpop.permute.xlu0 %1654
    %1656 = vrot.lane.b32.xlu0 %v910, 64
    %v1657 = vpop.permute.xlu0 %1656
    %1658 = vrot.lane.b32.xlu0 %v911, 64
    %v1659 = vpop.permute.xlu0 %1658
    %1660 = vrot.lane.b32.xlu0 %v912, 64
    %v1661 = vpop.permute.xlu0 %1660
    %1662 = vrot.lane.b32.xlu0 %v913, 64
    %v1663 = vpop.permute.xlu0 %1662
    %1664 = vrot.lane.b32.xlu0 %v914, 64
    %v1665 = vpop.permute.xlu0 %1664
    %1666 = vrot.lane.b32.xlu0 %v915, 64
    %v1667 = vpop.permute.xlu0 %1666
    %1668 = vrot.lane.b32.xlu0 %v916, 64
    %v1669 = vpop.permute.xlu0 %1668
    %1670 = vrot.lane.b32.xlu0 %v917, 64
    %v1671 = vpop.permute.xlu0 %1670
    %1672 = vrot.lane.b32.xlu0 %v918, 64
    %v1673 = vpop.permute.xlu0 %1672
    %1674 = vrot.lane.b32.xlu0 %v919, 64
    %v1675 = vpop.permute.xlu0 %1674
    %1676 = vrot.lane.b32.xlu0 %v920, 64
    %v1677 = vpop.permute.xlu0 %1676
    %1678 = vrot.lane.b32.xlu0 %v921, 64
    %v1679 = vpop.permute.xlu0 %1678
    %1680 = vrot.lane.b32.xlu0 %v922, 64
    %v1681 = vpop.permute.xlu0 %1680
    %1682 = vrot.lane.b32.xlu0 %v923, 64
    %v1683 = vpop.permute.xlu0 %1682
    %1684 = vrot.lane.b32.xlu0 %v924, 64
    %v1685 = vpop.permute.xlu0 %1684
    %1686 = vrot.lane.b32.xlu0 %v925, 64
    %v1687 = vpop.permute.xlu0 %1686
    %1688 = vrot.lane.b32.xlu0 %v926, 64
    %v1689 = vpop.permute.xlu0 %1688
    %1690 = vrot.lane.b32.xlu0 %v927, 64
    %v1691 = vpop.permute.xlu0 %1690
    %1692 = vrot.lane.b32.xlu0 %v928, 64
    %v1693 = vpop.permute.xlu0 %1692
    %1694 = vrot.lane.b32.xlu0 %v929, 64
    %v1695 = vpop.permute.xlu0 %1694
    %1696 = vrot.lane.b32.xlu0 %v930, 64
    %v1697 = vpop.permute.xlu0 %1696
    %1698 = vrot.lane.b32.xlu0 %v931, 64
    %v1699 = vpop.permute.xlu0 %1698
    %1748 = vrot.lane.b32.xlu0 %v1028, 96
    %v1749 = vpop.permute.xlu0 %1748
    %1750 = vrot.lane.b32.xlu0 %v1029, 96
    %v1751 = vpop.permute.xlu0 %1750
    %1752 = vrot.lane.b32.xlu0 %v1030, 96
    %v1753 = vpop.permute.xlu0 %1752
    %1754 = vrot.lane.b32.xlu0 %v1031, 96
    %v1755 = vpop.permute.xlu0 %1754
    %1756 = vrot.lane.b32.xlu0 %v1032, 96
    %v1757 = vpop.permute.xlu0 %1756
    %1758 = vrot.lane.b32.xlu0 %v1033, 96
    %v1759 = vpop.permute.xlu0 %1758
    %1760 = vrot.lane.b32.xlu0 %v1034, 96
    %v1761 = vpop.permute.xlu0 %1760
    %1762 = vrot.lane.b32.xlu0 %v1035, 96
    %v1763 = vpop.permute.xlu0 %1762
    %1764 = vrot.lane.b32.xlu0 %v1036, 96
    %v1765 = vpop.permute.xlu0 %1764
    %1766 = vrot.lane.b32.xlu0 %v1037, 96
    %v1767 = vpop.permute.xlu0 %1766
    %1768 = vrot.lane.b32.xlu0 %v1038, 96
    %v1769 = vpop.permute.xlu0 %1768
    %1770 = vrot.lane.b32.xlu0 %v1039, 96
    %v1771 = vpop.permute.xlu0 %1770
    %1772 = vrot.lane.b32.xlu0 %v1040, 96
    %v1773 = vpop.permute.xlu0 %1772
    %1774 = vrot.lane.b32.xlu0 %v1041, 96
    %v1775 = vpop.permute.xlu0 %1774
    %1776 = vrot.lane.b32.xlu0 %v1042, 96
    %v1777 = vpop.permute.xlu0 %1776
    %1778 = vrot.lane.b32.xlu0 %v1043, 96
    %v1779 = vpop.permute.xlu0 %1778
    %1780 = vrot.lane.b32.xlu0 %v1044, 96
    %v1781 = vpop.permute.xlu0 %1780
    %1782 = vrot.lane.b32.xlu0 %v1045, 96
    %v1783 = vpop.permute.xlu0 %1782
    %1784 = vrot.lane.b32.xlu0 %v1046, 96
    %v1785 = vpop.permute.xlu0 %1784
    %1786 = vrot.lane.b32.xlu0 %v1047, 96
    %v1787 = vpop.permute.xlu0 %1786
    %1788 = vrot.lane.b32.xlu0 %v1048, 96
    %v1789 = vpop.permute.xlu0 %1788
    %1790 = vrot.lane.b32.xlu0 %v1049, 96
    %v1791 = vpop.permute.xlu0 %1790
    %1792 = vrot.lane.b32.xlu0 %v1050, 96
    %v1793 = vpop.permute.xlu0 %1792
    %1794 = vrot.lane.b32.xlu0 %v1051, 96
    %v1795 = vpop.permute.xlu0 %1794
    %1844 = vrot.lane.b32.xlu0 %v1268, 32
    %v1845 = vpop.permute.xlu0 %1844
    %1846 = vrot.lane.b32.xlu0 %v1269, 32
    %v1847 = vpop.permute.xlu0 %1846
    %1848 = vrot.lane.b32.xlu0 %v1270, 32
    %v1849 = vpop.permute.xlu0 %1848
    %1850 = vrot.lane.b32.xlu0 %v1271, 32
    %v1851 = vpop.permute.xlu0 %1850
    %1852 = vrot.lane.b32.xlu0 %v1272, 32
    %v1853 = vpop.permute.xlu0 %1852
    %1854 = vrot.lane.b32.xlu0 %v1273, 32
    %v1855 = vpop.permute.xlu0 %1854
    %1856 = vrot.lane.b32.xlu0 %v1274, 32
    %v1857 = vpop.permute.xlu0 %1856
    %1858 = vrot.lane.b32.xlu0 %v1275, 32
    %v1859 = vpop.permute.xlu0 %1858
    %1860 = vrot.lane.b32.xlu0 %v1276, 32
    %v1861 = vpop.permute.xlu0 %1860
    %1862 = vrot.lane.b32.xlu0 %v1277, 32
    %v1863 = vpop.permute.xlu0 %1862
    %1864 = vrot.lane.b32.xlu0 %v1278, 32
    %v1865 = vpop.permute.xlu0 %1864
    %1866 = vrot.lane.b32.xlu0 %v1279, 32
    %v1867 = vpop.permute.xlu0 %1866
    %1868 = vrot.lane.b32.xlu0 %v1280, 32
    %v1869 = vpop.permute.xlu0 %1868
    %1870 = vrot.lane.b32.xlu0 %v1281, 32
    %v1871 = vpop.permute.xlu0 %1870
    %1872 = vrot.lane.b32.xlu0 %v1282, 32
    %v1873 = vpop.permute.xlu0 %1872
    %1874 = vrot.lane.b32.xlu0 %v1283, 32
    %v1875 = vpop.permute.xlu0 %1874
    %1876 = vrot.lane.b32.xlu0 %v1284, 32
    %v1877 = vpop.permute.xlu0 %1876
    %1878 = vrot.lane.b32.xlu0 %v1285, 32
    %v1879 = vpop.permute.xlu0 %1878
    %1880 = vrot.lane.b32.xlu0 %v1286, 32
    %v1881 = vpop.permute.xlu0 %1880
    %1882 = vrot.lane.b32.xlu0 %v1287, 32
    %v1883 = vpop.permute.xlu0 %1882
    %1884 = vrot.lane.b32.xlu0 %v1288, 32
    %v1885 = vpop.permute.xlu0 %1884
    %1886 = vrot.lane.b32.xlu0 %v1289, 32
    %v1887 = vpop.permute.xlu0 %1886
    %1888 = vrot.lane.b32.xlu0 %v1290, 32
    %v1889 = vpop.permute.xlu0 %1888
    %1890 = vrot.lane.b32.xlu0 %v1291, 32
    %v1891 = vpop.permute.xlu0 %1890
    %1940 = vrot.lane.b32.xlu0 %v1388, 64
    %v1941 = vpop.permute.xlu0 %1940
    %1942 = vrot.lane.b32.xlu0 %v1389, 64
    %v1943 = vpop.permute.xlu0 %1942
    %1944 = vrot.lane.b32.xlu0 %v1390, 64
    %v1945 = vpop.permute.xlu0 %1944
    %1946 = vrot.lane.b32.xlu0 %v1391, 64
    %v1947 = vpop.permute.xlu0 %1946
    %1948 = vrot.lane.b32.xlu0 %v1392, 64
    %v1949 = vpop.permute.xlu0 %1948
    %1950 = vrot.lane.b32.xlu0 %v1393, 64
    %v1951 = vpop.permute.xlu0 %1950
    %1952 = vrot.lane.b32.xlu0 %v1394, 64
    %v1953 = vpop.permute.xlu0 %1952
    %1954 = vrot.lane.b32.xlu0 %v1395, 64
    %v1955 = vpop.permute.xlu0 %1954
    %1956 = vrot.lane.b32.xlu0 %v1396, 64
    %v1957 = vpop.permute.xlu0 %1956
    %1958 = vrot.lane.b32.xlu0 %v1397, 64
    %v1959 = vpop.permute.xlu0 %1958
    %1960 = vrot.lane.b32.xlu0 %v1398, 64
    %v1961 = vpop.permute.xlu0 %1960
    %1962 = vrot.lane.b32.xlu0 %v1399, 64
    %v1963 = vpop.permute.xlu0 %1962
    %1964 = vrot.lane.b32.xlu0 %v1400, 64
    %v1965 = vpop.permute.xlu0 %1964
    %1966 = vrot.lane.b32.xlu0 %v1401, 64
    %v1967 = vpop.permute.xlu0 %1966
    %1968 = vrot.lane.b32.xlu0 %v1402, 64
    %v1969 = vpop.permute.xlu0 %1968
    %1970 = vrot.lane.b32.xlu0 %v1403, 64
    %v1971 = vpop.permute.xlu0 %1970
    %1972 = vrot.lane.b32.xlu0 %v1404, 64
    %v1973 = vpop.permute.xlu0 %1972
    %1974 = vrot.lane.b32.xlu0 %v1405, 64
    %v1975 = vpop.permute.xlu0 %1974
    %1976 = vrot.lane.b32.xlu0 %v1406, 64
    %v1977 = vpop.permute.xlu0 %1976
    %1978 = vrot.lane.b32.xlu0 %v1407, 64
    %v1979 = vpop.permute.xlu0 %1978
    %1980 = vrot.lane.b32.xlu0 %v1408, 64
    %v1981 = vpop.permute.xlu0 %1980
    %1982 = vrot.lane.b32.xlu0 %v1409, 64
    %v1983 = vpop.permute.xlu0 %1982
    %1984 = vrot.lane.b32.xlu0 %v1410, 64
    %v1985 = vpop.permute.xlu0 %1984
    %1986 = vrot.lane.b32.xlu0 %v1411, 64
    %v1987 = vpop.permute.xlu0 %1986
    %2036 = vrot.lane.b32.xlu0 %v1508, 96
    %v2037 = vpop.permute.xlu0 %2036
    %2038 = vrot.lane.b32.xlu0 %v1509, 96
    %v2039 = vpop.permute.xlu0 %2038
    %2040 = vrot.lane.b32.xlu0 %v1510, 96
    %v2041 = vpop.permute.xlu0 %2040
    %2042 = vrot.lane.b32.xlu0 %v1511, 96
    %v2043 = vpop.permute.xlu0 %2042
    %2044 = vrot.lane.b32.xlu0 %v1512, 96
    %v2045 = vpop.permute.xlu0 %2044
    %2046 = vrot.lane.b32.xlu0 %v1513, 96
    %v2047 = vpop.permute.xlu0 %2046
    %2048 = vrot.lane.b32.xlu0 %v1514, 96
    %v2049 = vpop.permute.xlu0 %2048
    %2050 = vrot.lane.b32.xlu0 %v1515, 96
    %v2051 = vpop.permute.xlu0 %2050
    %2052 = vrot.lane.b32.xlu0 %v1516, 96
    %v2053 = vpop.permute.xlu0 %2052
    %2054 = vrot.lane.b32.xlu0 %v1517, 96
    %v2055 = vpop.permute.xlu0 %2054
    %2056 = vrot.lane.b32.xlu0 %v1518, 96
    %v2057 = vpop.permute.xlu0 %2056
    %2058 = vrot.lane.b32.xlu0 %v1519, 96
    %v2059 = vpop.permute.xlu0 %2058
    %2060 = vrot.lane.b32.xlu0 %v1520, 96
    %v2061 = vpop.permute.xlu0 %2060
    %2062 = vrot.lane.b32.xlu0 %v1521, 96
    %v2063 = vpop.permute.xlu0 %2062
    %2064 = vrot.lane.b32.xlu0 %v1522, 96
    %v2065 = vpop.permute.xlu0 %2064
    %2066 = vrot.lane.b32.xlu0 %v1523, 96
    %v2067 = vpop.permute.xlu0 %2066
    %2068 = vrot.lane.b32.xlu0 %v1524, 96
    %v2069 = vpop.permute.xlu0 %2068
    %2070 = vrot.lane.b32.xlu0 %v1525, 96
    %v2071 = vpop.permute.xlu0 %2070
    %2072 = vrot.lane.b32.xlu0 %v1526, 96
    %v2073 = vpop.permute.xlu0 %2072
    %2074 = vrot.lane.b32.xlu0 %v1527, 96
    %v2075 = vpop.permute.xlu0 %2074
    %2076 = vrot.lane.b32.xlu0 %v1528, 96
    %v2077 = vpop.permute.xlu0 %2076
    %2078 = vrot.lane.b32.xlu0 %v1529, 96
    %v2079 = vpop.permute.xlu0 %2078
    %2080 = vrot.lane.b32.xlu0 %v1530, 96
    %v2081 = vpop.permute.xlu0 %2080
    %2082 = vrot.lane.b32.xlu0 %v1531, 96
    %v2083 = vpop.permute.xlu0 %2082
    %v2108 = vsel %vm490, %v668, %v1557
    %v2109 = vsel %vm490, %v669, %v1559
    %v2110 = vsel %vm490, %v670, %v1561
    %v2111 = vsel %vm490, %v671, %v1563
    %v2112 = vsel %vm490, %v672, %v1565
    %v2113 = vsel %vm490, %v673, %v1567
    %v2114 = vsel %vm490, %v674, %v1569
    %v2115 = vsel %vm490, %v675, %v1571
    %v2116 = vsel %vm490, %v676, %v1573
    %v2117 = vsel %vm490, %v677, %v1575
    %v2118 = vsel %vm490, %v678, %v1577
    %v2119 = vsel %vm490, %v679, %v1579
    %v2120 = vsel %vm490, %v680, %v1581
    %v2121 = vsel %vm490, %v681, %v1583
    %v2122 = vsel %vm490, %v682, %v1585
    %v2123 = vsel %vm490, %v683, %v1587
    %v2124 = vsel %vm490, %v684, %v1589
    %v2125 = vsel %vm490, %v685, %v1591
    %v2126 = vsel %vm490, %v686, %v1593
    %v2127 = vsel %vm490, %v687, %v1595
    %v2128 = vsel %vm490, %v688, %v1597
    %v2129 = vsel %vm490, %v689, %v1599
    %v2130 = vsel %vm490, %v690, %v1601
    %v2131 = vsel %vm490, %v691, %v1603
    %vm2132 = vcmask 523264
    %v2133 = vsel %vm2132, %v2108, %v1653
    %v2134 = vsel %vm2132, %v2109, %v1655
    %v2135 = vsel %vm2132, %v2110, %v1657
    %v2136 = vsel %vm2132, %v2111, %v1659
    %v2137 = vsel %vm2132, %v2112, %v1661
    %v2138 = vsel %vm2132, %v2113, %v1663
    %v2139 = vsel %vm2132, %v2114, %v1665
    %v2140 = vsel %vm2132, %v2115, %v1667
    %v2141 = vsel %vm2132, %v2116, %v1669
    %v2142 = vsel %vm2132, %v2117, %v1671
    %v2143 = vsel %vm2132, %v2118, %v1673
    %v2144 = vsel %vm2132, %v2119, %v1675
    %v2145 = vsel %vm2132, %v2120, %v1677
    %v2146 = vsel %vm2132, %v2121, %v1679
    %v2147 = vsel %vm2132, %v2122, %v1681
    %v2148 = vsel %vm2132, %v2123, %v1683
    %v2149 = vsel %vm2132, %v2124, %v1685
    %v2150 = vsel %vm2132, %v2125, %v1687
    %v2151 = vsel %vm2132, %v2126, %v1689
    %v2152 = vsel %vm2132, %v2127, %v1691
    %v2153 = vsel %vm2132, %v2128, %v1693
    %v2154 = vsel %vm2132, %v2129, %v1695
    %v2155 = vsel %vm2132, %v2130, %v1697
    %v2156 = vsel %vm2132, %v2131, %v1699
    %vm2157 = vcmask 785408
    %v2158 = vsel %vm2157, %v2133, %v1749
    %v2159 = vsel %vm2157, %v2134, %v1751
    %v2160 = vsel %vm2157, %v2135, %v1753
    %v2161 = vsel %vm2157, %v2136, %v1755
    %v2162 = vsel %vm2157, %v2137, %v1757
    %v2163 = vsel %vm2157, %v2138, %v1759
    %v2164 = vsel %vm2157, %v2139, %v1761
    %v2165 = vsel %vm2157, %v2140, %v1763
    %v2166 = vsel %vm2157, %v2141, %v1765
    %v2167 = vsel %vm2157, %v2142, %v1767
    %v2168 = vsel %vm2157, %v2143, %v1769
    %v2169 = vsel %vm2157, %v2144, %v1771
    %v2170 = vsel %vm2157, %v2145, %v1773
    %v2171 = vsel %vm2157, %v2146, %v1775
    %v2172 = vsel %vm2157, %v2147, %v1777
    %v2173 = vsel %vm2157, %v2148, %v1779
    %v2174 = vsel %vm2157, %v2149, %v1781
    %v2175 = vsel %vm2157, %v2150, %v1783
    %v2176 = vsel %vm2157, %v2151, %v1785
    %v2177 = vsel %vm2157, %v2152, %v1787
    %v2178 = vsel %vm2157, %v2153, %v1789
    %v2179 = vsel %vm2157, %v2154, %v1791
    %v2180 = vsel %vm2157, %v2155, %v1793
    %v2181 = vsel %vm2157, %v2156, %v1795
    %v2182 = vsel %vm490, %v1148, %v1845
    %v2183 = vsel %vm490, %v1149, %v1847
    %v2184 = vsel %vm490, %v1150, %v1849
    %v2185 = vsel %vm490, %v1151, %v1851
    %v2186 = vsel %vm490, %v1152, %v1853
    %v2187 = vsel %vm490, %v1153, %v1855
    %v2188 = vsel %vm490, %v1154, %v1857
    %v2189 = vsel %vm490, %v1155, %v1859
    %v2190 = vsel %vm490, %v1156, %v1861
    %v2191 = vsel %vm490, %v1157, %v1863
    %v2192 = vsel %vm490, %v1158, %v1865
    %v2193 = vsel %vm490, %v1159, %v1867
    %v2194 = vsel %vm490, %v1160, %v1869
    %v2195 = vsel %vm490, %v1161, %v1871
    %v2196 = vsel %vm490, %v1162, %v1873
    %v2197 = vsel %vm490, %v1163, %v1875
    %v2198 = vsel %vm490, %v1164, %v1877
    %v2199 = vsel %vm490, %v1165, %v1879
    %v2200 = vsel %vm490, %v1166, %v1881
    %v2201 = vsel %vm490, %v1167, %v1883
    %v2202 = vsel %vm490, %v1168, %v1885
    %v2203 = vsel %vm490, %v1169, %v1887
    %v2204 = vsel %vm490, %v1170, %v1889
    %v2205 = vsel %vm490, %v1171, %v1891
    %v2206 = vsel %vm2132, %v2182, %v1941
    %v2207 = vsel %vm2132, %v2183, %v1943
    %v2208 = vsel %vm2132, %v2184, %v1945
    %v2209 = vsel %vm2132, %v2185, %v1947
    %v2210 = vsel %vm2132, %v2186, %v1949
    %v2211 = vsel %vm2132, %v2187, %v1951
    %v2212 = vsel %vm2132, %v2188, %v1953
    %v2213 = vsel %vm2132, %v2189, %v1955
    %v2214 = vsel %vm2132, %v2190, %v1957
    %v2215 = vsel %vm2132, %v2191, %v1959
    %v2216 = vsel %vm2132, %v2192, %v1961
    %v2217 = vsel %vm2132, %v2193, %v1963
    %v2218 = vsel %vm2132, %v2194, %v1965
    %v2219 = vsel %vm2132, %v2195, %v1967
    %v2220 = vsel %vm2132, %v2196, %v1969
    %v2221 = vsel %vm2132, %v2197, %v1971
    %v2222 = vsel %vm2132, %v2198, %v1973
    %v2223 = vsel %vm2132, %v2199, %v1975
    %v2224 = vsel %vm2132, %v2200, %v1977
    %v2225 = vsel %vm2132, %v2201, %v1979
    %v2226 = vsel %vm2132, %v2202, %v1981
    %v2227 = vsel %vm2132, %v2203, %v1983
    %v2228 = vsel %vm2132, %v2204, %v1985
    %v2229 = vsel %vm2132, %v2205, %v1987
    %v2230 = vsel %vm2157, %v2206, %v2037
    %v2231 = vsel %vm2157, %v2207, %v2039
    %v2232 = vsel %vm2157, %v2208, %v2041
    %v2233 = vsel %vm2157, %v2209, %v2043
    %v2234 = vsel %vm2157, %v2210, %v2045
    %v2235 = vsel %vm2157, %v2211, %v2047
    %v2236 = vsel %vm2157, %v2212, %v2049
    %v2237 = vsel %vm2157, %v2213, %v2051
    %v2238 = vsel %vm2157, %v2214, %v2053
    %v2239 = vsel %vm2157, %v2215, %v2055
    %v2240 = vsel %vm2157, %v2216, %v2057
    %v2241 = vsel %vm2157, %v2217, %v2059
    %v2242 = vsel %vm2157, %v2218, %v2061
    %v2243 = vsel %vm2157, %v2219, %v2063
    %v2244 = vsel %vm2157, %v2220, %v2065
    %v2245 = vsel %vm2157, %v2221, %v2067
    %v2246 = vsel %vm2157, %v2222, %v2069
    %v2247 = vsel %vm2157, %v2223, %v2071
    %v2248 = vsel %vm2157, %v2224, %v2073
    %v2249 = vsel %vm2157, %v2225, %v2075
    %v2250 = vsel %vm2157, %v2226, %v2077
    %v2251 = vsel %vm2157, %v2227, %v2079
    %v2252 = vsel %vm2157, %v2228, %v2081
    %v2253 = vsel %vm2157, %v2229, %v2083
    %v2254 = vpack.c.bf16 %v2159, %v2158
    %v2255 = vpack.c.bf16 %v2231, %v2230
    %v2256 = vpack.c.bf16 %v2161, %v2160
    %v2257 = vpack.c.bf16 %v2233, %v2232
    %v2258 = vpack.c.bf16 %v2163, %v2162
    %v2259 = vpack.c.bf16 %v2235, %v2234
    %v2260 = vpack.c.bf16 %v2165, %v2164
    %v2261 = vpack.c.bf16 %v2237, %v2236
    %v2262 = vpack.c.bf16 %v2167, %v2166
    %v2263 = vpack.c.bf16 %v2239, %v2238
    %v2264 = vpack.c.bf16 %v2169, %v2168
    %v2265 = vpack.c.bf16 %v2241, %v2240
    %v2266 = vpack.c.bf16 %v2171, %v2170
    %v2267 = vpack.c.bf16 %v2243, %v2242
    %v2268 = vpack.c.bf16 %v2173, %v2172
    %v2269 = vpack.c.bf16 %v2245, %v2244
    %v2270 = vpack.c.bf16 %v2175, %v2174
    %v2271 = vpack.c.bf16 %v2247, %v2246
    %v2272 = vpack.c.bf16 %v2177, %v2176
    %v2273 = vpack.c.bf16 %v2249, %v2248
    %v2274 = vpack.c.bf16 %v2179, %v2178
    %v2275 = vpack.c.bf16 %v2251, %v2250
    %v2276 = vpack.c.bf16 %v2181, %v2180
    %v2277 = vpack.c.bf16 %v2253, %v2252
    %v2278 = vld [vmem:[%s4] sm:$0xf]
    %v2279 = vld [vmem:[%s4 + $0x4] sm:$0xf]
    %v2280 = vld [vmem:[%s4 + $0x8] sm:$0xf]
    %v2281 = vld [vmem:[%s4 + $0xc] sm:$0xf]
    %v2282 = vld [vmem:[%s4 + $0x10] sm:$0xf]
    %v2283 = vld [vmem:[%s4 + $0x14] sm:$0xf]
    %v2284 = vld [vmem:[%s4 + $0x18] sm:$0xf]
    %v2285 = vld [vmem:[%s4 + $0x1c] sm:$0xf]
    %v2286 = vld [vmem:[%s4 + $0x20] sm:$0xf]
    %v2287 = vld [vmem:[%s4 + $0x24] sm:$0xf]
    %v2288 = vld [vmem:[%s4 + $0x28] sm:$0xf]
    %v2289 = vld [vmem:[%s4 + $0x2c] sm:$0xf]
    %v2290 = vld [vmem:[%s4 + $0x30] sm:$0xf]
    %v2291 = vld [vmem:[%s4 + $0x34] sm:$0xf]
    %v2292 = vld [vmem:[%s4 + $0x38] sm:$0xf]
    %v2293 = vld [vmem:[%s4 + $0x3c] sm:$0xf]
    %v2294 = vld [vmem:[%s4 + $0x40] sm:$0xf]
    %v2295 = vld [vmem:[%s4 + $0x44] sm:$0xf]
    %v2296 = vld [vmem:[%s4 + $0x48] sm:$0xf]
    %v2297 = vld [vmem:[%s4 + $0x4c] sm:$0xf]
    %v2298 = vld [vmem:[%s4 + $0x50] sm:$0xf]
    %v2299 = vld [vmem:[%s4 + $0x54] sm:$0xf]
    %v2300 = vld [vmem:[%s4 + $0x58] sm:$0xf]
    %v2301 = vld [vmem:[%s4 + $0x5c] sm:$0xf]
    %v2302 = vld [vmem:[%s4 + $0x60] sm:$0xf]
    %v2303 = vld [vmem:[%s4 + $0x64] sm:$0xf]
    %v2304 = vld [vmem:[%s4 + $0x68] sm:$0xf]
    %v2305 = vld [vmem:[%s4 + $0x6c] sm:$0xf]
    %v2306 = vld [vmem:[%s4 + $0x70] sm:$0xf]
    %v2307 = vld [vmem:[%s4 + $0x74] sm:$0xf]
    %v2308 = vld [vmem:[%s4 + $0x78] sm:$0xf]
    %v2309 = vld [vmem:[%s4 + $0x7c] sm:$0xf]
    %v2342 = vunpack.c.l.b16 %v2278
    %v2343 = vunpack.c.l.b16 %v2279
    %v2344 = vunpack.c.l.b16 %v2280
    %v2345 = vunpack.c.l.b16 %v2281
    %v2346 = vunpack.c.l.b16 %v2282
    %v2347 = vunpack.c.l.b16 %v2283
    %v2348 = vunpack.c.l.b16 %v2284
    %v2349 = vunpack.c.l.b16 %v2285
    %v2350 = vunpack.c.l.b16 %v2286
    %v2351 = vunpack.c.l.b16 %v2287
    %v2352 = vunpack.c.l.b16 %v2288
    %v2353 = vunpack.c.l.b16 %v2289
    %v2354 = vunpack.c.l.b16 %v2290
    %v2355 = vunpack.c.l.b16 %v2291
    %v2356 = vunpack.c.l.b16 %v2292
    %v2357 = vunpack.c.l.b16 %v2293
    %v2358 = vunpack.c.l.b16 %v2294
    %v2359 = vunpack.c.l.b16 %v2295
    %v2360 = vunpack.c.l.b16 %v2296
    %v2361 = vunpack.c.l.b16 %v2297
    %v2362 = vunpack.c.l.b16 %v2298
    %v2363 = vunpack.c.l.b16 %v2299
    %v2364 = vunpack.c.l.b16 %v2300
    %v2365 = vunpack.c.l.b16 %v2301
    %v2366 = vunpack.c.l.b16 %v2302
    %v2367 = vunpack.c.l.b16 %v2303
    %v2368 = vunpack.c.l.b16 %v2304
    %v2369 = vunpack.c.l.b16 %v2305
    %v2370 = vunpack.c.l.b16 %v2306
    %v2371 = vunpack.c.l.b16 %v2307
    %v2372 = vunpack.c.l.b16 %v2308
    %v2373 = vunpack.c.l.b16 %v2309
    %v2374 = vpack.c.b16 %v2343, %v2342
    %v2375 = vpack.c.b16 %v2345, %v2344
    %v2376 = vpack.c.b16 %v2347, %v2346
    %v2377 = vpack.c.b16 %v2349, %v2348
    %v2378 = vpack.c.b16 %v2351, %v2350
    %v2379 = vpack.c.b16 %v2353, %v2352
    %v2380 = vpack.c.b16 %v2355, %v2354
    %v2381 = vpack.c.b16 %v2357, %v2356
    %v2382 = vpack.c.b16 %v2359, %v2358
    %v2383 = vpack.c.b16 %v2361, %v2360
    %v2384 = vpack.c.b16 %v2363, %v2362
    %v2385 = vpack.c.b16 %v2365, %v2364
    %v2386 = vpack.c.b16 %v2367, %v2366
    %v2387 = vpack.c.b16 %v2369, %v2368
    %v2388 = vpack.c.b16 %v2371, %v2370
    %v2389 = vpack.c.b16 %v2373, %v2372
    %2406 = vmatprep.subr.bf16.mxu0 0
    %2407 = vmatpush1.bf16.msra.mxu0 %v2381
    %2408 = vmatprep.subr.bf16.mxu0 0
    %2409 = vmatpush1.bf16.msra.mxu0 %v2380
    %2410 = vmatprep.subr.bf16.mxu0 0
    %2411 = vmatpush1.bf16.msra.mxu0 %v2379
    %2412 = vmatprep.subr.bf16.mxu0 0
    %2413 = vmatpush1.bf16.msra.mxu0 %v2378
    %2414 = vmatprep.subr.bf16.mxu0 0
    %2415 = vmatpush1.bf16.msra.mxu0 %v2377
    %2416 = vmatprep.subr.bf16.mxu0 0
    %2417 = vmatpush1.bf16.msra.mxu0 %v2376
    %2418 = vmatprep.subr.bf16.mxu0 0
    %2419 = vmatpush1.bf16.msra.mxu0 %v2375
    %2420 = vmatprep.subr.bf16.mxu0 0
    %2421 = vmatpush1.bf16.msra.mxu0 %v2374
    %2422 = vmatprep.subr.bf16.mxu0 0
    %2423 = vmatpush2.bf16.msra.mxu0 %v2389
    %2424 = vmatprep.subr.bf16.mxu0 0
    %2425 = vmatpush2.bf16.msra.mxu0 %v2388
    %2426 = vmatprep.subr.bf16.mxu0 0
    %2427 = vmatpush2.bf16.msra.mxu0 %v2387
    %2428 = vmatprep.subr.bf16.mxu0 0
    %2429 = vmatpush2.bf16.msra.mxu0 %v2386
    %2430 = vmatprep.subr.bf16.mxu0 0
    %2431 = vmatpush2.bf16.msra.mxu0 %v2385
    %2432 = vmatprep.subr.bf16.mxu0 0
    %2433 = vmatpush2.bf16.msra.mxu0 %v2384
    %2434 = vmatprep.subr.bf16.mxu0 0
    %2435 = vmatpush2.bf16.msra.mxu0 %v2383
    %2436 = vmatprep.subr.bf16.mxu0 0
    %2437 = vmatpush2.bf16.msra.mxu0 %v2382
    %2438 = vmatprep.mubr.bf16.mxu0 %v2255
    %2439 = vmatmul.mubr.bf16.gmra.mxu0 %v2254
    %v2440 = vpop.f32.mrf.mxu0
    %v2441 = vadd.f32 0.0, %v2440
    %v2442 = vpop.f32.mrf.mxu0
    %v2443 = vpop.f32.mrf.mxu0
    %v2444 = vadd.f32 0.0, %v2443
    %v2445 = vpop.f32.mrf.mxu0
    %2446 = vmatprep.mubr.bf16.mxu0 %v2257
    %2447 = vmatmul.mubr.bf16.gmra.mxu0 %v2256
    %v2448 = vpop.f32.mrf.mxu0
    %v2449 = vadd.f32 0.0, %v2448
    %v2450 = vpop.f32.mrf.mxu0
    %v2451 = vpop.f32.mrf.mxu0
    %v2452 = vadd.f32 0.0, %v2451
    %v2453 = vpop.f32.mrf.mxu0
    %2454 = vmatprep.mubr.bf16.mxu0 %v2259
    %2455 = vmatmul.mubr.bf16.gmra.mxu0 %v2258
    %v2456 = vpop.f32.mrf.mxu0
    %v2457 = vadd.f32 0.0, %v2456
    %v2458 = vpop.f32.mrf.mxu0
    %v2459 = vpop.f32.mrf.mxu0
    %v2460 = vadd.f32 0.0, %v2459
    %v2461 = vpop.f32.mrf.mxu0
    %2462 = vmatprep.mubr.bf16.mxu0 %v2261
    %2463 = vmatmul.mubr.bf16.gmra.mxu0 %v2260
    %v2464 = vpop.f32.mrf.mxu0
    %v2465 = vadd.f32 0.0, %v2464
    %v2466 = vpop.f32.mrf.mxu0
    %v2467 = vpop.f32.mrf.mxu0
    %v2468 = vadd.f32 0.0, %v2467
    %v2469 = vpop.f32.mrf.mxu0
    %2470 = vmatprep.mubr.bf16.mxu0 %v2263
    %2471 = vmatmul.mubr.bf16.gmra.mxu0 %v2262
    %v2472 = vpop.f32.mrf.mxu0
    %v2473 = vadd.f32 0.0, %v2472
    %v2474 = vpop.f32.mrf.mxu0
    %v2475 = vpop.f32.mrf.mxu0
    %v2476 = vadd.f32 0.0, %v2475
    %v2477 = vpop.f32.mrf.mxu0
    %2478 = vmatprep.mubr.bf16.mxu0 %v2265
    %2479 = vmatmul.mubr.bf16.gmra.mxu0 %v2264
    %v2480 = vpop.f32.mrf.mxu0
    %v2481 = vadd.f32 0.0, %v2480
    %v2482 = vpop.f32.mrf.mxu0
    %v2483 = vpop.f32.mrf.mxu0
    %v2484 = vadd.f32 0.0, %v2483
    %v2485 = vpop.f32.mrf.mxu0
    %2486 = vmatprep.mubr.bf16.mxu0 %v2267
    %2487 = vmatmul.mubr.bf16.gmra.mxu0 %v2266
    %v2488 = vpop.f32.mrf.mxu0
    %v2489 = vadd.f32 0.0, %v2488
    %v2490 = vpop.f32.mrf.mxu0
    %v2491 = vpop.f32.mrf.mxu0
    %v2492 = vadd.f32 0.0, %v2491
    %v2493 = vpop.f32.mrf.mxu0
    %2494 = vmatprep.mubr.bf16.mxu0 %v2269
    %2495 = vmatmul.mubr.bf16.gmra.mxu0 %v2268
    %v2496 = vpop.f32.mrf.mxu0
    %v2497 = vadd.f32 0.0, %v2496
    %v2498 = vpop.f32.mrf.mxu0
    %v2499 = vpop.f32.mrf.mxu0
    %v2500 = vadd.f32 0.0, %v2499
    %v2501 = vpop.f32.mrf.mxu0
    %2502 = vmatprep.mubr.bf16.mxu0 %v2271
    %2503 = vmatmul.mubr.bf16.gmra.mxu0 %v2270
    %v2504 = vpop.f32.mrf.mxu0
    %v2505 = vadd.f32 0.0, %v2504
    %v2506 = vpop.f32.mrf.mxu0
    %v2507 = vpop.f32.mrf.mxu0
    %v2508 = vadd.f32 0.0, %v2507
    %v2509 = vpop.f32.mrf.mxu0
    %2510 = vmatprep.mubr.bf16.mxu0 %v2273
    %2511 = vmatmul.mubr.bf16.gmra.mxu0 %v2272
    %v2512 = vpop.f32.mrf.mxu0
    %v2513 = vadd.f32 0.0, %v2512
    %v2514 = vpop.f32.mrf.mxu0
    %v2515 = vpop.f32.mrf.mxu0
    %v2516 = vadd.f32 0.0, %v2515
    %v2517 = vpop.f32.mrf.mxu0
    %2518 = vmatprep.mubr.bf16.mxu0 %v2275
    %2519 = vmatmul.mubr.bf16.gmra.mxu0 %v2274
    %v2520 = vpop.f32.mrf.mxu0
    %v2521 = vadd.f32 0.0, %v2520
    %v2522 = vpop.f32.mrf.mxu0
    %v2523 = vpop.f32.mrf.mxu0
    %v2524 = vadd.f32 0.0, %v2523
    %v2525 = vpop.f32.mrf.mxu0
    %2526 = vmatprep.mubr.bf16.mxu0 %v2277
    %2527 = vmatmul.mubr.bf16.gmra.mxu0 %v2276
    %v2528 = vpop.f32.mrf.mxu0
    %v2529 = vadd.f32 0.0, %v2528
    %v2530 = vpop.f32.mrf.mxu0
    %v2531 = vpop.f32.mrf.mxu0
    %v2532 = vadd.f32 0.0, %v2531
    %v2533 = vpop.f32.mrf.mxu0
    %2534 = vdwg.mxu0
    %v2535 = vld [vmem:[%s5] sm:$0x1]
    %v2537 = vlaneseq
    %v2538 = vshrl.u32 %v2537, 7
    %v2539 = vsub.s32 0, %v2538
    %v2540 = vrot.slane %v2535, %v2539
    %v2542 = vmul.f32 %v2441, %v2540
    %v2543 = vmul.f32 %v2444, %v2540
    %v2544 = vmul.f32 %v2449, %v2540
    %v2545 = vmul.f32 %v2452, %v2540
    %v2546 = vmul.f32 %v2457, %v2540
    %v2547 = vmul.f32 %v2460, %v2540
    %v2548 = vmul.f32 %v2465, %v2540
    %v2549 = vmul.f32 %v2468, %v2540
    %v2550 = vmul.f32 %v2473, %v2540
    %v2551 = vmul.f32 %v2476, %v2540
    %v2552 = vmul.f32 %v2481, %v2540
    %v2553 = vmul.f32 %v2484, %v2540
    %v2554 = vmul.f32 %v2489, %v2540
    %v2555 = vmul.f32 %v2492, %v2540
    %v2556 = vmul.f32 %v2497, %v2540
    %v2557 = vmul.f32 %v2500, %v2540
    %v2558 = vmul.f32 %v2505, %v2540
    %v2559 = vmul.f32 %v2508, %v2540
    %v2560 = vmul.f32 %v2513, %v2540
    %v2561 = vmul.f32 %v2516, %v2540
    %v2562 = vmul.f32 %v2521, %v2540
    %v2563 = vmul.f32 %v2524, %v2540
    %v2564 = vmul.f32 %v2529, %v2540
    %v2565 = vmul.f32 %v2532, %v2540
    %v2566 = vld [vmem:[%s6] sm:$0x1]
    %v2568 = vlaneseq
    %v2569 = vshrl.u32 %v2568, 7
    %v2570 = vsub.s32 0, %v2569
    %v2571 = vrot.slane %v2566, %v2570
    %v2573 = vadd.f32 %v2542, %v2571
    %v2574 = vadd.f32 %v2543, %v2571
    %v2575 = vadd.f32 %v2544, %v2571
    %v2576 = vadd.f32 %v2545, %v2571
    %v2577 = vadd.f32 %v2546, %v2571
    %v2578 = vadd.f32 %v2547, %v2571
    %v2579 = vadd.f32 %v2548, %v2571
    %v2580 = vadd.f32 %v2549, %v2571
    %v2581 = vadd.f32 %v2550, %v2571
    %v2582 = vadd.f32 %v2551, %v2571
    %v2583 = vadd.f32 %v2552, %v2571
    %v2584 = vadd.f32 %v2553, %v2571
    %v2585 = vadd.f32 %v2554, %v2571
    %v2586 = vadd.f32 %v2555, %v2571
    %v2587 = vadd.f32 %v2556, %v2571
    %v2588 = vadd.f32 %v2557, %v2571
    %v2589 = vadd.f32 %v2558, %v2571
    %v2590 = vadd.f32 %v2559, %v2571
    %v2591 = vadd.f32 %v2560, %v2571
    %v2592 = vadd.f32 %v2561, %v2571
    %v2593 = vadd.f32 %v2562, %v2571
    %v2594 = vadd.f32 %v2563, %v2571
    %v2595 = vadd.f32 %v2564, %v2571
    %v2596 = vadd.f32 %v2565, %v2571
    %v2597 = vmax.f32 %v2573, 0.0
    %v2598 = vmax.f32 %v2574, 0.0
    %v2599 = vmax.f32 %v2575, 0.0
    %v2600 = vmax.f32 %v2576, 0.0
    %v2601 = vmax.f32 %v2577, 0.0
    %v2602 = vmax.f32 %v2578, 0.0
    %v2603 = vmax.f32 %v2579, 0.0
    %v2604 = vmax.f32 %v2580, 0.0
    %v2605 = vmax.f32 %v2581, 0.0
    %v2606 = vmax.f32 %v2582, 0.0
    %v2607 = vmax.f32 %v2583, 0.0
    %v2608 = vmax.f32 %v2584, 0.0
    %v2609 = vmax.f32 %v2585, 0.0
    %v2610 = vmax.f32 %v2586, 0.0
    %v2611 = vmax.f32 %v2587, 0.0
    %v2612 = vmax.f32 %v2588, 0.0
    %v2613 = vmax.f32 %v2589, 0.0
    %v2614 = vmax.f32 %v2590, 0.0
    %v2615 = vmax.f32 %v2591, 0.0
    %v2616 = vmax.f32 %v2592, 0.0
    %v2617 = vmax.f32 %v2593, 0.0
    %v2618 = vmax.f32 %v2594, 0.0
    %v2619 = vmax.f32 %v2595, 0.0
    %v2620 = vmax.f32 %v2596, 0.0
    %2621 = vst.msk [vmem:[#allocation3] sm:$0xff] %vm2132, 0.0
    %vm2622 = vcmask 516096
    %2623 = vst.msk [vmem:[#allocation3 + $0x8] sm:$0x1] %vm2622, 0.0
    %2624 = vst.msk [vmem:[#allocation3 + $0x30] sm:$0xff] %vm2132, 0.0
    %2625 = vst.msk [vmem:[#allocation3 + $0x38] sm:$0x1] %vm2622, 0.0
    %2626 = vst.msk [vmem:[#allocation3 + $0x60] sm:$0xff] %vm2132, 0.0
    %2627 = vst.msk [vmem:[#allocation3 + $0x68] sm:$0x1] %vm2622, 0.0
    %2628 = vst.msk [vmem:[#allocation3 + $0x90] sm:$0xff] %vm2132, 0.0
    %2629 = vst.msk [vmem:[#allocation3 + $0x98] sm:$0x1] %vm2622, 0.0
    %2630 = vst.msk [vmem:[#allocation3 + $0xc0] sm:$0xff] %vm2132, 0.0
    %2631 = vst.msk [vmem:[#allocation3 + $0xc8] sm:$0x1] %vm2622, 0.0
    %2632 = vst.msk [vmem:[#allocation3 + $0xf0] sm:$0xff] %vm2132, 0.0
    %2633 = vst.msk [vmem:[#allocation3 + $0xf8] sm:$0x1] %vm2622, 0.0
    %2634 = vst.msk [vmem:[#allocation3 + $0x120] sm:$0xff] %vm2132, 0.0
    %2635 = vst.msk [vmem:[#allocation3 + $0x128] sm:$0x1] %vm2622, 0.0
    %2636 = vst.msk [vmem:[#allocation3 + $0x150] sm:$0xff] %vm2132, 0.0
    %2637 = vst.msk [vmem:[#allocation3 + $0x158] sm:$0x1] %vm2622, 0.0
    %2638 = vst.msk [vmem:[#allocation3 + $0x9] sm:$0xff] %vm2132, %v2597
    %2639 = vst.msk [vmem:[#allocation3 + $0x11] sm:$0xff] %vm2132, %v2598
    %vm2640 = vcmask 517120
    %2641 = vst.msk [vmem:[#allocation3 + $0x19] sm:$0x3] %vm2640, %v2599
    %2642 = vst.msk [vmem:[#allocation3 + $0x39] sm:$0xff] %vm2132, %v2600
    %2643 = vst.msk [vmem:[#allocation3 + $0x41] sm:$0xff] %vm2132, %v2601
    %2644 = vst.msk [vmem:[#allocation3 + $0x49] sm:$0x3] %vm2640, %v2602
    %2645 = vst.msk [vmem:[#allocation3 + $0x69] sm:$0xff] %vm2132, %v2603
    %2646 = vst.msk [vmem:[#allocation3 + $0x71] sm:$0xff] %vm2132, %v2604
    %2647 = vst.msk [vmem:[#allocation3 + $0x79] sm:$0x3] %vm2640, %v2605
    %2648 = vst.msk [vmem:[#allocation3 + $0x99] sm:$0xff] %vm2132, %v2606
    %2649 = vst.msk [vmem:[#allocation3 + $0xa1] sm:$0xff] %vm2132, %v2607
    %2650 = vst.msk [vmem:[#allocation3 + $0xa9] sm:$0x3] %vm2640, %v2608
    %2651 = vst.msk [vmem:[#allocation3 + $0xc9] sm:$0xff] %vm2132, %v2609
    %2652 = vst.msk [vmem:[#allocation3 + $0xd1] sm:$0xff] %vm2132, %v2610
    %2653 = vst.msk [vmem:[#allocation3 + $0xd9] sm:$0x3] %vm2640, %v2611
    %2654 = vst.msk [vmem:[#allocation3 + $0xf9] sm:$0xff] %vm2132, %v2612
    %2655 = vst.msk [vmem:[#allocation3 + $0x101] sm:$0xff] %vm2132, %v2613
    %2656 = vst.msk [vmem:[#allocation3 + $0x109] sm:$0x3] %vm2640, %v2614
    %2657 = vst.msk [vmem:[#allocation3 + $0x129] sm:$0xff] %vm2132, %v2615
    %2658 = vst.msk [vmem:[#allocation3 + $0x131] sm:$0xff] %vm2132, %v2616
    %2659 = vst.msk [vmem:[#allocation3 + $0x139] sm:$0x3] %vm2640, %v2617
    %2660 = vst.msk [vmem:[#allocation3 + $0x159] sm:$0xff] %vm2132, %v2618
    %2661 = vst.msk [vmem:[#allocation3 + $0x161] sm:$0xff] %vm2132, %v2619
    %2662 = vst.msk [vmem:[#allocation3 + $0x169] sm:$0x3] %vm2640, %v2620
    %2663 = vst.msk [vmem:[#allocation3 + $0x1b] sm:$0xff] %vm2132, 0.0
    %2664 = vst.msk [vmem:[#allocation3 + $0x23] sm:$0xff] %vm2132, 0.0
    %vm2665 = vcmask 518144
    %2666 = vst.msk [vmem:[#allocation3 + $0x2b] sm:$0x7] %vm2665, 0.0
    %2667 = vst.msk [vmem:[#allocation3 + $0x4b] sm:$0xff] %vm2132, 0.0
    %2668 = vst.msk [vmem:[#allocation3 + $0x53] sm:$0xff] %vm2132, 0.0
    %2669 = vst.msk [vmem:[#allocation3 + $0x5b] sm:$0x7] %vm2665, 0.0
    %2670 = vst.msk [vmem:[#allocation3 + $0x7b] sm:$0xff] %vm2132, 0.0
    %2671 = vst.msk [vmem:[#allocation3 + $0x83] sm:$0xff] %vm2132, 0.0
    %2672 = vst.msk [vmem:[#allocation3 + $0x8b] sm:$0x7] %vm2665, 0.0
    %2673 = vst.msk [vmem:[#allocation3 + $0xab] sm:$0xff] %vm2132, 0.0
    %2674 = vst.msk [vmem:[#allocation3 + $0xb3] sm:$0xff] %vm2132, 0.0
    %2675 = vst.msk [vmem:[#allocation3 + $0xbb] sm:$0x7] %vm2665, 0.0
    %2676 = vst.msk [vmem:[#allocation3 + $0xdb] sm:$0xff] %vm2132, 0.0
    %2677 = vst.msk [vmem:[#allocation3 + $0xe3] sm:$0xff] %vm2132, 0.0
    %2678 = vst.msk [vmem:[#allocation3 + $0xeb] sm:$0x7] %vm2665, 0.0
    %2679 = vst.msk [vmem:[#allocation3 + $0x10b] sm:$0xff] %vm2132, 0.0
    %2680 = vst.msk [vmem:[#allocation3 + $0x113] sm:$0xff] %vm2132, 0.0
    %2681 = vst.msk [vmem:[#allocation3 + $0x11b] sm:$0x7] %vm2665, 0.0
    %2682 = vst.msk [vmem:[#allocation3 + $0x13b] sm:$0xff] %vm2132, 0.0
    %2683 = vst.msk [vmem:[#allocation3 + $0x143] sm:$0xff] %vm2132, 0.0
    %2684 = vst.msk [vmem:[#allocation3 + $0x14b] sm:$0x7] %vm2665, 0.0
    %2685 = vst.msk [vmem:[#allocation3 + $0x16b] sm:$0xff] %vm2132, 0.0
    %2686 = vst.msk [vmem:[#allocation3 + $0x173] sm:$0xff] %vm2132, 0.0
    %2687 = vst.msk [vmem:[#allocation3 + $0x17b] sm:$0x7] %vm2665, 0.0
    %v2688 = vld [vmem:[#allocation3] ss:$2 sm:$0xff]
    %s2689 = scalar_lea.vmem [#allocation3], 16
    %v2690 = vld [vmem:[%s2689] ss:$2 sm:$0xff]
    %s2691 = scalar_lea.vmem [#allocation3], 48
    %v2692 = vld [vmem:[%s2691] ss:$2 sm:$0xff]
    %s2693 = scalar_lea.vmem [#allocation3], 64
    %v2694 = vld [vmem:[%s2693] ss:$2 sm:$0xff]
    %s2695 = scalar_lea.vmem [#allocation3], 96
    %v2696 = vld [vmem:[%s2695] ss:$2 sm:$0xff]
    %s2697 = scalar_lea.vmem [#allocation3], 112
    %v2698 = vld [vmem:[%s2697] ss:$2 sm:$0xff]
    %s2699 = scalar_lea.vmem [#allocation3], 144
    %v2700 = vld [vmem:[%s2699] ss:$2 sm:$0xff]
    %s2701 = scalar_lea.vmem [#allocation3], 160
    %v2702 = vld [vmem:[%s2701] ss:$2 sm:$0xff]
    %s2703 = scalar_lea.vmem [#allocation3], 192
    %v2704 = vld [vmem:[%s2703] ss:$2 sm:$0xff]
    %s2705 = scalar_lea.vmem [#allocation3], 208
    %v2706 = vld [vmem:[%s2705] ss:$2 sm:$0xff]
    %s2707 = scalar_lea.vmem [#allocation3], 240
    %v2708 = vld [vmem:[%s2707] ss:$2 sm:$0xff]
    %s2709 = scalar_lea.vmem [#allocation3], 256
    %v2710 = vld [vmem:[%s2709] ss:$2 sm:$0xff]
    %s2711 = scalar_lea.vmem [#allocation3], 288
    %v2712 = vld [vmem:[%s2711] ss:$2 sm:$0xff]
    %s2713 = scalar_lea.vmem [#allocation3], 304
    %v2714 = vld [vmem:[%s2713] ss:$2 sm:$0xff]
    %s2715 = scalar_lea.vmem [#allocation3], 336
    %v2716 = vld [vmem:[%s2715] ss:$2 sm:$0xff]
    %s2717 = scalar_lea.vmem [#allocation3], 352
    %v2718 = vld [vmem:[%s2717] ss:$2 sm:$0xff]
    %s2719 = scalar_lea.vmem [#allocation3], 1
    %v2720 = vld [vmem:[%s2719] ss:$2 sm:$0xff]
    %s2721 = scalar_lea.vmem [#allocation3], 17
    %v2722 = vld [vmem:[%s2721] ss:$2 sm:$0xff]
    %s2723 = scalar_lea.vmem [#allocation3], 49
    %v2724 = vld [vmem:[%s2723] ss:$2 sm:$0xff]
    %s2725 = scalar_lea.vmem [#allocation3], 65
    %v2726 = vld [vmem:[%s2725] ss:$2 sm:$0xff]
    %s2727 = scalar_lea.vmem [#allocation3], 97
    %v2728 = vld [vmem:[%s2727] ss:$2 sm:$0xff]
    %s2729 = scalar_lea.vmem [#allocation3], 113
    %v2730 = vld [vmem:[%s2729] ss:$2 sm:$0xff]
    %s2731 = scalar_lea.vmem [#allocation3], 145
    %v2732 = vld [vmem:[%s2731] ss:$2 sm:$0xff]
    %s2733 = scalar_lea.vmem [#allocation3], 161
    %v2734 = vld [vmem:[%s2733] ss:$2 sm:$0xff]
    %s2735 = scalar_lea.vmem [#allocation3], 193
    %v2736 = vld [vmem:[%s2735] ss:$2 sm:$0xff]
    %s2737 = scalar_lea.vmem [#allocation3], 209
    %v2738 = vld [vmem:[%s2737] ss:$2 sm:$0xff]
    %s2739 = scalar_lea.vmem [#allocation3], 241
    %v2740 = vld [vmem:[%s2739] ss:$2 sm:$0xff]
    %s2741 = scalar_lea.vmem [#allocation3], 257
    %v2742 = vld [vmem:[%s2741] ss:$2 sm:$0xff]
    %s2743 = scalar_lea.vmem [#allocation3], 289
    %v2744 = vld [vmem:[%s2743] ss:$2 sm:$0xff]
    %s2745 = scalar_lea.vmem [#allocation3], 305
    %v2746 = vld [vmem:[%s2745] ss:$2 sm:$0xff]
    %s2747 = scalar_lea.vmem [#allocation3], 337
    %v2748 = vld [vmem:[%s2747] ss:$2 sm:$0xff]
    %s2749 = scalar_lea.vmem [#allocation3], 353
    %v2750 = vld [vmem:[%s2749] ss:$2 sm:$0xff]
    %v2751 = vmax.f32 %v2688, %v2720
    %v2752 = vmax.f32 %v2690, %v2722
    %v2753 = vmax.f32 %v2692, %v2724
    %v2754 = vmax.f32 %v2694, %v2726
    %v2755 = vmax.f32 %v2696, %v2728
    %v2756 = vmax.f32 %v2698, %v2730
    %v2757 = vmax.f32 %v2700, %v2732
    %v2758 = vmax.f32 %v2702, %v2734
    %v2759 = vmax.f32 %v2704, %v2736
    %v2760 = vmax.f32 %v2706, %v2738
    %v2761 = vmax.f32 %v2708, %v2740
    %v2762 = vmax.f32 %v2710, %v2742
    %v2763 = vmax.f32 %v2712, %v2744
    %v2764 = vmax.f32 %v2714, %v2746
    %v2765 = vmax.f32 %v2716, %v2748
    %v2766 = vmax.f32 %v2718, %v2750
    %s2767 = scalar_lea.vmem [#allocation3], 2
    %v2768 = vld [vmem:[%s2767] ss:$2 sm:$0xff]
    %s2769 = scalar_lea.vmem [#allocation3], 18
    %v2770 = vld [vmem:[%s2769] ss:$2 sm:$0xff]
    %s2771 = scalar_lea.vmem [#allocation3], 50
    %v2772 = vld [vmem:[%s2771] ss:$2 sm:$0xff]
    %s2773 = scalar_lea.vmem [#allocation3], 66
    %v2774 = vld [vmem:[%s2773] ss:$2 sm:$0xff]
    %s2775 = scalar_lea.vmem [#allocation3], 98
    %v2776 = vld [vmem:[%s2775] ss:$2 sm:$0xff]
    %s2777 = scalar_lea.vmem [#allocation3], 114
    %v2778 = vld [vmem:[%s2777] ss:$2 sm:$0xff]
    %s2779 = scalar_lea.vmem [#allocation3], 146
    %v2780 = vld [vmem:[%s2779] ss:$2 sm:$0xff]
    %s2781 = scalar_lea.vmem [#allocation3], 162
    %v2782 = vld [vmem:[%s2781] ss:$2 sm:$0xff]
    %s2783 = scalar_lea.vmem [#allocation3], 194
    %v2784 = vld [vmem:[%s2783] ss:$2 sm:$0xff]
    %s2785 = scalar_lea.vmem [#allocation3], 210
    %v2786 = vld [vmem:[%s2785] ss:$2 sm:$0xff]
    %s2787 = scalar_lea.vmem [#allocation3], 242
    %v2788 = vld [vmem:[%s2787] ss:$2 sm:$0xff]
    %s2789 = scalar_lea.vmem [#allocation3], 258
    %v2790 = vld [vmem:[%s2789] ss:$2 sm:$0xff]
    %s2791 = scalar_lea.vmem [#allocation3], 290
    %v2792 = vld [vmem:[%s2791] ss:$2 sm:$0xff]
    %s2793 = scalar_lea.vmem [#allocation3], 306
    %v2794 = vld [vmem:[%s2793] ss:$2 sm:$0xff]
    %s2795 = scalar_lea.vmem [#allocation3], 338
    %v2796 = vld [vmem:[%s2795] ss:$2 sm:$0xff]
    %s2797 = scalar_lea.vmem [#allocation3], 354
    %v2798 = vld [vmem:[%s2797] ss:$2 sm:$0xff]
    %s2799 = scalar_lea.vmem [#allocation3], 3
    %v2800 = vld [vmem:[%s2799] ss:$2 sm:$0xff]
    %s2801 = scalar_lea.vmem [#allocation3], 19
    %v2802 = vld [vmem:[%s2801] ss:$2 sm:$0xff]
    %s2803 = scalar_lea.vmem [#allocation3], 51
    %v2804 = vld [vmem:[%s2803] ss:$2 sm:$0xff]
    %s2805 = scalar_lea.vmem [#allocation3], 67
    %v2806 = vld [vmem:[%s2805] ss:$2 sm:$0xff]
    %s2807 = scalar_lea.vmem [#allocation3], 99
    %v2808 = vld [vmem:[%s2807] ss:$2 sm:$0xff]
    %s2809 = scalar_lea.vmem [#allocation3], 115
    %v2810 = vld [vmem:[%s2809] ss:$2 sm:$0xff]
    %s2811 = scalar_lea.vmem [#allocation3], 147
    %v2812 = vld [vmem:[%s2811] ss:$2 sm:$0xff]
    %s2813 = scalar_lea.vmem [#allocation3], 163
    %v2814 = vld [vmem:[%s2813] ss:$2 sm:$0xff]
    %s2815 = scalar_lea.vmem [#allocation3], 195
    %v2816 = vld [vmem:[%s2815] ss:$2 sm:$0xff]
    %s2817 = scalar_lea.vmem [#allocation3], 211
    %v2818 = vld [vmem:[%s2817] ss:$2 sm:$0xff]
    %s2819 = scalar_lea.vmem [#allocation3], 243
    %v2820 = vld [vmem:[%s2819] ss:$2 sm:$0xff]
    %s2821 = scalar_lea.vmem [#allocation3], 259
    %v2822 = vld [vmem:[%s2821] ss:$2 sm:$0xff]
    %s2823 = scalar_lea.vmem [#allocation3], 291
    %v2824 = vld [vmem:[%s2823] ss:$2 sm:$0xff]
    %s2825 = scalar_lea.vmem [#allocation3], 307
    %v2826 = vld [vmem:[%s2825] ss:$2 sm:$0xff]
    %s2827 = scalar_lea.vmem [#allocation3], 339
    %v2828 = vld [vmem:[%s2827] ss:$2 sm:$0xff]
    %s2829 = scalar_lea.vmem [#allocation3], 355
    %v2830 = vld [vmem:[%s2829] ss:$2 sm:$0xff]
    %v2831 = vmax.f32 %v2768, %v2800
    %v2832 = vmax.f32 %v2770, %v2802
    %v2833 = vmax.f32 %v2772, %v2804
    %v2834 = vmax.f32 %v2774, %v2806
    %v2835 = vmax.f32 %v2776, %v2808
    %v2836 = vmax.f32 %v2778, %v2810
    %v2837 = vmax.f32 %v2780, %v2812
    %v2838 = vmax.f32 %v2782, %v2814
    %v2839 = vmax.f32 %v2784, %v2816
    %v2840 = vmax.f32 %v2786, %v2818
    %v2841 = vmax.f32 %v2788, %v2820
    %v2842 = vmax.f32 %v2790, %v2822
    %v2843 = vmax.f32 %v2792, %v2824
    %v2844 = vmax.f32 %v2794, %v2826
    %v2845 = vmax.f32 %v2796, %v2828
    %v2846 = vmax.f32 %v2798, %v2830
    %s2847 = scalar_lea.vmem [#allocation3], 4
    %v2848 = vld [vmem:[%s2847] ss:$2 sm:$0xff]
    %s2849 = scalar_lea.vmem [#allocation3], 20
    %v2850 = vld [vmem:[%s2849] ss:$2 sm:$0xff]
    %s2851 = scalar_lea.vmem [#allocation3], 52
    %v2852 = vld [vmem:[%s2851] ss:$2 sm:$0xff]
    %s2853 = scalar_lea.vmem [#allocation3], 68
    %v2854 = vld [vmem:[%s2853] ss:$2 sm:$0xff]
    %s2855 = scalar_lea.vmem [#allocation3], 100
    %v2856 = vld [vmem:[%s2855] ss:$2 sm:$0xff]
    %s2857 = scalar_lea.vmem [#allocation3], 116
    %v2858 = vld [vmem:[%s2857] ss:$2 sm:$0xff]
    %s2859 = scalar_lea.vmem [#allocation3], 148
    %v2860 = vld [vmem:[%s2859] ss:$2 sm:$0xff]
    %s2861 = scalar_lea.vmem [#allocation3], 164
    %v2862 = vld [vmem:[%s2861] ss:$2 sm:$0xff]
    %s2863 = scalar_lea.vmem [#allocation3], 196
    %v2864 = vld [vmem:[%s2863] ss:$2 sm:$0xff]
    %s2865 = scalar_lea.vmem [#allocation3], 212
    %v2866 = vld [vmem:[%s2865] ss:$2 sm:$0xff]
    %s2867 = scalar_lea.vmem [#allocation3], 244
    %v2868 = vld [vmem:[%s2867] ss:$2 sm:$0xff]
    %s2869 = scalar_lea.vmem [#allocation3], 260
    %v2870 = vld [vmem:[%s2869] ss:$2 sm:$0xff]
    %s2871 = scalar_lea.vmem [#allocation3], 292
    %v2872 = vld [vmem:[%s2871] ss:$2 sm:$0xff]
    %s2873 = scalar_lea.vmem [#allocation3], 308
    %v2874 = vld [vmem:[%s2873] ss:$2 sm:$0xff]
    %s2875 = scalar_lea.vmem [#allocation3], 340
    %v2876 = vld [vmem:[%s2875] ss:$2 sm:$0xff]
    %s2877 = scalar_lea.vmem [#allocation3], 356
    %v2878 = vld [vmem:[%s2877] ss:$2 sm:$0xff]
    %s2879 = scalar_lea.vmem [#allocation3], 5
    %v2880 = vld [vmem:[%s2879] ss:$2 sm:$0xff]
    %s2881 = scalar_lea.vmem [#allocation3], 21
    %v2882 = vld [vmem:[%s2881] ss:$2 sm:$0xff]
    %s2883 = scalar_lea.vmem [#allocation3], 53
    %v2884 = vld [vmem:[%s2883] ss:$2 sm:$0xff]
    %s2885 = scalar_lea.vmem [#allocation3], 69
    %v2886 = vld [vmem:[%s2885] ss:$2 sm:$0xff]
    %s2887 = scalar_lea.vmem [#allocation3], 101
    %v2888 = vld [vmem:[%s2887] ss:$2 sm:$0xff]
    %s2889 = scalar_lea.vmem [#allocation3], 117
    %v2890 = vld [vmem:[%s2889] ss:$2 sm:$0xff]
    %s2891 = scalar_lea.vmem [#allocation3], 149
    %v2892 = vld [vmem:[%s2891] ss:$2 sm:$0xff]
    %s2893 = scalar_lea.vmem [#allocation3], 165
    %v2894 = vld [vmem:[%s2893] ss:$2 sm:$0xff]
    %s2895 = scalar_lea.vmem [#allocation3], 197
    %v2896 = vld [vmem:[%s2895] ss:$2 sm:$0xff]
    %s2897 = scalar_lea.vmem [#allocation3], 213
    %v2898 = vld [vmem:[%s2897] ss:$2 sm:$0xff]
    %s2899 = scalar_lea.vmem [#allocation3], 245
    %v2900 = vld [vmem:[%s2899] ss:$2 sm:$0xff]
    %s2901 = scalar_lea.vmem [#allocation3], 261
    %v2902 = vld [vmem:[%s2901] ss:$2 sm:$0xff]
    %s2903 = scalar_lea.vmem [#allocation3], 293
    %v2904 = vld [vmem:[%s2903] ss:$2 sm:$0xff]
    %s2905 = scalar_lea.vmem [#allocation3], 309
    %v2906 = vld [vmem:[%s2905] ss:$2 sm:$0xff]
    %s2907 = scalar_lea.vmem [#allocation3], 341
    %v2908 = vld [vmem:[%s2907] ss:$2 sm:$0xff]
    %s2909 = scalar_lea.vmem [#allocation3], 357
    %v2910 = vld [vmem:[%s2909] ss:$2 sm:$0xff]
    %v2911 = vmax.f32 %v2848, %v2880
    %v2912 = vmax.f32 %v2850, %v2882
    %v2913 = vmax.f32 %v2852, %v2884
    %v2914 = vmax.f32 %v2854, %v2886
    %v2915 = vmax.f32 %v2856, %v2888
    %v2916 = vmax.f32 %v2858, %v2890
    %v2917 = vmax.f32 %v2860, %v2892
    %v2918 = vmax.f32 %v2862, %v2894
    %v2919 = vmax.f32 %v2864, %v2896
    %v2920 = vmax.f32 %v2866, %v2898
    %v2921 = vmax.f32 %v2868, %v2900
    %v2922 = vmax.f32 %v2870, %v2902
    %v2923 = vmax.f32 %v2872, %v2904
    %v2924 = vmax.f32 %v2874, %v2906
    %v2925 = vmax.f32 %v2876, %v2908
    %v2926 = vmax.f32 %v2878, %v2910
    %s2927 = scalar_lea.vmem [#allocation3], 6
    %v2928 = vld [vmem:[%s2927] ss:$2 sm:$0xff]
    %s2929 = scalar_lea.vmem [#allocation3], 22
    %v2930 = vld [vmem:[%s2929] ss:$2 sm:$0xff]
    %s2931 = scalar_lea.vmem [#allocation3], 54
    %v2932 = vld [vmem:[%s2931] ss:$2 sm:$0xff]
    %s2933 = scalar_lea.vmem [#allocation3], 70
    %v2934 = vld [vmem:[%s2933] ss:$2 sm:$0xff]
    %s2935 = scalar_lea.vmem [#allocation3], 102
    %v2936 = vld [vmem:[%s2935] ss:$2 sm:$0xff]
    %s2937 = scalar_lea.vmem [#allocation3], 118
    %v2938 = vld [vmem:[%s2937] ss:$2 sm:$0xff]
    %s2939 = scalar_lea.vmem [#allocation3], 150
    %v2940 = vld [vmem:[%s2939] ss:$2 sm:$0xff]
    %s2941 = scalar_lea.vmem [#allocation3], 166
    %v2942 = vld [vmem:[%s2941] ss:$2 sm:$0xff]
    %s2943 = scalar_lea.vmem [#allocation3], 198
    %v2944 = vld [vmem:[%s2943] ss:$2 sm:$0xff]
    %s2945 = scalar_lea.vmem [#allocation3], 214
    %v2946 = vld [vmem:[%s2945] ss:$2 sm:$0xff]
    %s2947 = scalar_lea.vmem [#allocation3], 246
    %v2948 = vld [vmem:[%s2947] ss:$2 sm:$0xff]
    %s2949 = scalar_lea.vmem [#allocation3], 262
    %v2950 = vld [vmem:[%s2949] ss:$2 sm:$0xff]
    %s2951 = scalar_lea.vmem [#allocation3], 294
    %v2952 = vld [vmem:[%s2951] ss:$2 sm:$0xff]
    %s2953 = scalar_lea.vmem [#allocation3], 310
    %v2954 = vld [vmem:[%s2953] ss:$2 sm:$0xff]
    %s2955 = scalar_lea.vmem [#allocation3], 342
    %v2956 = vld [vmem:[%s2955] ss:$2 sm:$0xff]
    %s2957 = scalar_lea.vmem [#allocation3], 358
    %v2958 = vld [vmem:[%s2957] ss:$2 sm:$0xff]
    %s2959 = scalar_lea.vmem [#allocation3], 7
    %v2960 = vld [vmem:[%s2959] ss:$2 sm:$0xff]
    %s2961 = scalar_lea.vmem [#allocation3], 23
    %v2962 = vld [vmem:[%s2961] ss:$2 sm:$0xff]
    %s2963 = scalar_lea.vmem [#allocation3], 55
    %v2964 = vld [vmem:[%s2963] ss:$2 sm:$0xff]
    %s2965 = scalar_lea.vmem [#allocation3], 71
    %v2966 = vld [vmem:[%s2965] ss:$2 sm:$0xff]
    %s2967 = scalar_lea.vmem [#allocation3], 103
    %v2968 = vld [vmem:[%s2967] ss:$2 sm:$0xff]
    %s2969 = scalar_lea.vmem [#allocation3], 119
    %v2970 = vld [vmem:[%s2969] ss:$2 sm:$0xff]
    %s2971 = scalar_lea.vmem [#allocation3], 151
    %v2972 = vld [vmem:[%s2971] ss:$2 sm:$0xff]
    %s2973 = scalar_lea.vmem [#allocation3], 167
    %v2974 = vld [vmem:[%s2973] ss:$2 sm:$0xff]
    %s2975 = scalar_lea.vmem [#allocation3], 199
    %v2976 = vld [vmem:[%s2975] ss:$2 sm:$0xff]
    %s2977 = scalar_lea.vmem [#allocation3], 215
    %v2978 = vld [vmem:[%s2977] ss:$2 sm:$0xff]
    %s2979 = scalar_lea.vmem [#allocation3], 247
    %v2980 = vld [vmem:[%s2979] ss:$2 sm:$0xff]
    %s2981 = scalar_lea.vmem [#allocation3], 263
    %v2982 = vld [vmem:[%s2981] ss:$2 sm:$0xff]
    %s2983 = scalar_lea.vmem [#allocation3], 295
    %v2984 = vld [vmem:[%s2983] ss:$2 sm:$0xff]
    %s2985 = scalar_lea.vmem [#allocation3], 311
    %v2986 = vld [vmem:[%s2985] ss:$2 sm:$0xff]
    %s2987 = scalar_lea.vmem [#allocation3], 343
    %v2988 = vld [vmem:[%s2987] ss:$2 sm:$0xff]
    %s2989 = scalar_lea.vmem [#allocation3], 359
    %v2990 = vld [vmem:[%s2989] ss:$2 sm:$0xff]
    %v2991 = vmax.f32 %v2928, %v2960
    %v2992 = vmax.f32 %v2930, %v2962
    %v2993 = vmax.f32 %v2932, %v2964
    %v2994 = vmax.f32 %v2934, %v2966
    %v2995 = vmax.f32 %v2936, %v2968
    %v2996 = vmax.f32 %v2938, %v2970
    %v2997 = vmax.f32 %v2940, %v2972
    %v2998 = vmax.f32 %v2942, %v2974
    %v2999 = vmax.f32 %v2944, %v2976
    %v3000 = vmax.f32 %v2946, %v2978
    %v3001 = vmax.f32 %v2948, %v2980
    %v3002 = vmax.f32 %v2950, %v2982
    %v3003 = vmax.f32 %v2952, %v2984
    %v3004 = vmax.f32 %v2954, %v2986
    %v3005 = vmax.f32 %v2956, %v2988
    %v3006 = vmax.f32 %v2958, %v2990
    %s3007 = scalar_lea.vmem [#allocation3], 8
    %v3008 = vld [vmem:[%s3007] ss:$2 sm:$0xff]
    %s3009 = scalar_lea.vmem [#allocation3], 24
    %v3010 = vld [vmem:[%s3009] ss:$2 sm:$0xff]
    %s3011 = scalar_lea.vmem [#allocation3], 56
    %v3012 = vld [vmem:[%s3011] ss:$2 sm:$0xff]
    %s3013 = scalar_lea.vmem [#allocation3], 72
    %v3014 = vld [vmem:[%s3013] ss:$2 sm:$0xff]
    %s3015 = scalar_lea.vmem [#allocation3], 104
    %v3016 = vld [vmem:[%s3015] ss:$2 sm:$0xff]
    %s3017 = scalar_lea.vmem [#allocation3], 120
    %v3018 = vld [vmem:[%s3017] ss:$2 sm:$0xff]
    %s3019 = scalar_lea.vmem [#allocation3], 152
    %v3020 = vld [vmem:[%s3019] ss:$2 sm:$0xff]
    %s3021 = scalar_lea.vmem [#allocation3], 168
    %v3022 = vld [vmem:[%s3021] ss:$2 sm:$0xff]
    %s3023 = scalar_lea.vmem [#allocation3], 200
    %v3024 = vld [vmem:[%s3023] ss:$2 sm:$0xff]
    %s3025 = scalar_lea.vmem [#allocation3], 216
    %v3026 = vld [vmem:[%s3025] ss:$2 sm:$0xff]
    %s3027 = scalar_lea.vmem [#allocation3], 248
    %v3028 = vld [vmem:[%s3027] ss:$2 sm:$0xff]
    %s3029 = scalar_lea.vmem [#allocation3], 264
    %v3030 = vld [vmem:[%s3029] ss:$2 sm:$0xff]
    %s3031 = scalar_lea.vmem [#allocation3], 296
    %v3032 = vld [vmem:[%s3031] ss:$2 sm:$0xff]
    %s3033 = scalar_lea.vmem [#allocation3], 312
    %v3034 = vld [vmem:[%s3033] ss:$2 sm:$0xff]
    %s3035 = scalar_lea.vmem [#allocation3], 344
    %v3036 = vld [vmem:[%s3035] ss:$2 sm:$0xff]
    %s3037 = scalar_lea.vmem [#allocation3], 360
    %v3038 = vld [vmem:[%s3037] ss:$2 sm:$0xff]
    %s3039 = scalar_lea.vmem [#allocation3], 9
    %v3040 = vld [vmem:[%s3039] ss:$2 sm:$0xff]
    %s3041 = scalar_lea.vmem [#allocation3], 25
    %v3042 = vld [vmem:[%s3041] ss:$2 sm:$0xff]
    %s3043 = scalar_lea.vmem [#allocation3], 57
    %v3044 = vld [vmem:[%s3043] ss:$2 sm:$0xff]
    %s3045 = scalar_lea.vmem [#allocation3], 73
    %v3046 = vld [vmem:[%s3045] ss:$2 sm:$0xff]
    %s3047 = scalar_lea.vmem [#allocation3], 105
    %v3048 = vld [vmem:[%s3047] ss:$2 sm:$0xff]
    %s3049 = scalar_lea.vmem [#allocation3], 121
    %v3050 = vld [vmem:[%s3049] ss:$2 sm:$0xff]
    %s3051 = scalar_lea.vmem [#allocation3], 153
    %v3052 = vld [vmem:[%s3051] ss:$2 sm:$0xff]
    %s3053 = scalar_lea.vmem [#allocation3], 169
    %v3054 = vld [vmem:[%s3053] ss:$2 sm:$0xff]
    %s3055 = scalar_lea.vmem [#allocation3], 201
    %v3056 = vld [vmem:[%s3055] ss:$2 sm:$0xff]
    %s3057 = scalar_lea.vmem [#allocation3], 217
    %v3058 = vld [vmem:[%s3057] ss:$2 sm:$0xff]
    %s3059 = scalar_lea.vmem [#allocation3], 249
    %v3060 = vld [vmem:[%s3059] ss:$2 sm:$0xff]
    %s3061 = scalar_lea.vmem [#allocation3], 265
    %v3062 = vld [vmem:[%s3061] ss:$2 sm:$0xff]
    %s3063 = scalar_lea.vmem [#allocation3], 297
    %v3064 = vld [vmem:[%s3063] ss:$2 sm:$0xff]
    %s3065 = scalar_lea.vmem [#allocation3], 313
    %v3066 = vld [vmem:[%s3065] ss:$2 sm:$0xff]
    %s3067 = scalar_lea.vmem [#allocation3], 345
    %v3068 = vld [vmem:[%s3067] ss:$2 sm:$0xff]
    %s3069 = scalar_lea.vmem [#allocation3], 361
    %v3070 = vld [vmem:[%s3069] ss:$2 sm:$0xff]
    %v3071 = vmax.f32 %v3008, %v3040
    %v3072 = vmax.f32 %v3010, %v3042
    %v3073 = vmax.f32 %v3012, %v3044
    %v3074 = vmax.f32 %v3014, %v3046
    %v3075 = vmax.f32 %v3016, %v3048
    %v3076 = vmax.f32 %v3018, %v3050
    %v3077 = vmax.f32 %v3020, %v3052
    %v3078 = vmax.f32 %v3022, %v3054
    %v3079 = vmax.f32 %v3024, %v3056
    %v3080 = vmax.f32 %v3026, %v3058
    %v3081 = vmax.f32 %v3028, %v3060
    %v3082 = vmax.f32 %v3030, %v3062
    %v3083 = vmax.f32 %v3032, %v3064
    %v3084 = vmax.f32 %v3034, %v3066
    %v3085 = vmax.f32 %v3036, %v3068
    %v3086 = vmax.f32 %v3038, %v3070
    %s3087 = scalar_lea.vmem [#allocation3], 10
    %v3088 = vld [vmem:[%s3087] ss:$2 sm:$0xff]
    %s3089 = scalar_lea.vmem [#allocation3], 26
    %v3090 = vld [vmem:[%s3089] ss:$2 sm:$0xff]
    %s3091 = scalar_lea.vmem [#allocation3], 58
    %v3092 = vld [vmem:[%s3091] ss:$2 sm:$0xff]
    %s3093 = scalar_lea.vmem [#allocation3], 74
    %v3094 = vld [vmem:[%s3093] ss:$2 sm:$0xff]
    %s3095 = scalar_lea.vmem [#allocation3], 106
    %v3096 = vld [vmem:[%s3095] ss:$2 sm:$0xff]
    %s3097 = scalar_lea.vmem [#allocation3], 122
    %v3098 = vld [vmem:[%s3097] ss:$2 sm:$0xff]
    %s3099 = scalar_lea.vmem [#allocation3], 154
    %v3100 = vld [vmem:[%s3099] ss:$2 sm:$0xff]
    %s3101 = scalar_lea.vmem [#allocation3], 170
    %v3102 = vld [vmem:[%s3101] ss:$2 sm:$0xff]
    %s3103 = scalar_lea.vmem [#allocation3], 202
    %v3104 = vld [vmem:[%s3103] ss:$2 sm:$0xff]
    %s3105 = scalar_lea.vmem [#allocation3], 218
    %v3106 = vld [vmem:[%s3105] ss:$2 sm:$0xff]
    %s3107 = scalar_lea.vmem [#allocation3], 250
    %v3108 = vld [vmem:[%s3107] ss:$2 sm:$0xff]
    %s3109 = scalar_lea.vmem [#allocation3], 266
    %v3110 = vld [vmem:[%s3109] ss:$2 sm:$0xff]
    %s3111 = scalar_lea.vmem [#allocation3], 298
    %v3112 = vld [vmem:[%s3111] ss:$2 sm:$0xff]
    %s3113 = scalar_lea.vmem [#allocation3], 314
    %v3114 = vld [vmem:[%s3113] ss:$2 sm:$0xff]
    %s3115 = scalar_lea.vmem [#allocation3], 346
    %v3116 = vld [vmem:[%s3115] ss:$2 sm:$0xff]
    %s3117 = scalar_lea.vmem [#allocation3], 362
    %v3118 = vld [vmem:[%s3117] ss:$2 sm:$0xff]
    %s3119 = scalar_lea.vmem [#allocation3], 11
    %v3120 = vld [vmem:[%s3119] ss:$2 sm:$0xff]
    %s3121 = scalar_lea.vmem [#allocation3], 27
    %v3122 = vld [vmem:[%s3121] ss:$2 sm:$0xff]
    %s3123 = scalar_lea.vmem [#allocation3], 59
    %v3124 = vld [vmem:[%s3123] ss:$2 sm:$0xff]
    %s3125 = scalar_lea.vmem [#allocation3], 75
    %v3126 = vld [vmem:[%s3125] ss:$2 sm:$0xff]
    %s3127 = scalar_lea.vmem [#allocation3], 107
    %v3128 = vld [vmem:[%s3127] ss:$2 sm:$0xff]
    %s3129 = scalar_lea.vmem [#allocation3], 123
    %v3130 = vld [vmem:[%s3129] ss:$2 sm:$0xff]
    %s3131 = scalar_lea.vmem [#allocation3], 155
    %v3132 = vld [vmem:[%s3131] ss:$2 sm:$0xff]
    %s3133 = scalar_lea.vmem [#allocation3], 171
    %v3134 = vld [vmem:[%s3133] ss:$2 sm:$0xff]
    %s3135 = scalar_lea.vmem [#allocation3], 203
    %v3136 = vld [vmem:[%s3135] ss:$2 sm:$0xff]
    %s3137 = scalar_lea.vmem [#allocation3], 219
    %v3138 = vld [vmem:[%s3137] ss:$2 sm:$0xff]
    %s3139 = scalar_lea.vmem [#allocation3], 251
    %v3140 = vld [vmem:[%s3139] ss:$2 sm:$0xff]
    %s3141 = scalar_lea.vmem [#allocation3], 267
    %v3142 = vld [vmem:[%s3141] ss:$2 sm:$0xff]
    %s3143 = scalar_lea.vmem [#allocation3], 299
    %v3144 = vld [vmem:[%s3143] ss:$2 sm:$0xff]
    %s3145 = scalar_lea.vmem [#allocation3], 315
    %v3146 = vld [vmem:[%s3145] ss:$2 sm:$0xff]
    %s3147 = scalar_lea.vmem [#allocation3], 347
    %v3148 = vld [vmem:[%s3147] ss:$2 sm:$0xff]
    %s3149 = scalar_lea.vmem [#allocation3], 363
    %v3150 = vld [vmem:[%s3149] ss:$2 sm:$0xff]
    %v3151 = vmax.f32 %v3088, %v3120
    %v3152 = vmax.f32 %v3090, %v3122
    %v3153 = vmax.f32 %v3092, %v3124
    %v3154 = vmax.f32 %v3094, %v3126
    %v3155 = vmax.f32 %v3096, %v3128
    %v3156 = vmax.f32 %v3098, %v3130
    %v3157 = vmax.f32 %v3100, %v3132
    %v3158 = vmax.f32 %v3102, %v3134
    %v3159 = vmax.f32 %v3104, %v3136
    %v3160 = vmax.f32 %v3106, %v3138
    %v3161 = vmax.f32 %v3108, %v3140
    %v3162 = vmax.f32 %v3110, %v3142
    %v3163 = vmax.f32 %v3112, %v3144
    %v3164 = vmax.f32 %v3114, %v3146
    %v3165 = vmax.f32 %v3116, %v3148
    %v3166 = vmax.f32 %v3118, %v3150
    %s3167 = scalar_lea.vmem [#allocation3], 12
    %v3168 = vld [vmem:[%s3167] ss:$2 sm:$0xff]
    %s3169 = scalar_lea.vmem [#allocation3], 28
    %v3170 = vld [vmem:[%s3169] ss:$2 sm:$0xff]
    %s3171 = scalar_lea.vmem [#allocation3], 60
    %v3172 = vld [vmem:[%s3171] ss:$2 sm:$0xff]
    %s3173 = scalar_lea.vmem [#allocation3], 76
    %v3174 = vld [vmem:[%s3173] ss:$2 sm:$0xff]
    %s3175 = scalar_lea.vmem [#allocation3], 108
    %v3176 = vld [vmem:[%s3175] ss:$2 sm:$0xff]
    %s3177 = scalar_lea.vmem [#allocation3], 124
    %v3178 = vld [vmem:[%s3177] ss:$2 sm:$0xff]
    %s3179 = scalar_lea.vmem [#allocation3], 156
    %v3180 = vld [vmem:[%s3179] ss:$2 sm:$0xff]
    %s3181 = scalar_lea.vmem [#allocation3], 172
    %v3182 = vld [vmem:[%s3181] ss:$2 sm:$0xff]
    %s3183 = scalar_lea.vmem [#allocation3], 204
    %v3184 = vld [vmem:[%s3183] ss:$2 sm:$0xff]
    %s3185 = scalar_lea.vmem [#allocation3], 220
    %v3186 = vld [vmem:[%s3185] ss:$2 sm:$0xff]
    %s3187 = scalar_lea.vmem [#allocation3], 252
    %v3188 = vld [vmem:[%s3187] ss:$2 sm:$0xff]
    %s3189 = scalar_lea.vmem [#allocation3], 268
    %v3190 = vld [vmem:[%s3189] ss:$2 sm:$0xff]
    %s3191 = scalar_lea.vmem [#allocation3], 300
    %v3192 = vld [vmem:[%s3191] ss:$2 sm:$0xff]
    %s3193 = scalar_lea.vmem [#allocation3], 316
    %v3194 = vld [vmem:[%s3193] ss:$2 sm:$0xff]
    %s3195 = scalar_lea.vmem [#allocation3], 348
    %v3196 = vld [vmem:[%s3195] ss:$2 sm:$0xff]
    %s3197 = scalar_lea.vmem [#allocation3], 364
    %v3198 = vld [vmem:[%s3197] ss:$2 sm:$0xff]
    %s3199 = scalar_lea.vmem [#allocation3], 13
    %v3200 = vld [vmem:[%s3199] ss:$2 sm:$0xff]
    %s3201 = scalar_lea.vmem [#allocation3], 29
    %v3202 = vld [vmem:[%s3201] ss:$2 sm:$0xff]
    %s3203 = scalar_lea.vmem [#allocation3], 61
    %v3204 = vld [vmem:[%s3203] ss:$2 sm:$0xff]
    %s3205 = scalar_lea.vmem [#allocation3], 77
    %v3206 = vld [vmem:[%s3205] ss:$2 sm:$0xff]
    %s3207 = scalar_lea.vmem [#allocation3], 109
    %v3208 = vld [vmem:[%s3207] ss:$2 sm:$0xff]
    %s3209 = scalar_lea.vmem [#allocation3], 125
    %v3210 = vld [vmem:[%s3209] ss:$2 sm:$0xff]
    %s3211 = scalar_lea.vmem [#allocation3], 157
    %v3212 = vld [vmem:[%s3211] ss:$2 sm:$0xff]
    %s3213 = scalar_lea.vmem [#allocation3], 173
    %v3214 = vld [vmem:[%s3213] ss:$2 sm:$0xff]
    %s3215 = scalar_lea.vmem [#allocation3], 205
    %v3216 = vld [vmem:[%s3215] ss:$2 sm:$0xff]
    %s3217 = scalar_lea.vmem [#allocation3], 221
    %v3218 = vld [vmem:[%s3217] ss:$2 sm:$0xff]
    %s3219 = scalar_lea.vmem [#allocation3], 253
    %v3220 = vld [vmem:[%s3219] ss:$2 sm:$0xff]
    %s3221 = scalar_lea.vmem [#allocation3], 269
    %v3222 = vld [vmem:[%s3221] ss:$2 sm:$0xff]
    %s3223 = scalar_lea.vmem [#allocation3], 301
    %v3224 = vld [vmem:[%s3223] ss:$2 sm:$0xff]
    %s3225 = scalar_lea.vmem [#allocation3], 317
    %v3226 = vld [vmem:[%s3225] ss:$2 sm:$0xff]
    %s3227 = scalar_lea.vmem [#allocation3], 349
    %v3228 = vld [vmem:[%s3227] ss:$2 sm:$0xff]
    %s3229 = scalar_lea.vmem [#allocation3], 365
    %v3230 = vld [vmem:[%s3229] ss:$2 sm:$0xff]
    %v3231 = vmax.f32 %v3168, %v3200
    %v3232 = vmax.f32 %v3170, %v3202
    %v3233 = vmax.f32 %v3172, %v3204
    %v3234 = vmax.f32 %v3174, %v3206
    %v3235 = vmax.f32 %v3176, %v3208
    %v3236 = vmax.f32 %v3178, %v3210
    %v3237 = vmax.f32 %v3180, %v3212
    %v3238 = vmax.f32 %v3182, %v3214
    %v3239 = vmax.f32 %v3184, %v3216
    %v3240 = vmax.f32 %v3186, %v3218
    %v3241 = vmax.f32 %v3188, %v3220
    %v3242 = vmax.f32 %v3190, %v3222
    %v3243 = vmax.f32 %v3192, %v3224
    %v3244 = vmax.f32 %v3194, %v3226
    %v3245 = vmax.f32 %v3196, %v3228
    %v3246 = vmax.f32 %v3198, %v3230
    %s3247 = scalar_lea.vmem [#allocation3], 14
    %v3248 = vld [vmem:[%s3247] ss:$2 sm:$0xff]
    %s3249 = scalar_lea.vmem [#allocation3], 30
    %v3250 = vld [vmem:[%s3249] ss:$2 sm:$0xff]
    %s3251 = scalar_lea.vmem [#allocation3], 62
    %v3252 = vld [vmem:[%s3251] ss:$2 sm:$0xff]
    %s3253 = scalar_lea.vmem [#allocation3], 78
    %v3254 = vld [vmem:[%s3253] ss:$2 sm:$0xff]
    %s3255 = scalar_lea.vmem [#allocation3], 110
    %v3256 = vld [vmem:[%s3255] ss:$2 sm:$0xff]
    %s3257 = scalar_lea.vmem [#allocation3], 126
    %v3258 = vld [vmem:[%s3257] ss:$2 sm:$0xff]
    %s3259 = scalar_lea.vmem [#allocation3], 158
    %v3260 = vld [vmem:[%s3259] ss:$2 sm:$0xff]
    %s3261 = scalar_lea.vmem [#allocation3], 174
    %v3262 = vld [vmem:[%s3261] ss:$2 sm:$0xff]
    %s3263 = scalar_lea.vmem [#allocation3], 206
    %v3264 = vld [vmem:[%s3263] ss:$2 sm:$0xff]
    %s3265 = scalar_lea.vmem [#allocation3], 222
    %v3266 = vld [vmem:[%s3265] ss:$2 sm:$0xff]
    %s3267 = scalar_lea.vmem [#allocation3], 254
    %v3268 = vld [vmem:[%s3267] ss:$2 sm:$0xff]
    %s3269 = scalar_lea.vmem [#allocation3], 270
    %v3270 = vld [vmem:[%s3269] ss:$2 sm:$0xff]
    %s3271 = scalar_lea.vmem [#allocation3], 302
    %v3272 = vld [vmem:[%s3271] ss:$2 sm:$0xff]
    %s3273 = scalar_lea.vmem [#allocation3], 318
    %v3274 = vld [vmem:[%s3273] ss:$2 sm:$0xff]
    %s3275 = scalar_lea.vmem [#allocation3], 350
    %v3276 = vld [vmem:[%s3275] ss:$2 sm:$0xff]
    %s3277 = scalar_lea.vmem [#allocation3], 366
    %v3278 = vld [vmem:[%s3277] ss:$2 sm:$0xff]
    %s3279 = scalar_lea.vmem [#allocation3], 15
    %v3280 = vld [vmem:[%s3279] ss:$2 sm:$0xff]
    %s3281 = scalar_lea.vmem [#allocation3], 31
    %v3282 = vld [vmem:[%s3281] ss:$2 sm:$0xff]
    %s3283 = scalar_lea.vmem [#allocation3], 63
    %v3284 = vld [vmem:[%s3283] ss:$2 sm:$0xff]
    %s3285 = scalar_lea.vmem [#allocation3], 79
    %v3286 = vld [vmem:[%s3285] ss:$2 sm:$0xff]
    %s3287 = scalar_lea.vmem [#allocation3], 111
    %v3288 = vld [vmem:[%s3287] ss:$2 sm:$0xff]
    %s3289 = scalar_lea.vmem [#allocation3], 127
    %v3290 = vld [vmem:[%s3289] ss:$2 sm:$0xff]
    %s3291 = scalar_lea.vmem [#allocation3], 159
    %v3292 = vld [vmem:[%s3291] ss:$2 sm:$0xff]
    %s3293 = scalar_lea.vmem [#allocation3], 175
    %v3294 = vld [vmem:[%s3293] ss:$2 sm:$0xff]
    %s3295 = scalar_lea.vmem [#allocation3], 207
    %v3296 = vld [vmem:[%s3295] ss:$2 sm:$0xff]
    %s3297 = scalar_lea.vmem [#allocation3], 223
    %v3298 = vld [vmem:[%s3297] ss:$2 sm:$0xff]
    %s3299 = scalar_lea.vmem [#allocation3], 255
    %v3300 = vld [vmem:[%s3299] ss:$2 sm:$0xff]
    %s3301 = scalar_lea.vmem [#allocation3], 271
    %v3302 = vld [vmem:[%s3301] ss:$2 sm:$0xff]
    %s3303 = scalar_lea.vmem [#allocation3], 303
    %v3304 = vld [vmem:[%s3303] ss:$2 sm:$0xff]
    %s3305 = scalar_lea.vmem [#allocation3], 319
    %v3306 = vld [vmem:[%s3305] ss:$2 sm:$0xff]
    %s3307 = scalar_lea.vmem [#allocation3], 351
    %v3308 = vld [vmem:[%s3307] ss:$2 sm:$0xff]
    %s3309 = scalar_lea.vmem [#allocation3], 367
    %v3310 = vld [vmem:[%s3309] ss:$2 sm:$0xff]
    %v3311 = vmax.f32 %v3248, %v3280
    %v3312 = vmax.f32 %v3250, %v3282
    %v3313 = vmax.f32 %v3252, %v3284
    %v3314 = vmax.f32 %v3254, %v3286
    %v3315 = vmax.f32 %v3256, %v3288
    %v3316 = vmax.f32 %v3258, %v3290
    %v3317 = vmax.f32 %v3260, %v3292
    %v3318 = vmax.f32 %v3262, %v3294
    %v3319 = vmax.f32 %v3264, %v3296
    %v3320 = vmax.f32 %v3266, %v3298
    %v3321 = vmax.f32 %v3268, %v3300
    %v3322 = vmax.f32 %v3270, %v3302
    %v3323 = vmax.f32 %v3272, %v3304
    %v3324 = vmax.f32 %v3274, %v3306
    %v3325 = vmax.f32 %v3276, %v3308
    %v3326 = vmax.f32 %v3278, %v3310
    %3343 = vrot.lane.b32.xlu0 %v2831, 64
    %v3344 = vpop.permute.xlu0 %3343
    %3345 = vrot.lane.b32.xlu0 %v2832, 64
    %v3346 = vpop.permute.xlu0 %3345
    %3347 = vrot.lane.b32.xlu0 %v2833, 64
    %v3348 = vpop.permute.xlu0 %3347
    %3349 = vrot.lane.b32.xlu0 %v2834, 64
    %v3350 = vpop.permute.xlu0 %3349
    %3351 = vrot.lane.b32.xlu0 %v2835, 64
    %v3352 = vpop.permute.xlu0 %3351
    %3353 = vrot.lane.b32.xlu0 %v2836, 64
    %v3354 = vpop.permute.xlu0 %3353
    %3355 = vrot.lane.b32.xlu0 %v2837, 64
    %v3356 = vpop.permute.xlu0 %3355
    %3357 = vrot.lane.b32.xlu0 %v2838, 64
    %v3358 = vpop.permute.xlu0 %3357
    %3359 = vrot.lane.b32.xlu0 %v2839, 64
    %v3360 = vpop.permute.xlu0 %3359
    %3361 = vrot.lane.b32.xlu0 %v2840, 64
    %v3362 = vpop.permute.xlu0 %3361
    %3363 = vrot.lane.b32.xlu0 %v2841, 64
    %v3364 = vpop.permute.xlu0 %3363
    %3365 = vrot.lane.b32.xlu0 %v2842, 64
    %v3366 = vpop.permute.xlu0 %3365
    %3367 = vrot.lane.b32.xlu0 %v2843, 64
    %v3368 = vpop.permute.xlu0 %3367
    %3369 = vrot.lane.b32.xlu0 %v2844, 64
    %v3370 = vpop.permute.xlu0 %3369
    %3371 = vrot.lane.b32.xlu0 %v2845, 64
    %v3372 = vpop.permute.xlu0 %3371
    %3373 = vrot.lane.b32.xlu0 %v2846, 64
    %v3374 = vpop.permute.xlu0 %3373
    %3407 = vrot.lane.b32.xlu0 %v2991, 64
    %v3408 = vpop.permute.xlu0 %3407
    %3409 = vrot.lane.b32.xlu0 %v2992, 64
    %v3410 = vpop.permute.xlu0 %3409
    %3411 = vrot.lane.b32.xlu0 %v2993, 64
    %v3412 = vpop.permute.xlu0 %3411
    %3413 = vrot.lane.b32.xlu0 %v2994, 64
    %v3414 = vpop.permute.xlu0 %3413
    %3415 = vrot.lane.b32.xlu0 %v2995, 64
    %v3416 = vpop.permute.xlu0 %3415
    %3417 = vrot.lane.b32.xlu0 %v2996, 64
    %v3418 = vpop.permute.xlu0 %3417
    %3419 = vrot.lane.b32.xlu0 %v2997, 64
    %v3420 = vpop.permute.xlu0 %3419
    %3421 = vrot.lane.b32.xlu0 %v2998, 64
    %v3422 = vpop.permute.xlu0 %3421
    %3423 = vrot.lane.b32.xlu0 %v2999, 64
    %v3424 = vpop.permute.xlu0 %3423
    %3425 = vrot.lane.b32.xlu0 %v3000, 64
    %v3426 = vpop.permute.xlu0 %3425
    %3427 = vrot.lane.b32.xlu0 %v3001, 64
    %v3428 = vpop.permute.xlu0 %3427
    %3429 = vrot.lane.b32.xlu0 %v3002, 64
    %v3430 = vpop.permute.xlu0 %3429
    %3431 = vrot.lane.b32.xlu0 %v3003, 64
    %v3432 = vpop.permute.xlu0 %3431
    %3433 = vrot.lane.b32.xlu0 %v3004, 64
    %v3434 = vpop.permute.xlu0 %3433
    %3435 = vrot.lane.b32.xlu0 %v3005, 64
    %v3436 = vpop.permute.xlu0 %3435
    %3437 = vrot.lane.b32.xlu0 %v3006, 64
    %v3438 = vpop.permute.xlu0 %3437
    %3471 = vrot.lane.b32.xlu0 %v3151, 64
    %v3472 = vpop.permute.xlu0 %3471
    %3473 = vrot.lane.b32.xlu0 %v3152, 64
    %v3474 = vpop.permute.xlu0 %3473
    %3475 = vrot.lane.b32.xlu0 %v3153, 64
    %v3476 = vpop.permute.xlu0 %3475
    %3477 = vrot.lane.b32.xlu0 %v3154, 64
    %v3478 = vpop.permute.xlu0 %3477
    %3479 = vrot.lane.b32.xlu0 %v3155, 64
    %v3480 = vpop.permute.xlu0 %3479
    %3481 = vrot.lane.b32.xlu0 %v3156, 64
    %v3482 = vpop.permute.xlu0 %3481
    %3483 = vrot.lane.b32.xlu0 %v3157, 64
    %v3484 = vpop.permute.xlu0 %3483
    %3485 = vrot.lane.b32.xlu0 %v3158, 64
    %v3486 = vpop.permute.xlu0 %3485
    %3487 = vrot.lane.b32.xlu0 %v3159, 64
    %v3488 = vpop.permute.xlu0 %3487
    %3489 = vrot.lane.b32.xlu0 %v3160, 64
    %v3490 = vpop.permute.xlu0 %3489
    %3491 = vrot.lane.b32.xlu0 %v3161, 64
    %v3492 = vpop.permute.xlu0 %3491
    %3493 = vrot.lane.b32.xlu0 %v3162, 64
    %v3494 = vpop.permute.xlu0 %3493
    %3495 = vrot.lane.b32.xlu0 %v3163, 64
    %v3496 = vpop.permute.xlu0 %3495
    %3497 = vrot.lane.b32.xlu0 %v3164, 64
    %v3498 = vpop.permute.xlu0 %3497
    %3499 = vrot.lane.b32.xlu0 %v3165, 64
    %v3500 = vpop.permute.xlu0 %3499
    %3501 = vrot.lane.b32.xlu0 %v3166, 64
    %v3502 = vpop.permute.xlu0 %3501
    %3535 = vrot.lane.b32.xlu0 %v3311, 64
    %v3536 = vpop.permute.xlu0 %3535
    %3537 = vrot.lane.b32.xlu0 %v3312, 64
    %v3538 = vpop.permute.xlu0 %3537
    %3539 = vrot.lane.b32.xlu0 %v3313, 64
    %v3540 = vpop.permute.xlu0 %3539
    %3541 = vrot.lane.b32.xlu0 %v3314, 64
    %v3542 = vpop.permute.xlu0 %3541
    %3543 = vrot.lane.b32.xlu0 %v3315, 64
    %v3544 = vpop.permute.xlu0 %3543
    %3545 = vrot.lane.b32.xlu0 %v3316, 64
    %v3546 = vpop.permute.xlu0 %3545
    %3547 = vrot.lane.b32.xlu0 %v3317, 64
    %v3548 = vpop.permute.xlu0 %3547
    %3549 = vrot.lane.b32.xlu0 %v3318, 64
    %v3550 = vpop.permute.xlu0 %3549
    %3551 = vrot.lane.b32.xlu0 %v3319, 64
    %v3552 = vpop.permute.xlu0 %3551
    %3553 = vrot.lane.b32.xlu0 %v3320, 64
    %v3554 = vpop.permute.xlu0 %3553
    %3555 = vrot.lane.b32.xlu0 %v3321, 64
    %v3556 = vpop.permute.xlu0 %3555
    %3557 = vrot.lane.b32.xlu0 %v3322, 64
    %v3558 = vpop.permute.xlu0 %3557
    %3559 = vrot.lane.b32.xlu0 %v3323, 64
    %v3560 = vpop.permute.xlu0 %3559
    %3561 = vrot.lane.b32.xlu0 %v3324, 64
    %v3562 = vpop.permute.xlu0 %3561
    %3563 = vrot.lane.b32.xlu0 %v3325, 64
    %v3564 = vpop.permute.xlu0 %3563
    %3565 = vrot.lane.b32.xlu0 %v3326, 64
    %v3566 = vpop.permute.xlu0 %3565
    %v3583 = vsel %vm2132, %v2751, %v3344
    %v3584 = vsel %vm2132, %v2752, %v3346
    %v3585 = vsel %vm2132, %v2753, %v3348
    %v3586 = vsel %vm2132, %v2754, %v3350
    %v3587 = vsel %vm2132, %v2755, %v3352
    %v3588 = vsel %vm2132, %v2756, %v3354
    %v3589 = vsel %vm2132, %v2757, %v3356
    %v3590 = vsel %vm2132, %v2758, %v3358
    %v3591 = vsel %vm2132, %v2759, %v3360
    %v3592 = vsel %vm2132, %v2760, %v3362
    %v3593 = vsel %vm2132, %v2761, %v3364
    %v3594 = vsel %vm2132, %v2762, %v3366
    %v3595 = vsel %vm2132, %v2763, %v3368
    %v3596 = vsel %vm2132, %v2764, %v3370
    %v3597 = vsel %vm2132, %v2765, %v3372
    %v3598 = vsel %vm2132, %v2766, %v3374
    %v3599 = vsel %vm2132, %v2911, %v3408
    %v3600 = vsel %vm2132, %v2912, %v3410
    %v3601 = vsel %vm2132, %v2913, %v3412
    %v3602 = vsel %vm2132, %v2914, %v3414
    %v3603 = vsel %vm2132, %v2915, %v3416
    %v3604 = vsel %vm2132, %v2916, %v3418
    %v3605 = vsel %vm2132, %v2917, %v3420
    %v3606 = vsel %vm2132, %v2918, %v3422
    %v3607 = vsel %vm2132, %v2919, %v3424
    %v3608 = vsel %vm2132, %v2920, %v3426
    %v3609 = vsel %vm2132, %v2921, %v3428
    %v3610 = vsel %vm2132, %v2922, %v3430
    %v3611 = vsel %vm2132, %v2923, %v3432
    %v3612 = vsel %vm2132, %v2924, %v3434
    %v3613 = vsel %vm2132, %v2925, %v3436
    %v3614 = vsel %vm2132, %v2926, %v3438
    %v3615 = vsel %vm2132, %v3071, %v3472
    %v3616 = vsel %vm2132, %v3072, %v3474
    %v3617 = vsel %vm2132, %v3073, %v3476
    %v3618 = vsel %vm2132, %v3074, %v3478
    %v3619 = vsel %vm2132, %v3075, %v3480
    %v3620 = vsel %vm2132, %v3076, %v3482
    %v3621 = vsel %vm2132, %v3077, %v3484
    %v3622 = vsel %vm2132, %v3078, %v3486
    %v3623 = vsel %vm2132, %v3079, %v3488
    %v3624 = vsel %vm2132, %v3080, %v3490
    %v3625 = vsel %vm2132, %v3081, %v3492
    %v3626 = vsel %vm2132, %v3082, %v3494
    %v3627 = vsel %vm2132, %v3083, %v3496
    %v3628 = vsel %vm2132, %v3084, %v3498
    %v3629 = vsel %vm2132, %v3085, %v3500
    %v3630 = vsel %vm2132, %v3086, %v3502
    %v3631 = vsel %vm2132, %v3231, %v3536
    %v3632 = vsel %vm2132, %v3232, %v3538
    %v3633 = vsel %vm2132, %v3233, %v3540
    %v3634 = vsel %vm2132, %v3234, %v3542
    %v3635 = vsel %vm2132, %v3235, %v3544
    %v3636 = vsel %vm2132, %v3236, %v3546
    %v3637 = vsel %vm2132, %v3237, %v3548
    %v3638 = vsel %vm2132, %v3238, %v3550
    %v3639 = vsel %vm2132, %v3239, %v3552
    %v3640 = vsel %vm2132, %v3240, %v3554
    %v3641 = vsel %vm2132, %v3241, %v3556
    %v3642 = vsel %vm2132, %v3242, %v3558
    %v3643 = vsel %vm2132, %v3243, %v3560
    %v3644 = vsel %vm2132, %v3244, %v3562
    %v3645 = vsel %vm2132, %v3245, %v3564
    %v3646 = vsel %vm2132, %v3246, %v3566
    %v3647 = vpack.c.bf16 %v3584, %v3583
    %v3648 = vpack.c.bf16 %v3600, %v3599
    %v3649 = vpack.c.bf16 %v3616, %v3615
    %v3650 = vpack.c.bf16 %v3632, %v3631
    %v3651 = vpack.c.bf16 %v3586, %v3585
    %v3652 = vpack.c.bf16 %v3602, %v3601
    %v3653 = vpack.c.bf16 %v3618, %v3617
    %v3654 = vpack.c.bf16 %v3634, %v3633
    %v3655 = vpack.c.bf16 %v3588, %v3587
    %v3656 = vpack.c.bf16 %v3604, %v3603
    %v3657 = vpack.c.bf16 %v3620, %v3619
    %v3658 = vpack.c.bf16 %v3636, %v3635
    %v3659 = vpack.c.bf16 %v3590, %v3589
    %v3660 = vpack.c.bf16 %v3606, %v3605
    %v3661 = vpack.c.bf16 %v3622, %v3621
    %v3662 = vpack.c.bf16 %v3638, %v3637
    %v3663 = vpack.c.bf16 %v3592, %v3591
    %v3664 = vpack.c.bf16 %v3608, %v3607
    %v3665 = vpack.c.bf16 %v3624, %v3623
    %v3666 = vpack.c.bf16 %v3640, %v3639
    %v3667 = vpack.c.bf16 %v3594, %v3593
    %v3668 = vpack.c.bf16 %v3610, %v3609
    %v3669 = vpack.c.bf16 %v3626, %v3625
    %v3670 = vpack.c.bf16 %v3642, %v3641
    %v3671 = vpack.c.bf16 %v3596, %v3595
    %v3672 = vpack.c.bf16 %v3612, %v3611
    %v3673 = vpack.c.bf16 %v3628, %v3627
    %v3674 = vpack.c.bf16 %v3644, %v3643
    %v3675 = vpack.c.bf16 %v3598, %v3597
    %v3676 = vpack.c.bf16 %v3614, %v3613
    %v3677 = vpack.c.bf16 %v3630, %v3629
    %v3678 = vpack.c.bf16 %v3646, %v3645
    %v3679 = vld [vmem:[%s7] sm:$0xf]
    %v3680 = vld [vmem:[%s7 + $0x4] sm:$0xf]
    %v3681 = vld [vmem:[%s7 + $0x8] sm:$0xf]
    %v3682 = vld [vmem:[%s7 + $0xc] sm:$0xf]
    %v3683 = vld [vmem:[%s7 + $0x10] sm:$0xf]
    %v3684 = vld [vmem:[%s7 + $0x14] sm:$0xf]
    %v3685 = vld [vmem:[%s7 + $0x18] sm:$0xf]
    %v3686 = vld [vmem:[%s7 + $0x1c] sm:$0xf]
    %v3687 = vld [vmem:[%s7 + $0x20] sm:$0xf]
    %v3688 = vld [vmem:[%s7 + $0x24] sm:$0xf]
    %v3689 = vld [vmem:[%s7 + $0x28] sm:$0xf]
    %v3690 = vld [vmem:[%s7 + $0x2c] sm:$0xf]
    %v3691 = vld [vmem:[%s7 + $0x30] sm:$0xf]
    %v3692 = vld [vmem:[%s7 + $0x34] sm:$0xf]
    %v3693 = vld [vmem:[%s7 + $0x38] sm:$0xf]
    %v3694 = vld [vmem:[%s7 + $0x3c] sm:$0xf]
    %v3695 = vld [vmem:[%s7 + $0x40] sm:$0xf]
    %v3696 = vld [vmem:[%s7 + $0x44] sm:$0xf]
    %v3697 = vld [vmem:[%s7 + $0x48] sm:$0xf]
    %v3698 = vld [vmem:[%s7 + $0x4c] sm:$0xf]
    %v3699 = vld [vmem:[%s7 + $0x50] sm:$0xf]
    %v3700 = vld [vmem:[%s7 + $0x54] sm:$0xf]
    %v3701 = vld [vmem:[%s7 + $0x58] sm:$0xf]
    %v3702 = vld [vmem:[%s7 + $0x5c] sm:$0xf]
    %v3703 = vld [vmem:[%s7 + $0x60] sm:$0xf]
    %v3704 = vld [vmem:[%s7 + $0x64] sm:$0xf]
    %v3705 = vld [vmem:[%s7 + $0x68] sm:$0xf]
    %v3706 = vld [vmem:[%s7 + $0x6c] sm:$0xf]
    %v3707 = vld [vmem:[%s7 + $0x70] sm:$0xf]
    %v3708 = vld [vmem:[%s7 + $0x74] sm:$0xf]
    %v3709 = vld [vmem:[%s7 + $0x78] sm:$0xf]
    %v3710 = vld [vmem:[%s7 + $0x7c] sm:$0xf]
    %v3711 = vld [vmem:[%s7 + $0x80] sm:$0xf]
    %v3712 = vld [vmem:[%s7 + $0x84] sm:$0xf]
    %v3713 = vld [vmem:[%s7 + $0x88] sm:$0xf]
    %v3714 = vld [vmem:[%s7 + $0x8c] sm:$0xf]
    %v3715 = vld [vmem:[%s7 + $0x90] sm:$0xf]
    %v3716 = vld [vmem:[%s7 + $0x94] sm:$0xf]
    %v3717 = vld [vmem:[%s7 + $0x98] sm:$0xf]
    %v3718 = vld [vmem:[%s7 + $0x9c] sm:$0xf]
    %v3719 = vld [vmem:[%s7 + $0xa0] sm:$0xf]
    %v3720 = vld [vmem:[%s7 + $0xa4] sm:$0xf]
    %v3721 = vld [vmem:[%s7 + $0xa8] sm:$0xf]
    %v3722 = vld [vmem:[%s7 + $0xac] sm:$0xf]
    %v3723 = vld [vmem:[%s7 + $0xb0] sm:$0xf]
    %v3724 = vld [vmem:[%s7 + $0xb4] sm:$0xf]
    %v3725 = vld [vmem:[%s7 + $0xb8] sm:$0xf]
    %v3726 = vld [vmem:[%s7 + $0xbc] sm:$0xf]
    %v3727 = vld [vmem:[%s7 + $0xc0] sm:$0xf]
    %v3728 = vld [vmem:[%s7 + $0xc4] sm:$0xf]
    %v3729 = vld [vmem:[%s7 + $0xc8] sm:$0xf]
    %v3730 = vld [vmem:[%s7 + $0xcc] sm:$0xf]
    %v3731 = vld [vmem:[%s7 + $0xd0] sm:$0xf]
    %v3732 = vld [vmem:[%s7 + $0xd4] sm:$0xf]
    %v3733 = vld [vmem:[%s7 + $0xd8] sm:$0xf]
    %v3734 = vld [vmem:[%s7 + $0xdc] sm:$0xf]
    %v3735 = vld [vmem:[%s7 + $0xe0] sm:$0xf]
    %v3736 = vld [vmem:[%s7 + $0xe4] sm:$0xf]
    %v3737 = vld [vmem:[%s7 + $0xe8] sm:$0xf]
    %v3738 = vld [vmem:[%s7 + $0xec] sm:$0xf]
    %v3739 = vld [vmem:[%s7 + $0xf0] sm:$0xf]
    %v3740 = vld [vmem:[%s7 + $0xf4] sm:$0xf]
    %v3741 = vld [vmem:[%s7 + $0xf8] sm:$0xf]
    %v3742 = vld [vmem:[%s7 + $0xfc] sm:$0xf]
    %v3807 = vunpack.c.l.b16 %v3679
    %v3808 = vunpack.c.l.b16 %v3680
    %v3809 = vunpack.c.l.b16 %v3681
    %v3810 = vunpack.c.l.b16 %v3682
    %v3811 = vunpack.c.l.b16 %v3683
    %v3812 = vunpack.c.l.b16 %v3684
    %v3813 = vunpack.c.l.b16 %v3685
    %v3814 = vunpack.c.l.b16 %v3686
    %v3815 = vunpack.c.l.b16 %v3687
    %v3816 = vunpack.c.l.b16 %v3688
    %v3817 = vunpack.c.l.b16 %v3689
    %v3818 = vunpack.c.l.b16 %v3690
    %v3819 = vunpack.c.l.b16 %v3691
    %v3820 = vunpack.c.l.b16 %v3692
    %v3821 = vunpack.c.l.b16 %v3693
    %v3822 = vunpack.c.l.b16 %v3694
    %v3823 = vunpack.c.l.b16 %v3695
    %v3824 = vunpack.c.l.b16 %v3696
    %v3825 = vunpack.c.l.b16 %v3697
    %v3826 = vunpack.c.l.b16 %v3698
    %v3827 = vunpack.c.l.b16 %v3699
    %v3828 = vunpack.c.l.b16 %v3700
    %v3829 = vunpack.c.l.b16 %v3701
    %v3830 = vunpack.c.l.b16 %v3702
    %v3831 = vunpack.c.l.b16 %v3703
    %v3832 = vunpack.c.l.b16 %v3704
    %v3833 = vunpack.c.l.b16 %v3705
    %v3834 = vunpack.c.l.b16 %v3706
    %v3835 = vunpack.c.l.b16 %v3707
    %v3836 = vunpack.c.l.b16 %v3708
    %v3837 = vunpack.c.l.b16 %v3709
    %v3838 = vunpack.c.l.b16 %v3710
    %v3839 = vunpack.c.l.b16 %v3711
    %v3840 = vunpack.c.l.b16 %v3712
    %v3841 = vunpack.c.l.b16 %v3713
    %v3842 = vunpack.c.l.b16 %v3714
    %v3843 = vunpack.c.l.b16 %v3715
    %v3844 = vunpack.c.l.b16 %v3716
    %v3845 = vunpack.c.l.b16 %v3717
    %v3846 = vunpack.c.l.b16 %v3718
    %v3847 = vunpack.c.l.b16 %v3719
    %v3848 = vunpack.c.l.b16 %v3720
    %v3849 = vunpack.c.l.b16 %v3721
    %v3850 = vunpack.c.l.b16 %v3722
    %v3851 = vunpack.c.l.b16 %v3723
    %v3852 = vunpack.c.l.b16 %v3724
    %v3853 = vunpack.c.l.b16 %v3725
    %v3854 = vunpack.c.l.b16 %v3726
    %v3855 = vunpack.c.l.b16 %v3727
    %v3856 = vunpack.c.l.b16 %v3728
    %v3857 = vunpack.c.l.b16 %v3729
    %v3858 = vunpack.c.l.b16 %v3730
    %v3859 = vunpack.c.l.b16 %v3731
    %v3860 = vunpack.c.l.b16 %v3732
    %v3861 = vunpack.c.l.b16 %v3733
    %v3862 = vunpack.c.l.b16 %v3734
    %v3863 = vunpack.c.l.b16 %v3735
    %v3864 = vunpack.c.l.b16 %v3736
    %v3865 = vunpack.c.l.b16 %v3737
    %v3866 = vunpack.c.l.b16 %v3738
    %v3867 = vunpack.c.l.b16 %v3739
    %v3868 = vunpack.c.l.b16 %v3740
    %v3869 = vunpack.c.l.b16 %v3741
    %v3870 = vunpack.c.l.b16 %v3742
    %v3871 = vpack.c.b16 %v3808, %v3807
    %v3872 = vpack.c.b16 %v3810, %v3809
    %v3873 = vpack.c.b16 %v3812, %v3811
    %v3874 = vpack.c.b16 %v3814, %v3813
    %v3875 = vpack.c.b16 %v3816, %v3815
    %v3876 = vpack.c.b16 %v3818, %v3817
    %v3877 = vpack.c.b16 %v3820, %v3819
    %v3878 = vpack.c.b16 %v3822, %v3821
    %v3879 = vpack.c.b16 %v3824, %v3823
    %v3880 = vpack.c.b16 %v3826, %v3825
    %v3881 = vpack.c.b16 %v3828, %v3827
    %v3882 = vpack.c.b16 %v3830, %v3829
    %v3883 = vpack.c.b16 %v3832, %v3831
    %v3884 = vpack.c.b16 %v3834, %v3833
    %v3885 = vpack.c.b16 %v3836, %v3835
    %v3886 = vpack.c.b16 %v3838, %v3837
    %v3887 = vpack.c.b16 %v3840, %v3839
    %v3888 = vpack.c.b16 %v3842, %v3841
    %v3889 = vpack.c.b16 %v3844, %v3843
    %v3890 = vpack.c.b16 %v3846, %v3845
    %v3891 = vpack.c.b16 %v3848, %v3847
    %v3892 = vpack.c.b16 %v3850, %v3849
    %v3893 = vpack.c.b16 %v3852, %v3851
    %v3894 = vpack.c.b16 %v3854, %v3853
    %v3895 = vpack.c.b16 %v3856, %v3855
    %v3896 = vpack.c.b16 %v3858, %v3857
    %v3897 = vpack.c.b16 %v3860, %v3859
    %v3898 = vpack.c.b16 %v3862, %v3861
    %v3899 = vpack.c.b16 %v3864, %v3863
    %v3900 = vpack.c.b16 %v3866, %v3865
    %v3901 = vpack.c.b16 %v3868, %v3867
    %v3902 = vpack.c.b16 %v3870, %v3869
    %3935 = vmatprep.subr.bf16.mxu0 0
    %3936 = vmatpush1.bf16.msra.mxu0 %v3878
    %3937 = vmatprep.subr.bf16.mxu0 0
    %3938 = vmatpush1.bf16.msra.mxu0 %v3877
    %3939 = vmatprep.subr.bf16.mxu0 0
    %3940 = vmatpush1.bf16.msra.mxu0 %v3876
    %3941 = vmatprep.subr.bf16.mxu0 0
    %3942 = vmatpush1.bf16.msra.mxu0 %v3875
    %3943 = vmatprep.subr.bf16.mxu0 0
    %3944 = vmatpush1.bf16.msra.mxu0 %v3874
    %3945 = vmatprep.subr.bf16.mxu0 0
    %3946 = vmatpush1.bf16.msra.mxu0 %v3873
    %3947 = vmatprep.subr.bf16.mxu0 0
    %3948 = vmatpush1.bf16.msra.mxu0 %v3872
    %3949 = vmatprep.subr.bf16.mxu0 0
    %3950 = vmatpush1.bf16.msra.mxu0 %v3871
    %3951 = vmatprep.subr.bf16.mxu0 0
    %3952 = vmatpush2.bf16.msra.mxu0 %v3886
    %3953 = vmatprep.subr.bf16.mxu0 0
    %3954 = vmatpush2.bf16.msra.mxu0 %v3885
    %3955 = vmatprep.subr.bf16.mxu0 0
    %3956 = vmatpush2.bf16.msra.mxu0 %v3884
    %3957 = vmatprep.subr.bf16.mxu0 0
    %3958 = vmatpush2.bf16.msra.mxu0 %v3883
    %3959 = vmatprep.subr.bf16.mxu0 0
    %3960 = vmatpush2.bf16.msra.mxu0 %v3882
    %3961 = vmatprep.subr.bf16.mxu0 0
    %3962 = vmatpush2.bf16.msra.mxu0 %v3881
    %3963 = vmatprep.subr.bf16.mxu0 0
    %3964 = vmatpush2.bf16.msra.mxu0 %v3880
    %3965 = vmatprep.subr.bf16.mxu0 0
    %3966 = vmatpush2.bf16.msra.mxu0 %v3879
    %3967 = vmatprep.mubr.bf16.mxu0 %v3648
    %3968 = vmatmul.mubr.bf16.gmra.mxu0 %v3647
    %v3969 = vpop.f32.mrf.mxu0
    %v3970 = vadd.f32 0.0, %v3969
    %v3971 = vpop.f32.mrf.mxu0
    %v3972 = vpop.f32.mrf.mxu0
    %v3973 = vadd.f32 0.0, %v3972
    %v3974 = vpop.f32.mrf.mxu0
    %3975 = vmatprep.mubr.bf16.mxu0 %v3652
    %3976 = vmatmul.mubr.bf16.gmra.mxu0 %v3651
    %v3977 = vpop.f32.mrf.mxu0
    %v3978 = vadd.f32 0.0, %v3977
    %v3979 = vpop.f32.mrf.mxu0
    %v3980 = vpop.f32.mrf.mxu0
    %v3981 = vadd.f32 0.0, %v3980
    %v3982 = vpop.f32.mrf.mxu0
    %3983 = vmatprep.mubr.bf16.mxu0 %v3656
    %3984 = vmatmul.mubr.bf16.gmra.mxu0 %v3655
    %v3985 = vpop.f32.mrf.mxu0
    %v3986 = vadd.f32 0.0, %v3985
    %v3987 = vpop.f32.mrf.mxu0
    %v3988 = vpop.f32.mrf.mxu0
    %v3989 = vadd.f32 0.0, %v3988
    %v3990 = vpop.f32.mrf.mxu0
    %3991 = vmatprep.mubr.bf16.mxu0 %v3660
    %3992 = vmatmul.mubr.bf16.gmra.mxu0 %v3659
    %v3993 = vpop.f32.mrf.mxu0
    %v3994 = vadd.f32 0.0, %v3993
    %v3995 = vpop.f32.mrf.mxu0
    %v3996 = vpop.f32.mrf.mxu0
    %v3997 = vadd.f32 0.0, %v3996
    %v3998 = vpop.f32.mrf.mxu0
    %3999 = vmatprep.mubr.bf16.mxu0 %v3664
    %4000 = vmatmul.mubr.bf16.gmra.mxu0 %v3663
    %v4001 = vpop.f32.mrf.mxu0
    %v4002 = vadd.f32 0.0, %v4001
    %v4003 = vpop.f32.mrf.mxu0
    %v4004 = vpop.f32.mrf.mxu0
    %v4005 = vadd.f32 0.0, %v4004
    %v4006 = vpop.f32.mrf.mxu0
    %4007 = vmatprep.mubr.bf16.mxu0 %v3668
    %4008 = vmatmul.mubr.bf16.gmra.mxu0 %v3667
    %v4009 = vpop.f32.mrf.mxu0
    %v4010 = vadd.f32 0.0, %v4009
    %v4011 = vpop.f32.mrf.mxu0
    %v4012 = vpop.f32.mrf.mxu0
    %v4013 = vadd.f32 0.0, %v4012
    %v4014 = vpop.f32.mrf.mxu0
    %4015 = vmatprep.mubr.bf16.mxu0 %v3672
    %4016 = vmatmul.mubr.bf16.gmra.mxu0 %v3671
    %v4017 = vpop.f32.mrf.mxu0
    %v4018 = vadd.f32 0.0, %v4017
    %v4019 = vpop.f32.mrf.mxu0
    %v4020 = vpop.f32.mrf.mxu0
    %v4021 = vadd.f32 0.0, %v4020
    %v4022 = vpop.f32.mrf.mxu0
    %4023 = vmatprep.mubr.bf16.mxu0 %v3676
    %4024 = vmatmul.mubr.bf16.gmra.mxu0 %v3675
    %v4025 = vpop.f32.mrf.mxu0
    %v4026 = vadd.f32 0.0, %v4025
    %v4027 = vpop.f32.mrf.mxu0
    %v4028 = vpop.f32.mrf.mxu0
    %v4029 = vadd.f32 0.0, %v4028
    %v4030 = vpop.f32.mrf.mxu0
    %4031 = vdwg.mxu0
    %4032 = vmatprep.subr.bf16.mxu0 0
    %4033 = vmatpush1.bf16.msra.mxu0 %v3894
    %4034 = vmatprep.subr.bf16.mxu0 0
    %4035 = vmatpush1.bf16.msra.mxu0 %v3893
    %4036 = vmatprep.subr.bf16.mxu0 0
    %4037 = vmatpush1.bf16.msra.mxu0 %v3892
    %4038 = vmatprep.subr.bf16.mxu0 0
    %4039 = vmatpush1.bf16.msra.mxu0 %v3891
    %4040 = vmatprep.subr.bf16.mxu0 0
    %4041 = vmatpush1.bf16.msra.mxu0 %v3890
    %4042 = vmatprep.subr.bf16.mxu0 0
    %4043 = vmatpush1.bf16.msra.mxu0 %v3889
    %4044 = vmatprep.subr.bf16.mxu0 0
    %4045 = vmatpush1.bf16.msra.mxu0 %v3888
    %4046 = vmatprep.subr.bf16.mxu0 0
    %4047 = vmatpush1.bf16.msra.mxu0 %v3887
    %4048 = vmatprep.subr.bf16.mxu0 0
    %4049 = vmatpush2.bf16.msra.mxu0 %v3902
    %4050 = vmatprep.subr.bf16.mxu0 0
    %4051 = vmatpush2.bf16.msra.mxu0 %v3901
    %4052 = vmatprep.subr.bf16.mxu0 0
    %4053 = vmatpush2.bf16.msra.mxu0 %v3900
    %4054 = vmatprep.subr.bf16.mxu0 0
    %4055 = vmatpush2.bf16.msra.mxu0 %v3899
    %4056 = vmatprep.subr.bf16.mxu0 0
    %4057 = vmatpush2.bf16.msra.mxu0 %v3898
    %4058 = vmatprep.subr.bf16.mxu0 0
    %4059 = vmatpush2.bf16.msra.mxu0 %v3897
    %4060 = vmatprep.subr.bf16.mxu0 0
    %4061 = vmatpush2.bf16.msra.mxu0 %v3896
    %4062 = vmatprep.subr.bf16.mxu0 0
    %4063 = vmatpush2.bf16.msra.mxu0 %v3895
    %4064 = vmatprep.mubr.bf16.mxu0 %v3650
    %4065 = vmatmul.mubr.bf16.gmra.mxu0 %v3649
    %v4066 = vpop.f32.mrf.mxu0
    %v4067 = vadd.f32 %v3970, %v4066
    %v4068 = vpop.f32.mrf.mxu0
    %v4069 = vpop.f32.mrf.mxu0
    %v4070 = vadd.f32 %v3973, %v4069
    %v4071 = vpop.f32.mrf.mxu0
    %4072 = vmatprep.mubr.bf16.mxu0 %v3654
    %4073 = vmatmul.mubr.bf16.gmra.mxu0 %v3653
    %v4074 = vpop.f32.mrf.mxu0
    %v4075 = vadd.f32 %v3978, %v4074
    %v4076 = vpop.f32.mrf.mxu0
    %v4077 = vpop.f32.mrf.mxu0
    %v4078 = vadd.f32 %v3981, %v4077
    %v4079 = vpop.f32.mrf.mxu0
    %4080 = vmatprep.mubr.bf16.mxu0 %v3658
    %4081 = vmatmul.mubr.bf16.gmra.mxu0 %v3657
    %v4082 = vpop.f32.mrf.mxu0
    %v4083 = vadd.f32 %v3986, %v4082
    %v4084 = vpop.f32.mrf.mxu0
    %v4085 = vpop.f32.mrf.mxu0
    %v4086 = vadd.f32 %v3989, %v4085
    %v4087 = vpop.f32.mrf.mxu0
    %4088 = vmatprep.mubr.bf16.mxu0 %v3662
    %4089 = vmatmul.mubr.bf16.gmra.mxu0 %v3661
    %v4090 = vpop.f32.mrf.mxu0
    %v4091 = vadd.f32 %v3994, %v4090
    %v4092 = vpop.f32.mrf.mxu0
    %v4093 = vpop.f32.mrf.mxu0
    %v4094 = vadd.f32 %v3997, %v4093
    %v4095 = vpop.f32.mrf.mxu0
    %4096 = vmatprep.mubr.bf16.mxu0 %v3666
    %4097 = vmatmul.mubr.bf16.gmra.mxu0 %v3665
    %v4098 = vpop.f32.mrf.mxu0
    %v4099 = vadd.f32 %v4002, %v4098
    %v4100 = vpop.f32.mrf.mxu0
    %v4101 = vpop.f32.mrf.mxu0
    %v4102 = vadd.f32 %v4005, %v4101
    %v4103 = vpop.f32.mrf.mxu0
    %4104 = vmatprep.mubr.bf16.mxu0 %v3670
    %4105 = vmatmul.mubr.bf16.gmra.mxu0 %v3669
    %v4106 = vpop.f32.mrf.mxu0
    %v4107 = vadd.f32 %v4010, %v4106
    %v4108 = vpop.f32.mrf.mxu0
    %v4109 = vpop.f32.mrf.mxu0
    %v4110 = vadd.f32 %v4013, %v4109
    %v4111 = vpop.f32.mrf.mxu0
    %4112 = vmatprep.mubr.bf16.mxu0 %v3674
    %4113 = vmatmul.mubr.bf16.gmra.mxu0 %v3673
    %v4114 = vpop.f32.mrf.mxu0
    %v4115 = vadd.f32 %v4018, %v4114
    %v4116 = vpop.f32.mrf.mxu0
    %v4117 = vpop.f32.mrf.mxu0
    %v4118 = vadd.f32 %v4021, %v4117
    %v4119 = vpop.f32.mrf.mxu0
    %4120 = vmatprep.mubr.bf16.mxu0 %v3678
    %4121 = vmatmul.mubr.bf16.gmra.mxu0 %v3677
    %v4122 = vpop.f32.mrf.mxu0
    %v4123 = vadd.f32 %v4026, %v4122
    %v4124 = vpop.f32.mrf.mxu0
    %v4125 = vpop.f32.mrf.mxu0
    %v4126 = vadd.f32 %v4029, %v4125
    %v4127 = vpop.f32.mrf.mxu0
    %4128 = vdwg.mxu0
    %v4129 = vld [vmem:[%s8] sm:$0x1]
    %v4131 = vlaneseq
    %v4132 = vshrl.u32 %v4131, 7
    %v4133 = vsub.s32 0, %v4132
    %v4134 = vrot.slane %v4129, %v4133
    %v4136 = vmul.f32 %v4067, %v4134
    %v4137 = vmul.f32 %v4070, %v4134
    %v4138 = vmul.f32 %v4075, %v4134
    %v4139 = vmul.f32 %v4078, %v4134
    %v4140 = vmul.f32 %v4083, %v4134
    %v4141 = vmul.f32 %v4086, %v4134
    %v4142 = vmul.f32 %v4091, %v4134
    %v4143 = vmul.f32 %v4094, %v4134
    %v4144 = vmul.f32 %v4099, %v4134
    %v4145 = vmul.f32 %v4102, %v4134
    %v4146 = vmul.f32 %v4107, %v4134
    %v4147 = vmul.f32 %v4110, %v4134
    %v4148 = vmul.f32 %v4115, %v4134
    %v4149 = vmul.f32 %v4118, %v4134
    %v4150 = vmul.f32 %v4123, %v4134
    %v4151 = vmul.f32 %v4126, %v4134
    %v4152 = vld [vmem:[%s9] sm:$0x1]
    %v4154 = vlaneseq
    %v4155 = vshrl.u32 %v4154, 7
    %v4156 = vsub.s32 0, %v4155
    %v4157 = vrot.slane %v4152, %v4156
    %v4159 = vadd.f32 %v4136, %v4157
    %v4160 = vadd.f32 %v4137, %v4157
    %v4161 = vadd.f32 %v4138, %v4157
    %v4162 = vadd.f32 %v4139, %v4157
    %v4163 = vadd.f32 %v4140, %v4157
    %v4164 = vadd.f32 %v4141, %v4157
    %v4165 = vadd.f32 %v4142, %v4157
    %v4166 = vadd.f32 %v4143, %v4157
    %v4167 = vadd.f32 %v4144, %v4157
    %v4168 = vadd.f32 %v4145, %v4157
    %v4169 = vadd.f32 %v4146, %v4157
    %v4170 = vadd.f32 %v4147, %v4157
    %v4171 = vadd.f32 %v4148, %v4157
    %v4172 = vadd.f32 %v4149, %v4157
    %v4173 = vadd.f32 %v4150, %v4157
    %v4174 = vadd.f32 %v4151, %v4157
    %v4175 = vmax.f32 %v4159, 0.0
    %v4176 = vmax.f32 %v4160, 0.0
    %v4177 = vmax.f32 %v4161, 0.0
    %v4178 = vmax.f32 %v4162, 0.0
    %v4179 = vmax.f32 %v4163, 0.0
    %v4180 = vmax.f32 %v4164, 0.0
    %v4181 = vmax.f32 %v4165, 0.0
    %v4182 = vmax.f32 %v4166, 0.0
    %v4183 = vmax.f32 %v4167, 0.0
    %v4184 = vmax.f32 %v4168, 0.0
    %v4185 = vmax.f32 %v4169, 0.0
    %v4186 = vmax.f32 %v4170, 0.0
    %v4187 = vmax.f32 %v4171, 0.0
    %v4188 = vmax.f32 %v4172, 0.0
    %v4189 = vmax.f32 %v4173, 0.0
    %v4190 = vmax.f32 %v4174, 0.0
    %4191 = vst.msk [vmem:[#allocation4] sm:$0x1] %vm2622, 0.0
    %4192 = vst.msk [vmem:[#allocation4 + $0x10] sm:$0x1] %vm2622, 0.0
    %4193 = vst.msk [vmem:[#allocation4 + $0x20] sm:$0x1] %vm2622, 0.0
    %4194 = vst.msk [vmem:[#allocation4 + $0x30] sm:$0x1] %vm2622, 0.0
    %4195 = vst.msk [vmem:[#allocation4 + $0x40] sm:$0x1] %vm2622, 0.0
    %4196 = vst.msk [vmem:[#allocation4 + $0x50] sm:$0x1] %vm2622, 0.0
    %4197 = vst.msk [vmem:[#allocation4 + $0x60] sm:$0x1] %vm2622, 0.0
    %4198 = vst.msk [vmem:[#allocation4 + $0x70] sm:$0x1] %vm2622, 0.0
    %4199 = vst.msk [vmem:[#allocation4 + $0x1] sm:$0xff] %vm2132, %v4175
    %4200 = vst.msk [vmem:[#allocation4 + $0x9] sm:$0x7] %vm2665, %v4176
    %4201 = vst.msk [vmem:[#allocation4 + $0x11] sm:$0xff] %vm2132, %v4177
    %4202 = vst.msk [vmem:[#allocation4 + $0x19] sm:$0x7] %vm2665, %v4178
    %4203 = vst.msk [vmem:[#allocation4 + $0x21] sm:$0xff] %vm2132, %v4179
    %4204 = vst.msk [vmem:[#allocation4 + $0x29] sm:$0x7] %vm2665, %v4180
    %4205 = vst.msk [vmem:[#allocation4 + $0x31] sm:$0xff] %vm2132, %v4181
    %4206 = vst.msk [vmem:[#allocation4 + $0x39] sm:$0x7] %vm2665, %v4182
    %4207 = vst.msk [vmem:[#allocation4 + $0x41] sm:$0xff] %vm2132, %v4183
    %4208 = vst.msk [vmem:[#allocation4 + $0x49] sm:$0x7] %vm2665, %v4184
    %4209 = vst.msk [vmem:[#allocation4 + $0x51] sm:$0xff] %vm2132, %v4185
    %4210 = vst.msk [vmem:[#allocation4 + $0x59] sm:$0x7] %vm2665, %v4186
    %4211 = vst.msk [vmem:[#allocation4 + $0x61] sm:$0xff] %vm2132, %v4187
    %4212 = vst.msk [vmem:[#allocation4 + $0x69] sm:$0x7] %vm2665, %v4188
    %4213 = vst.msk [vmem:[#allocation4 + $0x71] sm:$0xff] %vm2132, %v4189
    %4214 = vst.msk [vmem:[#allocation4 + $0x79] sm:$0x7] %vm2665, %v4190
    %v4215 = vld [vmem:[#allocation4] ss:$2 sm:$0x3f]
    %s4216 = scalar_lea.vmem [#allocation4], 16
    %v4217 = vld [vmem:[%s4216] ss:$2 sm:$0x3f]
    %s4218 = scalar_lea.vmem [#allocation4], 32
    %v4219 = vld [vmem:[%s4218] ss:$2 sm:$0x3f]
    %s4220 = scalar_lea.vmem [#allocation4], 48
    %v4221 = vld [vmem:[%s4220] ss:$2 sm:$0x3f]
    %s4222 = scalar_lea.vmem [#allocation4], 64
    %v4223 = vld [vmem:[%s4222] ss:$2 sm:$0x3f]
    %s4224 = scalar_lea.vmem [#allocation4], 80
    %v4225 = vld [vmem:[%s4224] ss:$2 sm:$0x3f]
    %s4226 = scalar_lea.vmem [#allocation4], 96
    %v4227 = vld [vmem:[%s4226] ss:$2 sm:$0x3f]
    %s4228 = scalar_lea.vmem [#allocation4], 112
    %v4229 = vld [vmem:[%s4228] ss:$2 sm:$0x3f]
    %s4230 = scalar_lea.vmem [#allocation4], 1
    %v4231 = vld [vmem:[%s4230] ss:$2 sm:$0x3f]
    %s4232 = scalar_lea.vmem [#allocation4], 17
    %v4233 = vld [vmem:[%s4232] ss:$2 sm:$0x3f]
    %s4234 = scalar_lea.vmem [#allocation4], 33
    %v4235 = vld [vmem:[%s4234] ss:$2 sm:$0x3f]
    %s4236 = scalar_lea.vmem [#allocation4], 49
    %v4237 = vld [vmem:[%s4236] ss:$2 sm:$0x3f]
    %s4238 = scalar_lea.vmem [#allocation4], 65
    %v4239 = vld [vmem:[%s4238] ss:$2 sm:$0x3f]
    %s4240 = scalar_lea.vmem [#allocation4], 81
    %v4241 = vld [vmem:[%s4240] ss:$2 sm:$0x3f]
    %s4242 = scalar_lea.vmem [#allocation4], 97
    %v4243 = vld [vmem:[%s4242] ss:$2 sm:$0x3f]
    %s4244 = scalar_lea.vmem [#allocation4], 113
    %v4245 = vld [vmem:[%s4244] ss:$2 sm:$0x3f]
    %v4246 = vmax.f32 %v4215, %v4231
    %v4247 = vmax.f32 %v4217, %v4233
    %v4248 = vmax.f32 %v4219, %v4235
    %v4249 = vmax.f32 %v4221, %v4237
    %v4250 = vmax.f32 %v4223, %v4239
    %v4251 = vmax.f32 %v4225, %v4241
    %v4252 = vmax.f32 %v4227, %v4243
    %v4253 = vmax.f32 %v4229, %v4245
    %vm4254 = vcmask 521216
    %v4255 = vsel %vm4254, %v4246, 0.0
    %v4256 = vrot.slane %v4255, 4
    %v4257 = vadd.f32 %v4255, %v4256
    %v4258 = vrot.slane %v4257, 2
    %v4259 = vadd.f32 %v4257, %v4258
    %v4260 = vrot.slane %v4259, 1
    %v4261 = vadd.f32 %v4259, %v4260
    %v4262 = vsel %vm4254, %v4247, 0.0
    %v4263 = vrot.slane %v4262, 4
    %v4264 = vadd.f32 %v4262, %v4263
    %v4265 = vrot.slane %v4264, 2
    %v4266 = vadd.f32 %v4264, %v4265
    %v4267 = vrot.slane %v4266, 1
    %v4268 = vadd.f32 %v4266, %v4267
    %v4269 = vsel %vm4254, %v4248, 0.0
    %v4270 = vrot.slane %v4269, 4
    %v4271 = vadd.f32 %v4269, %v4270
    %v4272 = vrot.slane %v4271, 2
    %v4273 = vadd.f32 %v4271, %v4272
    %v4274 = vrot.slane %v4273, 1
    %v4275 = vadd.f32 %v4273, %v4274
    %v4276 = vsel %vm4254, %v4249, 0.0
    %v4277 = vrot.slane %v4276, 4
    %v4278 = vadd.f32 %v4276, %v4277
    %v4279 = vrot.slane %v4278, 2
    %v4280 = vadd.f32 %v4278, %v4279
    %v4281 = vrot.slane %v4280, 1
    %v4282 = vadd.f32 %v4280, %v4281
    %v4283 = vsel %vm4254, %v4250, 0.0
    %v4284 = vrot.slane %v4283, 4
    %v4285 = vadd.f32 %v4283, %v4284
    %v4286 = vrot.slane %v4285, 2
    %v4287 = vadd.f32 %v4285, %v4286
    %v4288 = vrot.slane %v4287, 1
    %v4289 = vadd.f32 %v4287, %v4288
    %v4290 = vsel %vm4254, %v4251, 0.0
    %v4291 = vrot.slane %v4290, 4
    %v4292 = vadd.f32 %v4290, %v4291
    %v4293 = vrot.slane %v4292, 2
    %v4294 = vadd.f32 %v4292, %v4293
    %v4295 = vrot.slane %v4294, 1
    %v4296 = vadd.f32 %v4294, %v4295
    %v4297 = vsel %vm4254, %v4252, 0.0
    %v4298 = vrot.slane %v4297, 4
    %v4299 = vadd.f32 %v4297, %v4298
    %v4300 = vrot.slane %v4299, 2
    %v4301 = vadd.f32 %v4299, %v4300
    %v4302 = vrot.slane %v4301, 1
    %v4303 = vadd.f32 %v4301, %v4302
    %v4304 = vsel %vm4254, %v4253, 0.0
    %v4305 = vrot.slane %v4304, 4
    %v4306 = vadd.f32 %v4304, %v4305
    %v4307 = vrot.slane %v4306, 2
    %v4308 = vadd.f32 %v4306, %v4307
    %v4309 = vrot.slane %v4308, 1
    %v4310 = vadd.f32 %v4308, %v4309
    %v4311 = vmul.f32 %v4261, 0.16666667
    %v4312 = vmul.f32 %v4268, 0.16666667
    %v4313 = vmul.f32 %v4275, 0.16666667
    %v4314 = vmul.f32 %v4282, 0.16666667
    %v4315 = vmul.f32 %v4289, 0.16666667
    %v4316 = vmul.f32 %v4296, 0.16666667
    %v4317 = vmul.f32 %v4303, 0.16666667
    %v4318 = vmul.f32 %v4310, 0.16666667
    %vm4327 = vcmask 1041409
    %v4328 = vsel %vm4327, %v4312, %v4311
    %vm4329 = vcmask 1042434
    %v4330 = vsel %vm4329, %v4313, %v4328
    %vm4331 = vcmask 1043459
    %v4332 = vsel %vm4331, %v4314, %v4330
    %vm4333 = vcmask 1044484
    %v4334 = vsel %vm4333, %v4315, %v4332
    %vm4335 = vcmask 1045509
    %v4336 = vsel %vm4335, %v4316, %v4334
    %vm4337 = vcmask 1046534
    %v4338 = vsel %vm4337, %v4317, %v4336
    %vm4339 = vcmask 1047559
    %v4340 = vsel %vm4339, %v4318, %v4338
    %4342 = vst.msk [vmem:[#allocation5] sm:$0xff] %vm2132, %v4340
    // Predicated region
    $region42: #{tpu_custom_call.1} parent=1 // pred_check
      _
    $region43: #{tpu_custom_call.1} parent=1 // pred_check_branch
      %4344 = sbr.rel (0) target = $region45
    $region44: #{tpu_custom_call.1} parent=1 // pred_region
      %s4346 = ssub.s32 128, 128
      %4347 = vsyncadd [#allocation6], %s4346
      %s4349 = sshll.u32 [#allocation5], 4
      %s4350 = int_to_ptr.vmem [resolvable:$true] %s4349
      %4352 = dma.vmem_to_hbm [thread:$0]  %s4350, 128, %s10, [#allocation6]
    $region45: #{tpu_custom_call.1} parent=1 // pred_fallthru
      _
    // Predicated region
    $region46: #{tpu_custom_call.1} parent=1 // pred_check
      _
    $region47: #{tpu_custom_call.1} parent=1 // pred_check_branch
      %4354 = sbr.rel (0) target = $region49
    $region48: #{tpu_custom_call.1} parent=1 // pred_region
      %4355 = dma.done [#allocation6], 128
    $region49: #{tpu_custom_call.1} parent=1 // pred_fallthru
      _
    %4356 = vsyncpa [#allocation6], 1

</llo_original>
